<compile_context>
chip_gen: v7x
topology: tpu7x:2x2x1
jax: 0.10.0
libtpu: 0.0.40
codegen_flags: <defaults>
</compile_context>

<pallas_src>
import functools

import jax
import jax.numpy as jnp
import numpy as np
from jax.experimental import pallas as pl

# ---- model hyper-parameters (match the PyTorch module) ----------------------
N_FEAT = 100                        # n_featmaps
EMB_DIM = 300                       # word2vec embedding dim
KSIZES = (3, 7, 11)                 # conv3 / conv5 / conv7 kernel heights
KMAX = max(KSIZES)
MAXPAD = KMAX // 2                  # = 5 ("same" padding for the widest conv)

# ---- padded (lane-dense) kernel-side dims ------------------------------------
F_PAD = 128                         # per-conv feature dim padded 100 -> 128
N_CONV = len(KSIZES)
FEAT_PAD = N_CONV * F_PAD           # 384 conv features after padding
OUT_PAD = 128                       # logits dim padded 2 -> 128


def _ceil_to(x, m):
    return ((x + m - 1) // m) * m


# Per-conv im2col contraction dims (k*300) padded to multiples of 256:
# 900 -> 1024, 2100 -> 2304, 3300 -> 3328.
K_PADS = tuple(_ceil_to(k * EMB_DIM, 256) for k in KSIZES)

# ---- small runtime shapes -----------------------------------------------------
BATCH = 2
SEQ = 8
VOCAB = 50


def cnn_kernel(x3_ref, x5_ref, x7_ref, w3_ref, w5_ref, w7_ref, bc_ref,
               wl_ref, extra_ref, out_ref, *, bsz, seq):
    """Whole batch, single invocation (no grid -> no pipelining, 1 buffer/operand).

    x{3,5,7}_ref : (bsz*seq, K_PADS[i])  bf16 per-conv im2col activations
    w{3,5,7}_ref : (K_PADS[i], F_PAD)    bf16 per-conv weights (zero-padded rows/cols)
    bc_ref       : (1, FEAT_PAD)         f32 combined conv bias
    wl_ref       : (FEAT_PAD, OUT_PAD)   bf16 linear weight (conv-feature rows)
    extra_ref    : (bsz, OUT_PAD)        f32 = ys*wl_ys_row + linear bias (folded)
    out_ref      : (bsz, OUT_PAD)        f32 logits (first 2 lanes are real)
    """
    def conv_pool(x_ref, w_ref):
        # One clean MXU matmul per conv (no structural-zero rows), f32 acc.
        acc = jnp.dot(x_ref[...], w_ref[...],
                      preferred_element_type=jnp.float32)        # (bsz*seq, F_PAD)
        return jnp.max(acc.reshape(bsz, seq, F_PAD), axis=1)     # (bsz, F_PAD)

    pooled = jnp.concatenate(
        [conv_pool(x3_ref, w3_ref),
         conv_pool(x5_ref, w5_ref),
         conv_pool(x7_ref, w7_ref)], axis=-1)                    # (bsz, FEAT_PAD)
    # bias + ReLU after the pool (valid: per-feature bias, ReLU monotone).
    pooled = jnp.maximum(pooled + bc_ref[...], 0.0)
    logits = jnp.dot(pooled.astype(wl_ref.dtype), wl_ref[...],
                     preferred_element_type=jnp.float32)         # (bsz, OUT_PAD)
    out_ref[...] = logits + extra_ref[...]


def pack_params(params, compute_dtype=jnp.bfloat16):
    """One-time repack of PyTorch-layout weights into the kernel layout."""
    bc = jnp.zeros((1, FEAT_PAD), jnp.float32)
    wl = jnp.zeros((FEAT_PAD, OUT_PAD), jnp.float32)
    ws = []
    for ci, (k, kp, wname, bname) in enumerate(
            zip(KSIZES, K_PADS, ("w3", "w5", "w7"), ("b3", "b5", "b7"))):
        w = params[wname].reshape(k * EMB_DIM, N_FEAT)           # taps-major rows
        wp = jnp.zeros((kp, F_PAD), jnp.float32)
        wp = wp.at[:k * EMB_DIM, :N_FEAT].set(w)                 # only real rows/cols
        ws.append(wp.astype(compute_dtype))
        bc = bc.at[0, ci * F_PAD:ci * F_PAD + N_FEAT].set(params[bname][0])
        wl = wl.at[ci * F_PAD:ci * F_PAD + N_FEAT, :2].set(
            params["wl"][ci * N_FEAT:(ci + 1) * N_FEAT])
    return {
        "w3": ws[0], "w5": ws[1], "w7": ws[2],
        "bc": bc,
        "wl": wl.astype(compute_dtype),
        "wly": params["wl"][3 * N_FEAT],     # (2,) linear row for the ys feature
        "bl": params["bl"],                  # (1, 2) linear bias
    }


def cnn_forward(tokens, ys, params, packed):
    bsz, seq = tokens.shape
    # PyTorch: pad sequence (with index 0) if shorter than the smallest window.
    if seq < 3:
        tokens = jnp.concatenate(
            [tokens, jnp.zeros((bsz, 3 - seq), tokens.dtype)], axis=1)
        seq = 3

    dtype = packed["w3"].dtype
    # Embedding lookup + "same" padding + per-conv im2col unfolds: XLA glue.
    embeds = jnp.take(params["emb"], tokens, axis=0)              # (B, S, D) f32
    x_pad = jnp.pad(embeds, ((0, 0), (MAXPAD, MAXPAD), (0, 0)))   # (B, S+10, D)

    def unfold(k, kp):
        off = MAXPAD - k // 2            # tap offset inside the widest padding
        u = jnp.concatenate(
            [x_pad[:, off + t:off + t + seq, :] for t in range(k)], axis=-1)
        u = u.reshape(bsz * seq, k * EMB_DIM)
        u = jnp.pad(u, ((0, 0), (0, kp - k * EMB_DIM)))           # lane-pad K
        return u.astype(dtype)

    x3, x5, x7 = (unfold(k, kp) for k, kp in zip(KSIZES, K_PADS))

    # Fold ys, its linear row and the linear bias into one tiny f32 tensor.
    extra_small = ys.astype(jnp.float32) * packed["wly"][None, :] + packed["bl"]
    extra = jnp.zeros((bsz, OUT_PAD), jnp.float32).at[:, :2].set(extra_small)

    m_rows = bsz * seq
    flops = 2 * m_rows * sum(K_PADS) * F_PAD + 2 * bsz * FEAT_PAD * OUT_PAD
    w_itemsize = packed["w3"].dtype.itemsize
    bytes_accessed = int(
        (x3.size + x5.size + x7.size) * x3.dtype.itemsize
        + (packed["w3"].size + packed["w5"].size + packed["w7"].size
           + packed["wl"].size) * w_itemsize
        + (packed["bc"].size + extra.size + bsz * OUT_PAD) * 4)

    kernel = functools.partial(cnn_kernel, bsz=bsz, seq=seq)
    out = pl.pallas_call(
        kernel,
        out_shape=jax.ShapeDtypeStruct((bsz, OUT_PAD), jnp.float32),
        # No grid: single invocation, whole arrays as single VMEM blocks,
        # no double-buffering of the (dominant) weight operands.
        cost_estimate=pl.CostEstimate(
            flops=flops, transcendentals=0, bytes_accessed=bytes_accessed),
    )(x3, x5, x7, packed["w3"], packed["w5"], packed["w7"], packed["bc"],
      packed["wl"], extra)
    return out[:, :2]                                             # strip lane padding


def cnn_reference(tokens, ys, params):
    """Pure-JAX f32 reference (same math, independent code path)."""
    bsz, seq = tokens.shape
    if seq < 3:
        tokens = jnp.concatenate(
            [tokens, jnp.zeros((bsz, 3 - seq), tokens.dtype)], axis=1)
        seq = 3
    embeds = jnp.take(params["emb"], tokens, axis=0)
    x_pad = jnp.pad(embeds, ((0, 0), (MAXPAD, MAXPAD), (0, 0)))

    def conv_relu_max(w, b, k):
        pad = k // 2
        off = MAXPAD - pad
        y = b
        for t in range(k):
            y = y + jnp.einsum("bsd,df->bsf",
                               x_pad[:, off + t:off + t + seq, :], w[t],
                               preferred_element_type=jnp.float32)
        return jnp.max(jax.nn.relu(y), axis=1)                    # (B, N_FEAT)

    p3 = conv_relu_max(params["w3"], params["b3"], KSIZES[0])
    p5 = conv_relu_max(params["w5"], params["b5"], KSIZES[1])
    p7 = conv_relu_max(params["w7"], params["b7"], KSIZES[2])
    feats = jnp.concatenate([p3, p5, p7, ys.astype(jnp.float32)], axis=1)
    return feats @ params["wl"] + params["bl"]


def init_params(key):
    ks = jax.random.split(key, 9)

    def u(k, shape, fan_in):
        bound = 1.0 / np.sqrt(fan_in)
        return jax.random.uniform(k, shape, jnp.float32, -bound, bound)

    return {
        "emb": jax.random.normal(ks[0], (VOCAB, EMB_DIM), jnp.float32) * 0.1,
        # Conv2d(300, 100, (k, 1)) weight stored as (k, D, F): w[t,d,f] == torch W[f,d,t,0]
        "w3": u(ks[1], (KSIZES[0], EMB_DIM, N_FEAT), EMB_DIM * KSIZES[0]),
        "b3": u(ks[2], (1, N_FEAT), EMB_DIM * KSIZES[0]),
        "w5": u(ks[3], (KSIZES[1], EMB_DIM, N_FEAT), EMB_DIM * KSIZES[1]),
        "b5": u(ks[4], (1, N_FEAT), EMB_DIM * KSIZES[1]),
        "w7": u(ks[5], (KSIZES[2], EMB_DIM, N_FEAT), EMB_DIM * KSIZES[2]),
        "b7": u(ks[6], (1, N_FEAT), EMB_DIM * KSIZES[2]),
        "wl": u(ks[7], (3 * N_FEAT + 1, 2), 3 * N_FEAT + 1),
        "bl": u(ks[8], (1, 2), 3 * N_FEAT + 1),
    }


if __name__ == "__main__":
    key = jax.random.PRNGKey(0)
    kp, kt, ky = jax.random.split(key, 3)
    params = init_params(kp)
    packed = pack_params(params)     # one-time weight repack into kernel layout
    tokens = jax.random.randint(kt, (BATCH, SEQ), 0, VOCAB, dtype=jnp.int32)
    ys = jax.random.uniform(ky, (BATCH, 1), dtype=jnp.float32)

    forward = jax.jit(cnn_forward)   # lets XLA overlap glue with kernel weight DMA
    out = jax.block_until_ready(forward(tokens, ys, params, packed))
    ref = jax.block_until_ready(cnn_reference(tokens, ys, params))

    assert out.shape == (BATCH, 2), out.shape
    np.testing.assert_allclose(np.asarray(out), np.asarray(ref), rtol=5e-2, atol=5e-2)
    print("KERNEL_OK")
</pallas_src>

<mosaic_0001>
module attributes {stable_mosaic.version = 11 : i64} {
  func.func @cnn_kernel(%arg0: memref<16x1024xbf16, #tpu.memory_space<vmem>>, %arg1: memref<16x2304xbf16, #tpu.memory_space<vmem>>, %arg2: memref<16x3328xbf16, #tpu.memory_space<vmem>>, %arg3: memref<1024x128xbf16, #tpu.memory_space<vmem>>, %arg4: memref<2304x128xbf16, #tpu.memory_space<vmem>>, %arg5: memref<3328x128xbf16, #tpu.memory_space<vmem>>, %arg6: memref<1x384xf32, #tpu.memory_space<vmem>>, %arg7: memref<384x128xbf16, #tpu.memory_space<vmem>>, %arg8: memref<2x128xf32, #tpu.memory_space<vmem>>, %arg9: memref<2x128xf32, #tpu.memory_space<vmem>>) attributes {dimension_semantics = [], scalar_prefetch = 0 : i64, scratch_operands = 0 : i64, tpu.core_type = #tpu.core_type<tc>} {
    %c0 = arith.constant 0 : index
    %c0_0 = arith.constant 0 : index
    %0 = vector.load %arg0[%c0, %c0_0] : memref<16x1024xbf16, #tpu.memory_space<vmem>>, vector<16x1024xbf16>
    %c0_1 = arith.constant 0 : index
    %c0_2 = arith.constant 0 : index
    %1 = vector.load %arg3[%c0_1, %c0_2] : memref<1024x128xbf16, #tpu.memory_space<vmem>>, vector<1024x128xbf16>
    %cst = arith.constant dense<0.000000e+00> : vector<16x128xf32>
    %2 = tpu.matmul %0, %1, %cst {dimension_numbers = #tpu.dot_dimension_numbers<[1], [0], [0], [1], [0, 0, 1, 1], [], []>} : vector<16x1024xbf16>, vector<1024x128xbf16>, vector<16x128xf32> -> vector<16x128xf32>
    %3 = vector.shape_cast %2 : vector<16x128xf32> to vector<2x8x128xf32>
    %cst_3 = arith.constant dense<0xFF800000> : vector<2x128xf32>
    %4 = vector.multi_reduction <maximumf>, %3, %cst_3 [1] : vector<2x8x128xf32> to vector<2x128xf32>
    %c0_4 = arith.constant 0 : index
    %c0_5 = arith.constant 0 : index
    %5 = vector.load %arg1[%c0_4, %c0_5] : memref<16x2304xbf16, #tpu.memory_space<vmem>>, vector<16x2304xbf16>
    %c0_6 = arith.constant 0 : index
    %c0_7 = arith.constant 0 : index
    %6 = vector.load %arg4[%c0_6, %c0_7] : memref<2304x128xbf16, #tpu.memory_space<vmem>>, vector<2304x128xbf16>
    %cst_8 = arith.constant dense<0.000000e+00> : vector<16x128xf32>
    %7 = tpu.matmul %5, %6, %cst_8 {dimension_numbers = #tpu.dot_dimension_numbers<[1], [0], [0], [1], [0, 0, 1, 1], [], []>} : vector<16x2304xbf16>, vector<2304x128xbf16>, vector<16x128xf32> -> vector<16x128xf32>
    %8 = vector.shape_cast %7 : vector<16x128xf32> to vector<2x8x128xf32>
    %cst_9 = arith.constant dense<0xFF800000> : vector<2x128xf32>
    %9 = vector.multi_reduction <maximumf>, %8, %cst_9 [1] : vector<2x8x128xf32> to vector<2x128xf32>
    %c0_10 = arith.constant 0 : index
    %c0_11 = arith.constant 0 : index
    %10 = vector.load %arg2[%c0_10, %c0_11] : memref<16x3328xbf16, #tpu.memory_space<vmem>>, vector<16x3328xbf16>
    %c0_12 = arith.constant 0 : index
    %c0_13 = arith.constant 0 : index
    %11 = vector.load %arg5[%c0_12, %c0_13] : memref<3328x128xbf16, #tpu.memory_space<vmem>>, vector<3328x128xbf16>
    %cst_14 = arith.constant dense<0.000000e+00> : vector<16x128xf32>
    %12 = tpu.matmul %10, %11, %cst_14 {dimension_numbers = #tpu.dot_dimension_numbers<[1], [0], [0], [1], [0, 0, 1, 1], [], []>} : vector<16x3328xbf16>, vector<3328x128xbf16>, vector<16x128xf32> -> vector<16x128xf32>
    %13 = vector.shape_cast %12 : vector<16x128xf32> to vector<2x8x128xf32>
    %cst_15 = arith.constant dense<0xFF800000> : vector<2x128xf32>
    %14 = vector.multi_reduction <maximumf>, %13, %cst_15 [1] : vector<2x8x128xf32> to vector<2x128xf32>
    %15 = tpu.concatenate %4, %9, %14 in 1 : vector<2x128xf32>, vector<2x128xf32>, vector<2x128xf32> -> vector<2x384xf32>
    %c0_16 = arith.constant 0 : index
    %c0_17 = arith.constant 0 : index
    %16 = vector.load %arg6[%c0_16, %c0_17] : memref<1x384xf32, #tpu.memory_space<vmem>>, vector<1x384xf32>
    %17 = vector.broadcast %16 : vector<1x384xf32> to vector<2x384xf32>
    %18 = arith.addf %15, %17 : vector<2x384xf32>
    %cst_18 = arith.constant 0.000000e+00 : f32
    %19 = vector.broadcast %cst_18 : f32 to vector<2x384xf32>
    %20 = arith.maximumf %18, %19 : vector<2x384xf32>
    %21 = arith.truncf %20 : vector<2x384xf32> to vector<2x384xbf16>
    %c0_19 = arith.constant 0 : index
    %c0_20 = arith.constant 0 : index
    %22 = vector.load %arg7[%c0_19, %c0_20] : memref<384x128xbf16, #tpu.memory_space<vmem>>, vector<384x128xbf16>
    %cst_21 = arith.constant dense<0.000000e+00> : vector<2x128xf32>
    %23 = tpu.matmul %21, %22, %cst_21 {dimension_numbers = #tpu.dot_dimension_numbers<[1], [0], [0], [1], [0, 0, 1, 1], [], []>} : vector<2x384xbf16>, vector<384x128xbf16>, vector<2x128xf32> -> vector<2x128xf32>
    %c0_22 = arith.constant 0 : index
    %c0_23 = arith.constant 0 : index
    %24 = vector.load %arg8[%c0_22, %c0_23] : memref<2x128xf32, #tpu.memory_space<vmem>>, vector<2x128xf32>
    %25 = arith.addf %23, %24 : vector<2x128xf32>
    %c0_24 = arith.constant 0 : index
    %c0_25 = arith.constant 0 : index
    %26 = vector.load %arg9[%c0_24, %c0_25] : memref<2x128xf32, #tpu.memory_space<vmem>>, vector<2x128xf32>
    tpu.vector_store %arg9[%c0_24, %c0_25], %25 {strides = array<i32>} : memref<2x128xf32, #tpu.memory_space<vmem>>, vector<2x128xf32>,
    return
  }
}

</mosaic_0001>

<llo_original>
// kernel: cnn_forward.1
$region0: #{cnn_forward.1}
  #allocation0 [shape = 'u32[]', space=smem, size = 0x4, offset = 0x4, fixed_abs, tag = 'smem constant byte address 0x4 - core index']
  #allocation1 [shape = 'u32[144,128]{1,0:T(1,128)}', space=vmem, size = 0x12000, scoped, tag = 'internal scratch']
  %s0 = inlined_call_operand.vmem [shape: bf16[16,1024], index: 0, kind: input, shape index: {}]
  %s1 = inlined_call_operand.vmem [shape: bf16[16,2304], index: 1, kind: input, shape index: {}]
  %s2 = inlined_call_operand.vmem [shape: bf16[16,3328], index: 2, kind: input, shape index: {}]
  %s3 = inlined_call_operand.vmem [shape: bf16[1024,128], index: 3, kind: input, shape index: {}]
  %s4 = inlined_call_operand.hbm [shape: bf16[2304,128], index: 4, kind: input, shape index: {}]
  %s5 = inlined_call_operand.vmem [shape: bf16[3328,128], index: 5, kind: input, shape index: {}]
  %s6 = inlined_call_operand.vmem [shape: f32[1,384], index: 6, kind: input, shape index: {}]
  %s7 = inlined_call_operand.vmem [shape: bf16[384,128], index: 7, kind: input, shape index: {}]
  %s8 = inlined_call_operand.vmem [shape: f32[2,128], index: 8, kind: input, shape index: {}]
  %s9 = inlined_call_operand.hbm [shape: f32[2,128], index: 9, kind: output, shape index: {}]
  %s10 = sld [smem:[#allocation0]]
  $region50: #{cnn_forward.1} parent=0
    _
  %s12 = ssub.s32 1, %s10
  %s13 = scalar_select 0, %s12, %s10
  $region1: #{cnn_forward.1} parent=0
    #allocation2 [shape = 'u8[589824]{0}', space=vmem, size = 0x90000, scoped, tag = 'input window, operand 4, single buffered']
    #allocation3 [shape = 's32[1]{0}', space=sflag, size = 0x4, scoped, tag = 'scoped memory for cnn_forward.1']
    #allocation4 [shape = 's32[1]{0}', space=sflag, size = 0x4, scoped, tag = 'scoped memory for cnn_forward.1']
    #allocation5 [shape = 'u8[1024]{0}', space=vmem, size = 0x400, scoped, tag = 'output window, operand 0, single buffered']
    %14 = vsyncpa [#allocation3], 0
    %15 = vsyncpa [#allocation4], 0
    // Predicated region
    $region2: #{cnn_forward.1} parent=1 // pred_check
      _
    $region3: #{cnn_forward.1} parent=1 // pred_check_branch
      %17 = sbr.rel (0) target = $region5
    $region4: #{cnn_forward.1} parent=1 // pred_region
      _
    $region5: #{cnn_forward.1} parent=1 // pred_fallthru
      _
    // Predicated region
    $region6: #{cnn_forward.1} parent=1 // pred_check
      _
    $region7: #{cnn_forward.1} parent=1 // pred_check_branch
      %19 = sbr.rel (0) target = $region9
    $region8: #{cnn_forward.1} parent=1 // pred_region
      _
    $region9: #{cnn_forward.1} parent=1 // pred_fallthru
      _
    // Predicated region
    $region10: #{cnn_forward.1} parent=1 // pred_check
      _
    $region11: #{cnn_forward.1} parent=1 // pred_check_branch
      %21 = sbr.rel (0) target = $region13
    $region12: #{cnn_forward.1} parent=1 // pred_region
      _
    $region13: #{cnn_forward.1} parent=1 // pred_fallthru
      _
    // Predicated region
    $region14: #{cnn_forward.1} parent=1 // pred_check
      _
    $region15: #{cnn_forward.1} parent=1 // pred_check_branch
      %23 = sbr.rel (0) target = $region17
    $region16: #{cnn_forward.1} parent=1 // pred_region
      _
    $region17: #{cnn_forward.1} parent=1 // pred_fallthru
      _
    // Predicated region
    $region18: #{cnn_forward.1} parent=1 // pred_check
      _
    $region19: #{cnn_forward.1} parent=1 // pred_check_branch
      %25 = sbr.rel (0) target = $region21
    $region20: #{cnn_forward.1} parent=1 // pred_region
      %s27 = ssub.s32 18432, 18432
      %28 = vsyncadd [#allocation3], %s27
      %s29 = sshll.u32 [#allocation2], 4
      %s30 = int_to_ptr.vmem [resolvable:$true] %s29
      %35 = dma.hbm_to_vmem [thread:$0]  %s4, 18432, %s30, [#allocation3], 64, 64, 4
    $region21: #{cnn_forward.1} parent=1 // pred_fallthru
      _
    // Predicated region
    $region22: #{cnn_forward.1} parent=1 // pred_check
      _
    $region23: #{cnn_forward.1} parent=1 // pred_check_branch
      %37 = sbr.rel (0) target = $region25
    $region24: #{cnn_forward.1} parent=1 // pred_region
      _
    $region25: #{cnn_forward.1} parent=1 // pred_fallthru
      _
    // Predicated region
    $region26: #{cnn_forward.1} parent=1 // pred_check
      _
    $region27: #{cnn_forward.1} parent=1 // pred_check_branch
      %39 = sbr.rel (0) target = $region29
    $region28: #{cnn_forward.1} parent=1 // pred_region
      _
    $region29: #{cnn_forward.1} parent=1 // pred_fallthru
      _
    // Predicated region
    $region30: #{cnn_forward.1} parent=1 // pred_check
      _
    $region31: #{cnn_forward.1} parent=1 // pred_check_branch
      %41 = sbr.rel (0) target = $region33
    $region32: #{cnn_forward.1} parent=1 // pred_region
      _
    $region33: #{cnn_forward.1} parent=1 // pred_fallthru
      _
    // Predicated region
    $region34: #{cnn_forward.1} parent=1 // pred_check
      _
    $region35: #{cnn_forward.1} parent=1 // pred_check_branch
      %43 = sbr.rel (0) target = $region37
    $region36: #{cnn_forward.1} parent=1 // pred_region
      _
    $region37: #{cnn_forward.1} parent=1 // pred_fallthru
      _
    // Predicated region
    $region38: #{cnn_forward.1} parent=1 // pred_check
      _
    $region39: #{cnn_forward.1} parent=1 // pred_check_branch
      %45 = sbr.rel (0) target = $region41
    $region40: #{cnn_forward.1} parent=1 // pred_region
      %46 = dma.done [#allocation3], 18432
    $region41: #{cnn_forward.1} parent=1 // pred_fallthru
      _
    %v48 = vld [vmem:[%s0] sm:$0xff]
    %v49 = vld [vmem:[%s0 + $0x8] sm:$0xff]
    %v50 = vld [vmem:[%s0 + $0x10] sm:$0xff]
    %v51 = vld [vmem:[%s0 + $0x18] sm:$0xff]
    %v52 = vld [vmem:[%s0 + $0x20] sm:$0xff]
    %v53 = vld [vmem:[%s0 + $0x28] sm:$0xff]
    %v54 = vld [vmem:[%s0 + $0x30] sm:$0xff]
    %v55 = vld [vmem:[%s0 + $0x38] sm:$0xff]
    %v56 = vld [vmem:[%s3] sm:$0xf]
    %v57 = vld [vmem:[%s3 + $0x4] sm:$0xf]
    %v58 = vld [vmem:[%s3 + $0x8] sm:$0xf]
    %v59 = vld [vmem:[%s3 + $0xc] sm:$0xf]
    %v60 = vld [vmem:[%s3 + $0x10] sm:$0xf]
    %v61 = vld [vmem:[%s3 + $0x14] sm:$0xf]
    %v62 = vld [vmem:[%s3 + $0x18] sm:$0xf]
    %v63 = vld [vmem:[%s3 + $0x1c] sm:$0xf]
    %v64 = vld [vmem:[%s3 + $0x20] sm:$0xf]
    %v65 = vld [vmem:[%s3 + $0x24] sm:$0xf]
    %v66 = vld [vmem:[%s3 + $0x28] sm:$0xf]
    %v67 = vld [vmem:[%s3 + $0x2c] sm:$0xf]
    %v68 = vld [vmem:[%s3 + $0x30] sm:$0xf]
    %v69 = vld [vmem:[%s3 + $0x34] sm:$0xf]
    %v70 = vld [vmem:[%s3 + $0x38] sm:$0xf]
    %v71 = vld [vmem:[%s3 + $0x3c] sm:$0xf]
    %v72 = vld [vmem:[%s3 + $0x40] sm:$0xf]
    %v73 = vld [vmem:[%s3 + $0x44] sm:$0xf]
    %v74 = vld [vmem:[%s3 + $0x48] sm:$0xf]
    %v75 = vld [vmem:[%s3 + $0x4c] sm:$0xf]
    %v76 = vld [vmem:[%s3 + $0x50] sm:$0xf]
    %v77 = vld [vmem:[%s3 + $0x54] sm:$0xf]
    %v78 = vld [vmem:[%s3 + $0x58] sm:$0xf]
    %v79 = vld [vmem:[%s3 + $0x5c] sm:$0xf]
    %v80 = vld [vmem:[%s3 + $0x60] sm:$0xf]
    %v81 = vld [vmem:[%s3 + $0x64] sm:$0xf]
    %v82 = vld [vmem:[%s3 + $0x68] sm:$0xf]
    %v83 = vld [vmem:[%s3 + $0x6c] sm:$0xf]
    %v84 = vld [vmem:[%s3 + $0x70] sm:$0xf]
    %v85 = vld [vmem:[%s3 + $0x74] sm:$0xf]
    %v86 = vld [vmem:[%s3 + $0x78] sm:$0xf]
    %v87 = vld [vmem:[%s3 + $0x7c] sm:$0xf]
    %v88 = vld [vmem:[%s3 + $0x80] sm:$0xf]
    %v89 = vld [vmem:[%s3 + $0x84] sm:$0xf]
    %v90 = vld [vmem:[%s3 + $0x88] sm:$0xf]
    %v91 = vld [vmem:[%s3 + $0x8c] sm:$0xf]
    %v92 = vld [vmem:[%s3 + $0x90] sm:$0xf]
    %v93 = vld [vmem:[%s3 + $0x94] sm:$0xf]
    %v94 = vld [vmem:[%s3 + $0x98] sm:$0xf]
    %v95 = vld [vmem:[%s3 + $0x9c] sm:$0xf]
    %v96 = vld [vmem:[%s3 + $0xa0] sm:$0xf]
    %v97 = vld [vmem:[%s3 + $0xa4] sm:$0xf]
    %v98 = vld [vmem:[%s3 + $0xa8] sm:$0xf]
    %v99 = vld [vmem:[%s3 + $0xac] sm:$0xf]
    %v100 = vld [vmem:[%s3 + $0xb0] sm:$0xf]
    %v101 = vld [vmem:[%s3 + $0xb4] sm:$0xf]
    %v102 = vld [vmem:[%s3 + $0xb8] sm:$0xf]
    %v103 = vld [vmem:[%s3 + $0xbc] sm:$0xf]
    %v104 = vld [vmem:[%s3 + $0xc0] sm:$0xf]
    %v105 = vld [vmem:[%s3 + $0xc4] sm:$0xf]
    %v106 = vld [vmem:[%s3 + $0xc8] sm:$0xf]
    %v107 = vld [vmem:[%s3 + $0xcc] sm:$0xf]
    %v108 = vld [vmem:[%s3 + $0xd0] sm:$0xf]
    %v109 = vld [vmem:[%s3 + $0xd4] sm:$0xf]
    %v110 = vld [vmem:[%s3 + $0xd8] sm:$0xf]
    %v111 = vld [vmem:[%s3 + $0xdc] sm:$0xf]
    %v112 = vld [vmem:[%s3 + $0xe0] sm:$0xf]
    %v113 = vld [vmem:[%s3 + $0xe4] sm:$0xf]
    %v114 = vld [vmem:[%s3 + $0xe8] sm:$0xf]
    %v115 = vld [vmem:[%s3 + $0xec] sm:$0xf]
    %v116 = vld [vmem:[%s3 + $0xf0] sm:$0xf]
    %v117 = vld [vmem:[%s3 + $0xf4] sm:$0xf]
    %v118 = vld [vmem:[%s3 + $0xf8] sm:$0xf]
    %v119 = vld [vmem:[%s3 + $0xfc] sm:$0xf]
    %v120 = vld [vmem:[%s3 + $0x100] sm:$0xf]
    %v121 = vld [vmem:[%s3 + $0x104] sm:$0xf]
    %v122 = vld [vmem:[%s3 + $0x108] sm:$0xf]
    %v123 = vld [vmem:[%s3 + $0x10c] sm:$0xf]
    %v124 = vld [vmem:[%s3 + $0x110] sm:$0xf]
    %v125 = vld [vmem:[%s3 + $0x114] sm:$0xf]
    %v126 = vld [vmem:[%s3 + $0x118] sm:$0xf]
    %v127 = vld [vmem:[%s3 + $0x11c] sm:$0xf]
    %v128 = vld [vmem:[%s3 + $0x120] sm:$0xf]
    %v129 = vld [vmem:[%s3 + $0x124] sm:$0xf]
    %v130 = vld [vmem:[%s3 + $0x128] sm:$0xf]
    %v131 = vld [vmem:[%s3 + $0x12c] sm:$0xf]
    %v132 = vld [vmem:[%s3 + $0x130] sm:$0xf]
    %v133 = vld [vmem:[%s3 + $0x134] sm:$0xf]
    %v134 = vld [vmem:[%s3 + $0x138] sm:$0xf]
    %v135 = vld [vmem:[%s3 + $0x13c] sm:$0xf]
    %v136 = vld [vmem:[%s3 + $0x140] sm:$0xf]
    %v137 = vld [vmem:[%s3 + $0x144] sm:$0xf]
    %v138 = vld [vmem:[%s3 + $0x148] sm:$0xf]
    %v139 = vld [vmem:[%s3 + $0x14c] sm:$0xf]
    %v140 = vld [vmem:[%s3 + $0x150] sm:$0xf]
    %v141 = vld [vmem:[%s3 + $0x154] sm:$0xf]
    %v142 = vld [vmem:[%s3 + $0x158] sm:$0xf]
    %v143 = vld [vmem:[%s3 + $0x15c] sm:$0xf]
    %v144 = vld [vmem:[%s3 + $0x160] sm:$0xf]
    %v145 = vld [vmem:[%s3 + $0x164] sm:$0xf]
    %v146 = vld [vmem:[%s3 + $0x168] sm:$0xf]
    %v147 = vld [vmem:[%s3 + $0x16c] sm:$0xf]
    %v148 = vld [vmem:[%s3 + $0x170] sm:$0xf]
    %v149 = vld [vmem:[%s3 + $0x174] sm:$0xf]
    %v150 = vld [vmem:[%s3 + $0x178] sm:$0xf]
    %v151 = vld [vmem:[%s3 + $0x17c] sm:$0xf]
    %v152 = vld [vmem:[%s3 + $0x180] sm:$0xf]
    %v153 = vld [vmem:[%s3 + $0x184] sm:$0xf]
    %v154 = vld [vmem:[%s3 + $0x188] sm:$0xf]
    %v155 = vld [vmem:[%s3 + $0x18c] sm:$0xf]
    %v156 = vld [vmem:[%s3 + $0x190] sm:$0xf]
    %v157 = vld [vmem:[%s3 + $0x194] sm:$0xf]
    %v158 = vld [vmem:[%s3 + $0x198] sm:$0xf]
    %v159 = vld [vmem:[%s3 + $0x19c] sm:$0xf]
    %v160 = vld [vmem:[%s3 + $0x1a0] sm:$0xf]
    %v161 = vld [vmem:[%s3 + $0x1a4] sm:$0xf]
    %v162 = vld [vmem:[%s3 + $0x1a8] sm:$0xf]
    %v163 = vld [vmem:[%s3 + $0x1ac] sm:$0xf]
    %v164 = vld [vmem:[%s3 + $0x1b0] sm:$0xf]
    %v165 = vld [vmem:[%s3 + $0x1b4] sm:$0xf]
    %v166 = vld [vmem:[%s3 + $0x1b8] sm:$0xf]
    %v167 = vld [vmem:[%s3 + $0x1bc] sm:$0xf]
    %v168 = vld [vmem:[%s3 + $0x1c0] sm:$0xf]
    %v169 = vld [vmem:[%s3 + $0x1c4] sm:$0xf]
    %v170 = vld [vmem:[%s3 + $0x1c8] sm:$0xf]
    %v171 = vld [vmem:[%s3 + $0x1cc] sm:$0xf]
    %v172 = vld [vmem:[%s3 + $0x1d0] sm:$0xf]
    %v173 = vld [vmem:[%s3 + $0x1d4] sm:$0xf]
    %v174 = vld [vmem:[%s3 + $0x1d8] sm:$0xf]
    %v175 = vld [vmem:[%s3 + $0x1dc] sm:$0xf]
    %v176 = vld [vmem:[%s3 + $0x1e0] sm:$0xf]
    %v177 = vld [vmem:[%s3 + $0x1e4] sm:$0xf]
    %v178 = vld [vmem:[%s3 + $0x1e8] sm:$0xf]
    %v179 = vld [vmem:[%s3 + $0x1ec] sm:$0xf]
    %v180 = vld [vmem:[%s3 + $0x1f0] sm:$0xf]
    %v181 = vld [vmem:[%s3 + $0x1f4] sm:$0xf]
    %v182 = vld [vmem:[%s3 + $0x1f8] sm:$0xf]
    %v183 = vld [vmem:[%s3 + $0x1fc] sm:$0xf]
    %v192 = vunpack.c.l.b16 %v48
    %v193 = vunpack.c.h.b16 %v48
    %v194 = vunpack.c.l.b16 %v49
    %v195 = vunpack.c.h.b16 %v49
    %v196 = vunpack.c.l.b16 %v50
    %v197 = vunpack.c.h.b16 %v50
    %v198 = vunpack.c.l.b16 %v51
    %v199 = vunpack.c.h.b16 %v51
    %v200 = vunpack.c.l.b16 %v52
    %v201 = vunpack.c.h.b16 %v52
    %v202 = vunpack.c.l.b16 %v53
    %v203 = vunpack.c.h.b16 %v53
    %v204 = vunpack.c.l.b16 %v54
    %v205 = vunpack.c.h.b16 %v54
    %v206 = vunpack.c.l.b16 %v55
    %v207 = vunpack.c.h.b16 %v55
    %v208 = vpack.c.b16 %v200, %v192
    %v209 = vpack.c.b16 %v201, %v193
    %v210 = vpack.c.b16 %v202, %v194
    %v211 = vpack.c.b16 %v203, %v195
    %v212 = vpack.c.b16 %v204, %v196
    %v213 = vpack.c.b16 %v205, %v197
    %v214 = vpack.c.b16 %v206, %v198
    %v215 = vpack.c.b16 %v207, %v199
    %v352 = vunpack.c.l.b16 %v56
    %v353 = vunpack.c.l.b16 %v57
    %v354 = vunpack.c.l.b16 %v58
    %v355 = vunpack.c.l.b16 %v59
    %v356 = vunpack.c.l.b16 %v60
    %v357 = vunpack.c.l.b16 %v61
    %v358 = vunpack.c.l.b16 %v62
    %v359 = vunpack.c.l.b16 %v63
    %v360 = vunpack.c.l.b16 %v64
    %v361 = vunpack.c.l.b16 %v65
    %v362 = vunpack.c.l.b16 %v66
    %v363 = vunpack.c.l.b16 %v67
    %v364 = vunpack.c.l.b16 %v68
    %v365 = vunpack.c.l.b16 %v69
    %v366 = vunpack.c.l.b16 %v70
    %v367 = vunpack.c.l.b16 %v71
    %v368 = vunpack.c.l.b16 %v72
    %v369 = vunpack.c.l.b16 %v73
    %v370 = vunpack.c.l.b16 %v74
    %v371 = vunpack.c.l.b16 %v75
    %v372 = vunpack.c.l.b16 %v76
    %v373 = vunpack.c.l.b16 %v77
    %v374 = vunpack.c.l.b16 %v78
    %v375 = vunpack.c.l.b16 %v79
    %v376 = vunpack.c.l.b16 %v80
    %v377 = vunpack.c.l.b16 %v81
    %v378 = vunpack.c.l.b16 %v82
    %v379 = vunpack.c.l.b16 %v83
    %v380 = vunpack.c.l.b16 %v84
    %v381 = vunpack.c.l.b16 %v85
    %v382 = vunpack.c.l.b16 %v86
    %v383 = vunpack.c.l.b16 %v87
    %v384 = vunpack.c.l.b16 %v88
    %v385 = vunpack.c.l.b16 %v89
    %v386 = vunpack.c.l.b16 %v90
    %v387 = vunpack.c.l.b16 %v91
    %v388 = vunpack.c.l.b16 %v92
    %v389 = vunpack.c.l.b16 %v93
    %v390 = vunpack.c.l.b16 %v94
    %v391 = vunpack.c.l.b16 %v95
    %v392 = vunpack.c.l.b16 %v96
    %v393 = vunpack.c.l.b16 %v97
    %v394 = vunpack.c.l.b16 %v98
    %v395 = vunpack.c.l.b16 %v99
    %v396 = vunpack.c.l.b16 %v100
    %v397 = vunpack.c.l.b16 %v101
    %v398 = vunpack.c.l.b16 %v102
    %v399 = vunpack.c.l.b16 %v103
    %v400 = vunpack.c.l.b16 %v104
    %v401 = vunpack.c.l.b16 %v105
    %v402 = vunpack.c.l.b16 %v106
    %v403 = vunpack.c.l.b16 %v107
    %v404 = vunpack.c.l.b16 %v108
    %v405 = vunpack.c.l.b16 %v109
    %v406 = vunpack.c.l.b16 %v110
    %v407 = vunpack.c.l.b16 %v111
    %v408 = vunpack.c.l.b16 %v112
    %v409 = vunpack.c.l.b16 %v113
    %v410 = vunpack.c.l.b16 %v114
    %v411 = vunpack.c.l.b16 %v115
    %v412 = vunpack.c.l.b16 %v116
    %v413 = vunpack.c.l.b16 %v117
    %v414 = vunpack.c.l.b16 %v118
    %v415 = vunpack.c.l.b16 %v119
    %v416 = vunpack.c.l.b16 %v120
    %v417 = vunpack.c.l.b16 %v121
    %v418 = vunpack.c.l.b16 %v122
    %v419 = vunpack.c.l.b16 %v123
    %v420 = vunpack.c.l.b16 %v124
    %v421 = vunpack.c.l.b16 %v125
    %v422 = vunpack.c.l.b16 %v126
    %v423 = vunpack.c.l.b16 %v127
    %v424 = vunpack.c.l.b16 %v128
    %v425 = vunpack.c.l.b16 %v129
    %v426 = vunpack.c.l.b16 %v130
    %v427 = vunpack.c.l.b16 %v131
    %v428 = vunpack.c.l.b16 %v132
    %v429 = vunpack.c.l.b16 %v133
    %v430 = vunpack.c.l.b16 %v134
    %v431 = vunpack.c.l.b16 %v135
    %v432 = vunpack.c.l.b16 %v136
    %v433 = vunpack.c.l.b16 %v137
    %v434 = vunpack.c.l.b16 %v138
    %v435 = vunpack.c.l.b16 %v139
    %v436 = vunpack.c.l.b16 %v140
    %v437 = vunpack.c.l.b16 %v141
    %v438 = vunpack.c.l.b16 %v142
    %v439 = vunpack.c.l.b16 %v143
    %v440 = vunpack.c.l.b16 %v144
    %v441 = vunpack.c.l.b16 %v145
    %v442 = vunpack.c.l.b16 %v146
    %v443 = vunpack.c.l.b16 %v147
    %v444 = vunpack.c.l.b16 %v148
    %v445 = vunpack.c.l.b16 %v149
    %v446 = vunpack.c.l.b16 %v150
    %v447 = vunpack.c.l.b16 %v151
    %v448 = vunpack.c.l.b16 %v152
    %v449 = vunpack.c.l.b16 %v153
    %v450 = vunpack.c.l.b16 %v154
    %v451 = vunpack.c.l.b16 %v155
    %v452 = vunpack.c.l.b16 %v156
    %v453 = vunpack.c.l.b16 %v157
    %v454 = vunpack.c.l.b16 %v158
    %v455 = vunpack.c.l.b16 %v159
    %v456 = vunpack.c.l.b16 %v160
    %v457 = vunpack.c.l.b16 %v161
    %v458 = vunpack.c.l.b16 %v162
    %v459 = vunpack.c.l.b16 %v163
    %v460 = vunpack.c.l.b16 %v164
    %v461 = vunpack.c.l.b16 %v165
    %v462 = vunpack.c.l.b16 %v166
    %v463 = vunpack.c.l.b16 %v167
    %v464 = vunpack.c.l.b16 %v168
    %v465 = vunpack.c.l.b16 %v169
    %v466 = vunpack.c.l.b16 %v170
    %v467 = vunpack.c.l.b16 %v171
    %v468 = vunpack.c.l.b16 %v172
    %v469 = vunpack.c.l.b16 %v173
    %v470 = vunpack.c.l.b16 %v174
    %v471 = vunpack.c.l.b16 %v175
    %v472 = vunpack.c.l.b16 %v176
    %v473 = vunpack.c.l.b16 %v177
    %v474 = vunpack.c.l.b16 %v178
    %v475 = vunpack.c.l.b16 %v179
    %v476 = vunpack.c.l.b16 %v180
    %v477 = vunpack.c.l.b16 %v181
    %v478 = vunpack.c.l.b16 %v182
    %v479 = vunpack.c.l.b16 %v183
    %v480 = vpack.c.b16 %v353, %v352
    %v481 = vpack.c.b16 %v355, %v354
    %v482 = vpack.c.b16 %v357, %v356
    %v483 = vpack.c.b16 %v359, %v358
    %v484 = vpack.c.b16 %v361, %v360
    %v485 = vpack.c.b16 %v363, %v362
    %v486 = vpack.c.b16 %v365, %v364
    %v487 = vpack.c.b16 %v367, %v366
    %v488 = vpack.c.b16 %v369, %v368
    %v489 = vpack.c.b16 %v371, %v370
    %v490 = vpack.c.b16 %v373, %v372
    %v491 = vpack.c.b16 %v375, %v374
    %v492 = vpack.c.b16 %v377, %v376
    %v493 = vpack.c.b16 %v379, %v378
    %v494 = vpack.c.b16 %v381, %v380
    %v495 = vpack.c.b16 %v383, %v382
    %v496 = vpack.c.b16 %v385, %v384
    %v497 = vpack.c.b16 %v387, %v386
    %v498 = vpack.c.b16 %v389, %v388
    %v499 = vpack.c.b16 %v391, %v390
    %v500 = vpack.c.b16 %v393, %v392
    %v501 = vpack.c.b16 %v395, %v394
    %v502 = vpack.c.b16 %v397, %v396
    %v503 = vpack.c.b16 %v399, %v398
    %v504 = vpack.c.b16 %v401, %v400
    %v505 = vpack.c.b16 %v403, %v402
    %v506 = vpack.c.b16 %v405, %v404
    %v507 = vpack.c.b16 %v407, %v406
    %v508 = vpack.c.b16 %v409, %v408
    %v509 = vpack.c.b16 %v411, %v410
    %v510 = vpack.c.b16 %v413, %v412
    %v511 = vpack.c.b16 %v415, %v414
    %v512 = vpack.c.b16 %v417, %v416
    %v513 = vpack.c.b16 %v419, %v418
    %v514 = vpack.c.b16 %v421, %v420
    %v515 = vpack.c.b16 %v423, %v422
    %v516 = vpack.c.b16 %v425, %v424
    %v517 = vpack.c.b16 %v427, %v426
    %v518 = vpack.c.b16 %v429, %v428
    %v519 = vpack.c.b16 %v431, %v430
    %v520 = vpack.c.b16 %v433, %v432
    %v521 = vpack.c.b16 %v435, %v434
    %v522 = vpack.c.b16 %v437, %v436
    %v523 = vpack.c.b16 %v439, %v438
    %v524 = vpack.c.b16 %v441, %v440
    %v525 = vpack.c.b16 %v443, %v442
    %v526 = vpack.c.b16 %v445, %v444
    %v527 = vpack.c.b16 %v447, %v446
    %v528 = vpack.c.b16 %v449, %v448
    %v529 = vpack.c.b16 %v451, %v450
    %v530 = vpack.c.b16 %v453, %v452
    %v531 = vpack.c.b16 %v455, %v454
    %v532 = vpack.c.b16 %v457, %v456
    %v533 = vpack.c.b16 %v459, %v458
    %v534 = vpack.c.b16 %v461, %v460
    %v535 = vpack.c.b16 %v463, %v462
    %v536 = vpack.c.b16 %v465, %v464
    %v537 = vpack.c.b16 %v467, %v466
    %v538 = vpack.c.b16 %v469, %v468
    %v539 = vpack.c.b16 %v471, %v470
    %v540 = vpack.c.b16 %v473, %v472
    %v541 = vpack.c.b16 %v475, %v474
    %v542 = vpack.c.b16 %v477, %v476
    %v543 = vpack.c.b16 %v479, %v478
    %608 = vmatprep.subr.bf16.mxu0 0
    %609 = vmatpush1.bf16.msra.mxu0 %v480
    %610 = vmatprep.subr.bf16.mxu0 0
    %611 = vmatpush1.bf16.msra.mxu0 %v481
    %612 = vmatprep.subr.bf16.mxu0 0
    %613 = vmatpush1.bf16.msra.mxu0 %v482
    %614 = vmatprep.subr.bf16.mxu0 0
    %615 = vmatpush1.bf16.msra.mxu0 %v483
    %616 = vmatprep.subr.bf16.mxu0 0
    %617 = vmatpush1.bf16.msra.mxu0 %v484
    %618 = vmatprep.subr.bf16.mxu0 0
    %619 = vmatpush1.bf16.msra.mxu0 %v485
    %620 = vmatprep.subr.bf16.mxu0 0
    %621 = vmatpush1.bf16.msra.mxu0 %v486
    %622 = vmatprep.subr.bf16.mxu0 0
    %623 = vmatpush1.bf16.msra.mxu0 %v487
    %624 = vmatprep.subr.bf16.mxu0 0
    %625 = vmatpush1.bf16.msra.mxu0 %v488
    %626 = vmatprep.subr.bf16.mxu0 0
    %627 = vmatpush1.bf16.msra.mxu0 %v489
    %628 = vmatprep.subr.bf16.mxu0 0
    %629 = vmatpush1.bf16.msra.mxu0 %v490
    %630 = vmatprep.subr.bf16.mxu0 0
    %631 = vmatpush1.bf16.msra.mxu0 %v491
    %632 = vmatprep.subr.bf16.mxu0 0
    %633 = vmatpush1.bf16.msra.mxu0 %v492
    %634 = vmatprep.subr.bf16.mxu0 0
    %635 = vmatpush1.bf16.msra.mxu0 %v493
    %636 = vmatprep.subr.bf16.mxu0 0
    %637 = vmatpush1.bf16.msra.mxu0 %v494
    %638 = vmatprep.subr.bf16.mxu0 0
    %639 = vmatpush1.bf16.msra.mxu0 %v495
    %640 = vmatprep.mubr.bf16.mxu0 %v209
    %641 = vmatmul.mubr.bf16.gmra.mrb[0].mxu0 %v208
    %v642 = vpop.f32.mrb[0].mxu0
    %v643 = vadd.f32 0.0, %v642
    %v644 = vpop.f32.mrb[0].mxu0
    %v645 = vpop.f32.mrb[0].mxu0
    %v646 = vadd.f32 0.0, %v645
    %v647 = vpop.f32.mrb[0].mxu0
    %648 = vdwg.mxu0
    %649 = vmatprep.subr.bf16.mxu0 0
    %650 = vmatpush1.bf16.msra.mxu0 %v496
    %651 = vmatprep.subr.bf16.mxu0 0
    %652 = vmatpush1.bf16.msra.mxu0 %v497
    %653 = vmatprep.subr.bf16.mxu0 0
    %654 = vmatpush1.bf16.msra.mxu0 %v498
    %655 = vmatprep.subr.bf16.mxu0 0
    %656 = vmatpush1.bf16.msra.mxu0 %v499
    %657 = vmatprep.subr.bf16.mxu0 0
    %658 = vmatpush1.bf16.msra.mxu0 %v500
    %659 = vmatprep.subr.bf16.mxu0 0
    %660 = vmatpush1.bf16.msra.mxu0 %v501
    %661 = vmatprep.subr.bf16.mxu0 0
    %662 = vmatpush1.bf16.msra.mxu0 %v502
    %663 = vmatprep.subr.bf16.mxu0 0
    %664 = vmatpush1.bf16.msra.mxu0 %v503
    %665 = vmatprep.subr.bf16.mxu0 0
    %666 = vmatpush1.bf16.msra.mxu0 %v504
    %667 = vmatprep.subr.bf16.mxu0 0
    %668 = vmatpush1.bf16.msra.mxu0 %v505
    %669 = vmatprep.subr.bf16.mxu0 0
    %670 = vmatpush1.bf16.msra.mxu0 %v506
    %671 = vmatprep.subr.bf16.mxu0 0
    %672 = vmatpush1.bf16.msra.mxu0 %v507
    %673 = vmatprep.subr.bf16.mxu0 0
    %674 = vmatpush1.bf16.msra.mxu0 %v508
    %675 = vmatprep.subr.bf16.mxu0 0
    %676 = vmatpush1.bf16.msra.mxu0 %v509
    %677 = vmatprep.subr.bf16.mxu0 0
    %678 = vmatpush1.bf16.msra.mxu0 %v510
    %679 = vmatprep.subr.bf16.mxu0 0
    %680 = vmatpush1.bf16.msra.mxu0 %v511
    %681 = vmatprep.mubr.bf16.mxu0 %v211
    %682 = vmatmul.mubr.bf16.gmra.mrb[0].mxu0 %v210
    %v683 = vpop.f32.mrb[0].mxu0
    %v684 = vadd.f32 %v643, %v683
    %v685 = vpop.f32.mrb[0].mxu0
    %v686 = vpop.f32.mrb[0].mxu0
    %v687 = vadd.f32 %v646, %v686
    %v688 = vpop.f32.mrb[0].mxu0
    %689 = vdwg.mxu0
    %690 = vmatprep.subr.bf16.mxu0 0
    %691 = vmatpush1.bf16.msra.mxu0 %v512
    %692 = vmatprep.subr.bf16.mxu0 0
    %693 = vmatpush1.bf16.msra.mxu0 %v513
    %694 = vmatprep.subr.bf16.mxu0 0
    %695 = vmatpush1.bf16.msra.mxu0 %v514
    %696 = vmatprep.subr.bf16.mxu0 0
    %697 = vmatpush1.bf16.msra.mxu0 %v515
    %698 = vmatprep.subr.bf16.mxu0 0
    %699 = vmatpush1.bf16.msra.mxu0 %v516
    %700 = vmatprep.subr.bf16.mxu0 0
    %701 = vmatpush1.bf16.msra.mxu0 %v517
    %702 = vmatprep.subr.bf16.mxu0 0
    %703 = vmatpush1.bf16.msra.mxu0 %v518
    %704 = vmatprep.subr.bf16.mxu0 0
    %705 = vmatpush1.bf16.msra.mxu0 %v519
    %706 = vmatprep.subr.bf16.mxu0 0
    %707 = vmatpush1.bf16.msra.mxu0 %v520
    %708 = vmatprep.subr.bf16.mxu0 0
    %709 = vmatpush1.bf16.msra.mxu0 %v521
    %710 = vmatprep.subr.bf16.mxu0 0
    %711 = vmatpush1.bf16.msra.mxu0 %v522
    %712 = vmatprep.subr.bf16.mxu0 0
    %713 = vmatpush1.bf16.msra.mxu0 %v523
    %714 = vmatprep.subr.bf16.mxu0 0
    %715 = vmatpush1.bf16.msra.mxu0 %v524
    %716 = vmatprep.subr.bf16.mxu0 0
    %717 = vmatpush1.bf16.msra.mxu0 %v525
    %718 = vmatprep.subr.bf16.mxu0 0
    %719 = vmatpush1.bf16.msra.mxu0 %v526
    %720 = vmatprep.subr.bf16.mxu0 0
    %721 = vmatpush1.bf16.msra.mxu0 %v527
    %722 = vmatprep.mubr.bf16.mxu0 %v213
    %723 = vmatmul.mubr.bf16.gmra.mrb[0].mxu0 %v212
    %v724 = vpop.f32.mrb[0].mxu0
    %v725 = vadd.f32 %v684, %v724
    %v726 = vpop.f32.mrb[0].mxu0
    %v727 = vpop.f32.mrb[0].mxu0
    %v728 = vadd.f32 %v687, %v727
    %v729 = vpop.f32.mrb[0].mxu0
    %730 = vdwg.mxu0
    %731 = vmatprep.subr.bf16.mxu0 0
    %732 = vmatpush1.bf16.msra.mxu0 %v528
    %733 = vmatprep.subr.bf16.mxu0 0
    %734 = vmatpush1.bf16.msra.mxu0 %v529
    %735 = vmatprep.subr.bf16.mxu0 0
    %736 = vmatpush1.bf16.msra.mxu0 %v530
    %737 = vmatprep.subr.bf16.mxu0 0
    %738 = vmatpush1.bf16.msra.mxu0 %v531
    %739 = vmatprep.subr.bf16.mxu0 0
    %740 = vmatpush1.bf16.msra.mxu0 %v532
    %741 = vmatprep.subr.bf16.mxu0 0
    %742 = vmatpush1.bf16.msra.mxu0 %v533
    %743 = vmatprep.subr.bf16.mxu0 0
    %744 = vmatpush1.bf16.msra.mxu0 %v534
    %745 = vmatprep.subr.bf16.mxu0 0
    %746 = vmatpush1.bf16.msra.mxu0 %v535
    %747 = vmatprep.subr.bf16.mxu0 0
    %748 = vmatpush1.bf16.msra.mxu0 %v536
    %749 = vmatprep.subr.bf16.mxu0 0
    %750 = vmatpush1.bf16.msra.mxu0 %v537
    %751 = vmatprep.subr.bf16.mxu0 0
    %752 = vmatpush1.bf16.msra.mxu0 %v538
    %753 = vmatprep.subr.bf16.mxu0 0
    %754 = vmatpush1.bf16.msra.mxu0 %v539
    %755 = vmatprep.subr.bf16.mxu0 0
    %756 = vmatpush1.bf16.msra.mxu0 %v540
    %757 = vmatprep.subr.bf16.mxu0 0
    %758 = vmatpush1.bf16.msra.mxu0 %v541
    %759 = vmatprep.subr.bf16.mxu0 0
    %760 = vmatpush1.bf16.msra.mxu0 %v542
    %761 = vmatprep.subr.bf16.mxu0 0
    %762 = vmatpush1.bf16.msra.mxu0 %v543
    %763 = vmatprep.mubr.bf16.mxu0 %v215
    %764 = vmatmul.mubr.bf16.gmra.mrb[0].mxu0 %v214
    %v765 = vpop.f32.mrb[0].mxu0
    %v766 = vadd.f32 %v725, %v765
    %v767 = vpop.f32.mrb[0].mxu0
    %v768 = vpop.f32.mrb[0].mxu0
    %v769 = vadd.f32 %v728, %v768
    %v770 = vpop.f32.mrb[0].mxu0
    %771 = vdwg.mxu0
    %v772 = vrot.slane %v766, 4
    %v773 = vmax.f32 %v766, %v772
    %v774 = vrot.slane %v773, 2
    %v775 = vmax.f32 %v773, %v774
    %v776 = vrot.slane %v775, 1
    %v777 = vmax.f32 %v775, %v776
    %v778 = vrot.slane %v769, 4
    %v779 = vmax.f32 %v769, %v778
    %v780 = vrot.slane %v779, 2
    %v781 = vmax.f32 %v779, %v780
    %v782 = vrot.slane %v781, 1
    %v783 = vmax.f32 %v781, %v782
    %v784 = vld [vmem:[%s1] sm:$0xff]
    %v785 = vld [vmem:[%s1 + $0x8] sm:$0xff]
    %v786 = vld [vmem:[%s1 + $0x10] sm:$0xff]
    %v787 = vld [vmem:[%s1 + $0x18] sm:$0xff]
    %v788 = vld [vmem:[%s1 + $0x20] sm:$0xff]
    %v789 = vld [vmem:[%s1 + $0x28] sm:$0xff]
    %v790 = vld [vmem:[%s1 + $0x30] sm:$0xff]
    %v791 = vld [vmem:[%s1 + $0x38] sm:$0xff]
    %v792 = vld [vmem:[%s1 + $0x40] sm:$0xff]
    %v793 = vld [vmem:[%s1 + $0x48] sm:$0xff]
    %v794 = vld [vmem:[%s1 + $0x50] sm:$0xff]
    %v795 = vld [vmem:[%s1 + $0x58] sm:$0xff]
    %v796 = vld [vmem:[%s1 + $0x60] sm:$0xff]
    %v797 = vld [vmem:[%s1 + $0x68] sm:$0xff]
    %v798 = vld [vmem:[%s1 + $0x70] sm:$0xff]
    %v799 = vld [vmem:[%s1 + $0x78] sm:$0xff]
    %v800 = vld [vmem:[%s1 + $0x80] sm:$0xff]
    %v801 = vld [vmem:[%s1 + $0x88] sm:$0xff]
    %v802 = vld [vmem:[#allocation2] sm:$0xf]
    %v803 = vld [vmem:[#allocation2 + $0x4] sm:$0xf]
    %v804 = vld [vmem:[#allocation2 + $0x8] sm:$0xf]
    %v805 = vld [vmem:[#allocation2 + $0xc] sm:$0xf]
    %v806 = vld [vmem:[#allocation2 + $0x10] sm:$0xf]
    %v807 = vld [vmem:[#allocation2 + $0x14] sm:$0xf]
    %v808 = vld [vmem:[#allocation2 + $0x18] sm:$0xf]
    %v809 = vld [vmem:[#allocation2 + $0x1c] sm:$0xf]
    %v810 = vld [vmem:[#allocation2 + $0x20] sm:$0xf]
    %v811 = vld [vmem:[#allocation2 + $0x24] sm:$0xf]
    %v812 = vld [vmem:[#allocation2 + $0x28] sm:$0xf]
    %v813 = vld [vmem:[#allocation2 + $0x2c] sm:$0xf]
    %v814 = vld [vmem:[#allocation2 + $0x30] sm:$0xf]
    %v815 = vld [vmem:[#allocation2 + $0x34] sm:$0xf]
    %v816 = vld [vmem:[#allocation2 + $0x38] sm:$0xf]
    %v817 = vld [vmem:[#allocation2 + $0x3c] sm:$0xf]
    %v818 = vld [vmem:[#allocation2 + $0x40] sm:$0xf]
    %v819 = vld [vmem:[#allocation2 + $0x44] sm:$0xf]
    %v820 = vld [vmem:[#allocation2 + $0x48] sm:$0xf]
    %v821 = vld [vmem:[#allocation2 + $0x4c] sm:$0xf]
    %v822 = vld [vmem:[#allocation2 + $0x50] sm:$0xf]
    %v823 = vld [vmem:[#allocation2 + $0x54] sm:$0xf]
    %v824 = vld [vmem:[#allocation2 + $0x58] sm:$0xf]
    %v825 = vld [vmem:[#allocation2 + $0x5c] sm:$0xf]
    %v826 = vld [vmem:[#allocation2 + $0x60] sm:$0xf]
    %v827 = vld [vmem:[#allocation2 + $0x64] sm:$0xf]
    %v828 = vld [vmem:[#allocation2 + $0x68] sm:$0xf]
    %v829 = vld [vmem:[#allocation2 + $0x6c] sm:$0xf]
    %v830 = vld [vmem:[#allocation2 + $0x70] sm:$0xf]
    %v831 = vld [vmem:[#allocation2 + $0x74] sm:$0xf]
    %v832 = vld [vmem:[#allocation2 + $0x78] sm:$0xf]
    %v833 = vld [vmem:[#allocation2 + $0x7c] sm:$0xf]
    %v834 = vld [vmem:[#allocation2 + $0x80] sm:$0xf]
    %v835 = vld [vmem:[#allocation2 + $0x84] sm:$0xf]
    %v836 = vld [vmem:[#allocation2 + $0x88] sm:$0xf]
    %v837 = vld [vmem:[#allocation2 + $0x8c] sm:$0xf]
    %v838 = vld [vmem:[#allocation2 + $0x90] sm:$0xf]
    %v839 = vld [vmem:[#allocation2 + $0x94] sm:$0xf]
    %v840 = vld [vmem:[#allocation2 + $0x98] sm:$0xf]
    %v841 = vld [vmem:[#allocation2 + $0x9c] sm:$0xf]
    %v842 = vld [vmem:[#allocation2 + $0xa0] sm:$0xf]
    %v843 = vld [vmem:[#allocation2 + $0xa4] sm:$0xf]
    %v844 = vld [vmem:[#allocation2 + $0xa8] sm:$0xf]
    %v845 = vld [vmem:[#allocation2 + $0xac] sm:$0xf]
    %v846 = vld [vmem:[#allocation2 + $0xb0] sm:$0xf]
    %v847 = vld [vmem:[#allocation2 + $0xb4] sm:$0xf]
    %v848 = vld [vmem:[#allocation2 + $0xb8] sm:$0xf]
    %v849 = vld [vmem:[#allocation2 + $0xbc] sm:$0xf]
    %v850 = vld [vmem:[#allocation2 + $0xc0] sm:$0xf]
    %v851 = vld [vmem:[#allocation2 + $0xc4] sm:$0xf]
    %v852 = vld [vmem:[#allocation2 + $0xc8] sm:$0xf]
    %v853 = vld [vmem:[#allocation2 + $0xcc] sm:$0xf]
    %v854 = vld [vmem:[#allocation2 + $0xd0] sm:$0xf]
    %v855 = vld [vmem:[#allocation2 + $0xd4] sm:$0xf]
    %v856 = vld [vmem:[#allocation2 + $0xd8] sm:$0xf]
    %v857 = vld [vmem:[#allocation2 + $0xdc] sm:$0xf]
    %v858 = vld [vmem:[#allocation2 + $0xe0] sm:$0xf]
    %v859 = vld [vmem:[#allocation2 + $0xe4] sm:$0xf]
    %v860 = vld [vmem:[#allocation2 + $0xe8] sm:$0xf]
    %v861 = vld [vmem:[#allocation2 + $0xec] sm:$0xf]
    %v862 = vld [vmem:[#allocation2 + $0xf0] sm:$0xf]
    %v863 = vld [vmem:[#allocation2 + $0xf4] sm:$0xf]
    %v864 = vld [vmem:[#allocation2 + $0xf8] sm:$0xf]
    %v865 = vld [vmem:[#allocation2 + $0xfc] sm:$0xf]
    %v866 = vld [vmem:[#allocation2 + $0x100] sm:$0xf]
    %v867 = vld [vmem:[#allocation2 + $0x104] sm:$0xf]
    %v868 = vld [vmem:[#allocation2 + $0x108] sm:$0xf]
    %v869 = vld [vmem:[#allocation2 + $0x10c] sm:$0xf]
    %v870 = vld [vmem:[#allocation2 + $0x110] sm:$0xf]
    %v871 = vld [vmem:[#allocation2 + $0x114] sm:$0xf]
    %v872 = vld [vmem:[#allocation2 + $0x118] sm:$0xf]
    %v873 = vld [vmem:[#allocation2 + $0x11c] sm:$0xf]
    %v874 = vld [vmem:[#allocation2 + $0x120] sm:$0xf]
    %v875 = vld [vmem:[#allocation2 + $0x124] sm:$0xf]
    %v876 = vld [vmem:[#allocation2 + $0x128] sm:$0xf]
    %v877 = vld [vmem:[#allocation2 + $0x12c] sm:$0xf]
    %v878 = vld [vmem:[#allocation2 + $0x130] sm:$0xf]
    %v879 = vld [vmem:[#allocation2 + $0x134] sm:$0xf]
    %v880 = vld [vmem:[#allocation2 + $0x138] sm:$0xf]
    %v881 = vld [vmem:[#allocation2 + $0x13c] sm:$0xf]
    %v882 = vld [vmem:[#allocation2 + $0x140] sm:$0xf]
    %v883 = vld [vmem:[#allocation2 + $0x144] sm:$0xf]
    %v884 = vld [vmem:[#allocation2 + $0x148] sm:$0xf]
    %v885 = vld [vmem:[#allocation2 + $0x14c] sm:$0xf]
    %v886 = vld [vmem:[#allocation2 + $0x150] sm:$0xf]
    %v887 = vld [vmem:[#allocation2 + $0x154] sm:$0xf]
    %v888 = vld [vmem:[#allocation2 + $0x158] sm:$0xf]
    %v889 = vld [vmem:[#allocation2 + $0x15c] sm:$0xf]
    %v890 = vld [vmem:[#allocation2 + $0x160] sm:$0xf]
    %v891 = vld [vmem:[#allocation2 + $0x164] sm:$0xf]
    %v892 = vld [vmem:[#allocation2 + $0x168] sm:$0xf]
    %v893 = vld [vmem:[#allocation2 + $0x16c] sm:$0xf]
    %v894 = vld [vmem:[#allocation2 + $0x170] sm:$0xf]
    %v895 = vld [vmem:[#allocation2 + $0x174] sm:$0xf]
    %v896 = vld [vmem:[#allocation2 + $0x178] sm:$0xf]
    %v897 = vld [vmem:[#allocation2 + $0x17c] sm:$0xf]
    %v898 = vld [vmem:[#allocation2 + $0x180] sm:$0xf]
    %v899 = vld [vmem:[#allocation2 + $0x184] sm:$0xf]
    %v900 = vld [vmem:[#allocation2 + $0x188] sm:$0xf]
    %v901 = vld [vmem:[#allocation2 + $0x18c] sm:$0xf]
    %v902 = vld [vmem:[#allocation2 + $0x190] sm:$0xf]
    %v903 = vld [vmem:[#allocation2 + $0x194] sm:$0xf]
    %v904 = vld [vmem:[#allocation2 + $0x198] sm:$0xf]
    %v905 = vld [vmem:[#allocation2 + $0x19c] sm:$0xf]
    %v906 = vld [vmem:[#allocation2 + $0x1a0] sm:$0xf]
    %v907 = vld [vmem:[#allocation2 + $0x1a4] sm:$0xf]
    %v908 = vld [vmem:[#allocation2 + $0x1a8] sm:$0xf]
    %v909 = vld [vmem:[#allocation2 + $0x1ac] sm:$0xf]
    %v910 = vld [vmem:[#allocation2 + $0x1b0] sm:$0xf]
    %v911 = vld [vmem:[#allocation2 + $0x1b4] sm:$0xf]
    %v912 = vld [vmem:[#allocation2 + $0x1b8] sm:$0xf]
    %v913 = vld [vmem:[#allocation2 + $0x1bc] sm:$0xf]
    %v914 = vld [vmem:[#allocation2 + $0x1c0] sm:$0xf]
    %v915 = vld [vmem:[#allocation2 + $0x1c4] sm:$0xf]
    %v916 = vld [vmem:[#allocation2 + $0x1c8] sm:$0xf]
    %v917 = vld [vmem:[#allocation2 + $0x1cc] sm:$0xf]
    %v918 = vld [vmem:[#allocation2 + $0x1d0] sm:$0xf]
    %v919 = vld [vmem:[#allocation2 + $0x1d4] sm:$0xf]
    %v920 = vld [vmem:[#allocation2 + $0x1d8] sm:$0xf]
    %v921 = vld [vmem:[#allocation2 + $0x1dc] sm:$0xf]
    %v922 = vld [vmem:[#allocation2 + $0x1e0] sm:$0xf]
    %v923 = vld [vmem:[#allocation2 + $0x1e4] sm:$0xf]
    %v924 = vld [vmem:[#allocation2 + $0x1e8] sm:$0xf]
    %v925 = vld [vmem:[#allocation2 + $0x1ec] sm:$0xf]
    %v926 = vld [vmem:[#allocation2 + $0x1f0] sm:$0xf]
    %v927 = vld [vmem:[#allocation2 + $0x1f4] sm:$0xf]
    %v928 = vld [vmem:[#allocation2 + $0x1f8] sm:$0xf]
    %v929 = vld [vmem:[#allocation2 + $0x1fc] sm:$0xf]
    %v930 = vld [vmem:[#allocation2 + $0x200] sm:$0xf]
    %v931 = vld [vmem:[#allocation2 + $0x204] sm:$0xf]
    %v932 = vld [vmem:[#allocation2 + $0x208] sm:$0xf]
    %v933 = vld [vmem:[#allocation2 + $0x20c] sm:$0xf]
    %v934 = vld [vmem:[#allocation2 + $0x210] sm:$0xf]
    %v935 = vld [vmem:[#allocation2 + $0x214] sm:$0xf]
    %v936 = vld [vmem:[#allocation2 + $0x218] sm:$0xf]
    %v937 = vld [vmem:[#allocation2 + $0x21c] sm:$0xf]
    %v938 = vld [vmem:[#allocation2 + $0x220] sm:$0xf]
    %v939 = vld [vmem:[#allocation2 + $0x224] sm:$0xf]
    %v940 = vld [vmem:[#allocation2 + $0x228] sm:$0xf]
    %v941 = vld [vmem:[#allocation2 + $0x22c] sm:$0xf]
    %v942 = vld [vmem:[#allocation2 + $0x230] sm:$0xf]
    %v943 = vld [vmem:[#allocation2 + $0x234] sm:$0xf]
    %v944 = vld [vmem:[#allocation2 + $0x238] sm:$0xf]
    %v945 = vld [vmem:[#allocation2 + $0x23c] sm:$0xf]
    %v946 = vld [vmem:[#allocation2 + $0x240] sm:$0xf]
    %v947 = vld [vmem:[#allocation2 + $0x244] sm:$0xf]
    %v948 = vld [vmem:[#allocation2 + $0x248] sm:$0xf]
    %v949 = vld [vmem:[#allocation2 + $0x24c] sm:$0xf]
    %v950 = vld [vmem:[#allocation2 + $0x250] sm:$0xf]
    %v951 = vld [vmem:[#allocation2 + $0x254] sm:$0xf]
    %v952 = vld [vmem:[#allocation2 + $0x258] sm:$0xf]
    %v953 = vld [vmem:[#allocation2 + $0x25c] sm:$0xf]
    %v954 = vld [vmem:[#allocation2 + $0x260] sm:$0xf]
    %v955 = vld [vmem:[#allocation2 + $0x264] sm:$0xf]
    %v956 = vld [vmem:[#allocation2 + $0x268] sm:$0xf]
    %v957 = vld [vmem:[#allocation2 + $0x26c] sm:$0xf]
    %v958 = vld [vmem:[#allocation2 + $0x270] sm:$0xf]
    %v959 = vld [vmem:[#allocation2 + $0x274] sm:$0xf]
    %v960 = vld [vmem:[#allocation2 + $0x278] sm:$0xf]
    %v961 = vld [vmem:[#allocation2 + $0x27c] sm:$0xf]
    %v962 = vld [vmem:[#allocation2 + $0x280] sm:$0xf]
    %v963 = vld [vmem:[#allocation2 + $0x284] sm:$0xf]
    %v964 = vld [vmem:[#allocation2 + $0x288] sm:$0xf]
    %v965 = vld [vmem:[#allocation2 + $0x28c] sm:$0xf]
    %v966 = vld [vmem:[#allocation2 + $0x290] sm:$0xf]
    %v967 = vld [vmem:[#allocation2 + $0x294] sm:$0xf]
    %v968 = vld [vmem:[#allocation2 + $0x298] sm:$0xf]
    %v969 = vld [vmem:[#allocation2 + $0x29c] sm:$0xf]
    %v970 = vld [vmem:[#allocation2 + $0x2a0] sm:$0xf]
    %v971 = vld [vmem:[#allocation2 + $0x2a4] sm:$0xf]
    %v972 = vld [vmem:[#allocation2 + $0x2a8] sm:$0xf]
    %v973 = vld [vmem:[#allocation2 + $0x2ac] sm:$0xf]
    %v974 = vld [vmem:[#allocation2 + $0x2b0] sm:$0xf]
    %v975 = vld [vmem:[#allocation2 + $0x2b4] sm:$0xf]
    %v976 = vld [vmem:[#allocation2 + $0x2b8] sm:$0xf]
    %v977 = vld [vmem:[#allocation2 + $0x2bc] sm:$0xf]
    %v978 = vld [vmem:[#allocation2 + $0x2c0] sm:$0xf]
    %v979 = vld [vmem:[#allocation2 + $0x2c4] sm:$0xf]
    %v980 = vld [vmem:[#allocation2 + $0x2c8] sm:$0xf]
    %v981 = vld [vmem:[#allocation2 + $0x2cc] sm:$0xf]
    %v982 = vld [vmem:[#allocation2 + $0x2d0] sm:$0xf]
    %v983 = vld [vmem:[#allocation2 + $0x2d4] sm:$0xf]
    %v984 = vld [vmem:[#allocation2 + $0x2d8] sm:$0xf]
    %v985 = vld [vmem:[#allocation2 + $0x2dc] sm:$0xf]
    %v986 = vld [vmem:[#allocation2 + $0x2e0] sm:$0xf]
    %v987 = vld [vmem:[#allocation2 + $0x2e4] sm:$0xf]
    %v988 = vld [vmem:[#allocation2 + $0x2e8] sm:$0xf]
    %v989 = vld [vmem:[#allocation2 + $0x2ec] sm:$0xf]
    %v990 = vld [vmem:[#allocation2 + $0x2f0] sm:$0xf]
    %v991 = vld [vmem:[#allocation2 + $0x2f4] sm:$0xf]
    %v992 = vld [vmem:[#allocation2 + $0x2f8] sm:$0xf]
    %v993 = vld [vmem:[#allocation2 + $0x2fc] sm:$0xf]
    %v994 = vld [vmem:[#allocation2 + $0x300] sm:$0xf]
    %v995 = vld [vmem:[#allocation2 + $0x304] sm:$0xf]
    %v996 = vld [vmem:[#allocation2 + $0x308] sm:$0xf]
    %v997 = vld [vmem:[#allocation2 + $0x30c] sm:$0xf]
    %v998 = vld [vmem:[#allocation2 + $0x310] sm:$0xf]
    %v999 = vld [vmem:[#allocation2 + $0x314] sm:$0xf]
    %v1000 = vld [vmem:[#allocation2 + $0x318] sm:$0xf]
    %v1001 = vld [vmem:[#allocation2 + $0x31c] sm:$0xf]
    %v1002 = vld [vmem:[#allocation2 + $0x320] sm:$0xf]
    %v1003 = vld [vmem:[#allocation2 + $0x324] sm:$0xf]
    %v1004 = vld [vmem:[#allocation2 + $0x328] sm:$0xf]
    %v1005 = vld [vmem:[#allocation2 + $0x32c] sm:$0xf]
    %v1006 = vld [vmem:[#allocation2 + $0x330] sm:$0xf]
    %v1007 = vld [vmem:[#allocation2 + $0x334] sm:$0xf]
    %v1008 = vld [vmem:[#allocation2 + $0x338] sm:$0xf]
    %v1009 = vld [vmem:[#allocation2 + $0x33c] sm:$0xf]
    %v1010 = vld [vmem:[#allocation2 + $0x340] sm:$0xf]
    %v1011 = vld [vmem:[#allocation2 + $0x344] sm:$0xf]
    %v1012 = vld [vmem:[#allocation2 + $0x348] sm:$0xf]
    %v1013 = vld [vmem:[#allocation2 + $0x34c] sm:$0xf]
    %v1014 = vld [vmem:[#allocation2 + $0x350] sm:$0xf]
    %v1015 = vld [vmem:[#allocation2 + $0x354] sm:$0xf]
    %v1016 = vld [vmem:[#allocation2 + $0x358] sm:$0xf]
    %v1017 = vld [vmem:[#allocation2 + $0x35c] sm:$0xf]
    %v1018 = vld [vmem:[#allocation2 + $0x360] sm:$0xf]
    %v1019 = vld [vmem:[#allocation2 + $0x364] sm:$0xf]
    %v1020 = vld [vmem:[#allocation2 + $0x368] sm:$0xf]
    %v1021 = vld [vmem:[#allocation2 + $0x36c] sm:$0xf]
    %v1022 = vld [vmem:[#allocation2 + $0x370] sm:$0xf]
    %v1023 = vld [vmem:[#allocation2 + $0x374] sm:$0xf]
    %v1024 = vld [vmem:[#allocation2 + $0x378] sm:$0xf]
    %v1025 = vld [vmem:[#allocation2 + $0x37c] sm:$0xf]
    %v1026 = vld [vmem:[#allocation2 + $0x380] sm:$0xf]
    %v1027 = vld [vmem:[#allocation2 + $0x384] sm:$0xf]
    %v1028 = vld [vmem:[#allocation2 + $0x388] sm:$0xf]
    %v1029 = vld [vmem:[#allocation2 + $0x38c] sm:$0xf]
    %v1030 = vld [vmem:[#allocation2 + $0x390] sm:$0xf]
    %v1031 = vld [vmem:[#allocation2 + $0x394] sm:$0xf]
    %v1032 = vld [vmem:[#allocation2 + $0x398] sm:$0xf]
    %v1033 = vld [vmem:[#allocation2 + $0x39c] sm:$0xf]
    %v1034 = vld [vmem:[#allocation2 + $0x3a0] sm:$0xf]
    %v1035 = vld [vmem:[#allocation2 + $0x3a4] sm:$0xf]
    %v1036 = vld [vmem:[#allocation2 + $0x3a8] sm:$0xf]
    %v1037 = vld [vmem:[#allocation2 + $0x3ac] sm:$0xf]
    %v1038 = vld [vmem:[#allocation2 + $0x3b0] sm:$0xf]
    %v1039 = vld [vmem:[#allocation2 + $0x3b4] sm:$0xf]
    %v1040 = vld [vmem:[#allocation2 + $0x3b8] sm:$0xf]
    %v1041 = vld [vmem:[#allocation2 + $0x3bc] sm:$0xf]
    %v1042 = vld [vmem:[#allocation2 + $0x3c0] sm:$0xf]
    %v1043 = vld [vmem:[#allocation2 + $0x3c4] sm:$0xf]
    %v1044 = vld [vmem:[#allocation2 + $0x3c8] sm:$0xf]
    %v1045 = vld [vmem:[#allocation2 + $0x3cc] sm:$0xf]
    %v1046 = vld [vmem:[#allocation2 + $0x3d0] sm:$0xf]
    %v1047 = vld [vmem:[#allocation2 + $0x3d4] sm:$0xf]
    %v1048 = vld [vmem:[#allocation2 + $0x3d8] sm:$0xf]
    %v1049 = vld [vmem:[#allocation2 + $0x3dc] sm:$0xf]
    %v1050 = vld [vmem:[#allocation2 + $0x3e0] sm:$0xf]
    %v1051 = vld [vmem:[#allocation2 + $0x3e4] sm:$0xf]
    %v1052 = vld [vmem:[#allocation2 + $0x3e8] sm:$0xf]
    %v1053 = vld [vmem:[#allocation2 + $0x3ec] sm:$0xf]
    %v1054 = vld [vmem:[#allocation2 + $0x3f0] sm:$0xf]
    %v1055 = vld [vmem:[#allocation2 + $0x3f4] sm:$0xf]
    %v1056 = vld [vmem:[#allocation2 + $0x3f8] sm:$0xf]
    %v1057 = vld [vmem:[#allocation2 + $0x3fc] sm:$0xf]
    %v1058 = vld [vmem:[#allocation2 + $0x400] sm:$0xf]
    %v1059 = vld [vmem:[#allocation2 + $0x404] sm:$0xf]
    %v1060 = vld [vmem:[#allocation2 + $0x408] sm:$0xf]
    %v1061 = vld [vmem:[#allocation2 + $0x40c] sm:$0xf]
    %v1062 = vld [vmem:[#allocation2 + $0x410] sm:$0xf]
    %v1063 = vld [vmem:[#allocation2 + $0x414] sm:$0xf]
    %v1064 = vld [vmem:[#allocation2 + $0x418] sm:$0xf]
    %v1065 = vld [vmem:[#allocation2 + $0x41c] sm:$0xf]
    %v1066 = vld [vmem:[#allocation2 + $0x420] sm:$0xf]
    %v1067 = vld [vmem:[#allocation2 + $0x424] sm:$0xf]
    %v1068 = vld [vmem:[#allocation2 + $0x428] sm:$0xf]
    %v1069 = vld [vmem:[#allocation2 + $0x42c] sm:$0xf]
    %v1070 = vld [vmem:[#allocation2 + $0x430] sm:$0xf]
    %v1071 = vld [vmem:[#allocation2 + $0x434] sm:$0xf]
    %v1072 = vld [vmem:[#allocation2 + $0x438] sm:$0xf]
    %v1073 = vld [vmem:[#allocation2 + $0x43c] sm:$0xf]
    %v1074 = vld [vmem:[#allocation2 + $0x440] sm:$0xf]
    %v1075 = vld [vmem:[#allocation2 + $0x444] sm:$0xf]
    %v1076 = vld [vmem:[#allocation2 + $0x448] sm:$0xf]
    %v1077 = vld [vmem:[#allocation2 + $0x44c] sm:$0xf]
    %v1078 = vld [vmem:[#allocation2 + $0x450] sm:$0xf]
    %v1079 = vld [vmem:[#allocation2 + $0x454] sm:$0xf]
    %v1080 = vld [vmem:[#allocation2 + $0x458] sm:$0xf]
    %v1081 = vld [vmem:[#allocation2 + $0x45c] sm:$0xf]
    %v1082 = vld [vmem:[#allocation2 + $0x460] sm:$0xf]
    %v1083 = vld [vmem:[#allocation2 + $0x464] sm:$0xf]
    %v1084 = vld [vmem:[#allocation2 + $0x468] sm:$0xf]
    %v1085 = vld [vmem:[#allocation2 + $0x46c] sm:$0xf]
    %v1086 = vld [vmem:[#allocation2 + $0x470] sm:$0xf]
    %v1087 = vld [vmem:[#allocation2 + $0x474] sm:$0xf]
    %v1088 = vld [vmem:[#allocation2 + $0x478] sm:$0xf]
    %v1089 = vld [vmem:[#allocation2 + $0x47c] sm:$0xf]
    %v1108 = vunpack.c.l.b16 %v784
    %v1109 = vunpack.c.h.b16 %v784
    %v1110 = vunpack.c.l.b16 %v785
    %v1111 = vunpack.c.h.b16 %v785
    %v1112 = vunpack.c.l.b16 %v786
    %v1113 = vunpack.c.h.b16 %v786
    %v1114 = vunpack.c.l.b16 %v787
    %v1115 = vunpack.c.h.b16 %v787
    %v1116 = vunpack.c.l.b16 %v788
    %v1117 = vunpack.c.h.b16 %v788
    %v1118 = vunpack.c.l.b16 %v789
    %v1119 = vunpack.c.h.b16 %v789
    %v1120 = vunpack.c.l.b16 %v790
    %v1121 = vunpack.c.h.b16 %v790
    %v1122 = vunpack.c.l.b16 %v791
    %v1123 = vunpack.c.h.b16 %v791
    %v1124 = vunpack.c.l.b16 %v792
    %v1125 = vunpack.c.h.b16 %v792
    %v1126 = vunpack.c.l.b16 %v793
    %v1127 = vunpack.c.h.b16 %v793
    %v1128 = vunpack.c.l.b16 %v794
    %v1129 = vunpack.c.h.b16 %v794
    %v1130 = vunpack.c.l.b16 %v795
    %v1131 = vunpack.c.h.b16 %v795
    %v1132 = vunpack.c.l.b16 %v796
    %v1133 = vunpack.c.h.b16 %v796
    %v1134 = vunpack.c.l.b16 %v797
    %v1135 = vunpack.c.h.b16 %v797
    %v1136 = vunpack.c.l.b16 %v798
    %v1137 = vunpack.c.h.b16 %v798
    %v1138 = vunpack.c.l.b16 %v799
    %v1139 = vunpack.c.h.b16 %v799
    %v1140 = vunpack.c.l.b16 %v800
    %v1141 = vunpack.c.h.b16 %v800
    %v1142 = vunpack.c.l.b16 %v801
    %v1143 = vunpack.c.h.b16 %v801
    %v1144 = vpack.c.b16 %v1126, %v1108
    %v1145 = vpack.c.b16 %v1127, %v1109
    %v1146 = vpack.c.b16 %v1128, %v1110
    %v1147 = vpack.c.b16 %v1129, %v1111
    %v1148 = vpack.c.b16 %v1130, %v1112
    %v1149 = vpack.c.b16 %v1131, %v1113
    %v1150 = vpack.c.b16 %v1132, %v1114
    %v1151 = vpack.c.b16 %v1133, %v1115
    %v1152 = vpack.c.b16 %v1134, %v1116
    %v1153 = vpack.c.b16 %v1135, %v1117
    %v1154 = vpack.c.b16 %v1136, %v1118
    %v1155 = vpack.c.b16 %v1137, %v1119
    %v1156 = vpack.c.b16 %v1138, %v1120
    %v1157 = vpack.c.b16 %v1139, %v1121
    %v1158 = vpack.c.b16 %v1140, %v1122
    %v1159 = vpack.c.b16 %v1141, %v1123
    %v1160 = vpack.c.b16 %v1142, %v1124
    %v1161 = vpack.c.b16 %v1143, %v1125
    %v1468 = vunpack.c.l.b16 %v802
    %v1469 = vunpack.c.l.b16 %v803
    %v1470 = vunpack.c.l.b16 %v804
    %v1471 = vunpack.c.l.b16 %v805
    %v1472 = vunpack.c.l.b16 %v806
    %v1473 = vunpack.c.l.b16 %v807
    %v1474 = vunpack.c.l.b16 %v808
    %v1475 = vunpack.c.l.b16 %v809
    %v1476 = vunpack.c.l.b16 %v810
    %v1477 = vunpack.c.l.b16 %v811
    %v1478 = vunpack.c.l.b16 %v812
    %v1479 = vunpack.c.l.b16 %v813
    %v1480 = vunpack.c.l.b16 %v814
    %v1481 = vunpack.c.l.b16 %v815
    %v1482 = vunpack.c.l.b16 %v816
    %v1483 = vunpack.c.l.b16 %v817
    %v1484 = vunpack.c.l.b16 %v818
    %v1485 = vunpack.c.l.b16 %v819
    %v1486 = vunpack.c.l.b16 %v820
    %v1487 = vunpack.c.l.b16 %v821
    %v1488 = vunpack.c.l.b16 %v822
    %v1489 = vunpack.c.l.b16 %v823
    %v1490 = vunpack.c.l.b16 %v824
    %v1491 = vunpack.c.l.b16 %v825
    %v1492 = vunpack.c.l.b16 %v826
    %v1493 = vunpack.c.l.b16 %v827
    %v1494 = vunpack.c.l.b16 %v828
    %v1495 = vunpack.c.l.b16 %v829
    %v1496 = vunpack.c.l.b16 %v830
    %v1497 = vunpack.c.l.b16 %v831
    %v1498 = vunpack.c.l.b16 %v832
    %v1499 = vunpack.c.l.b16 %v833
    %v1500 = vunpack.c.l.b16 %v834
    %v1501 = vunpack.c.l.b16 %v835
    %v1502 = vunpack.c.l.b16 %v836
    %v1503 = vunpack.c.l.b16 %v837
    %v1504 = vunpack.c.l.b16 %v838
    %v1505 = vunpack.c.l.b16 %v839
    %v1506 = vunpack.c.l.b16 %v840
    %v1507 = vunpack.c.l.b16 %v841
    %v1508 = vunpack.c.l.b16 %v842
    %v1509 = vunpack.c.l.b16 %v843
    %v1510 = vunpack.c.l.b16 %v844
    %v1511 = vunpack.c.l.b16 %v845
    %v1512 = vunpack.c.l.b16 %v846
    %v1513 = vunpack.c.l.b16 %v847
    %v1514 = vunpack.c.l.b16 %v848
    %v1515 = vunpack.c.l.b16 %v849
    %v1516 = vunpack.c.l.b16 %v850
    %v1517 = vunpack.c.l.b16 %v851
    %v1518 = vunpack.c.l.b16 %v852
    %v1519 = vunpack.c.l.b16 %v853
    %v1520 = vunpack.c.l.b16 %v854
    %v1521 = vunpack.c.l.b16 %v855
    %v1522 = vunpack.c.l.b16 %v856
    %v1523 = vunpack.c.l.b16 %v857
    %v1524 = vunpack.c.l.b16 %v858
    %v1525 = vunpack.c.l.b16 %v859
    %v1526 = vunpack.c.l.b16 %v860
    %v1527 = vunpack.c.l.b16 %v861
    %v1528 = vunpack.c.l.b16 %v862
    %v1529 = vunpack.c.l.b16 %v863
    %v1530 = vunpack.c.l.b16 %v864
    %v1531 = vunpack.c.l.b16 %v865
    %v1532 = vunpack.c.l.b16 %v866
    %v1533 = vunpack.c.l.b16 %v867
    %v1534 = vunpack.c.l.b16 %v868
    %v1535 = vunpack.c.l.b16 %v869
    %v1536 = vunpack.c.l.b16 %v870
    %v1537 = vunpack.c.l.b16 %v871
    %v1538 = vunpack.c.l.b16 %v872
    %v1539 = vunpack.c.l.b16 %v873
    %v1540 = vunpack.c.l.b16 %v874
    %v1541 = vunpack.c.l.b16 %v875
    %v1542 = vunpack.c.l.b16 %v876
    %v1543 = vunpack.c.l.b16 %v877
    %v1544 = vunpack.c.l.b16 %v878
    %v1545 = vunpack.c.l.b16 %v879
    %v1546 = vunpack.c.l.b16 %v880
    %v1547 = vunpack.c.l.b16 %v881
    %v1548 = vunpack.c.l.b16 %v882
    %v1549 = vunpack.c.l.b16 %v883
    %v1550 = vunpack.c.l.b16 %v884
    %v1551 = vunpack.c.l.b16 %v885
    %v1552 = vunpack.c.l.b16 %v886
    %v1553 = vunpack.c.l.b16 %v887
    %v1554 = vunpack.c.l.b16 %v888
    %v1555 = vunpack.c.l.b16 %v889
    %v1556 = vunpack.c.l.b16 %v890
    %v1557 = vunpack.c.l.b16 %v891
    %v1558 = vunpack.c.l.b16 %v892
    %v1559 = vunpack.c.l.b16 %v893
    %v1560 = vunpack.c.l.b16 %v894
    %v1561 = vunpack.c.l.b16 %v895
    %v1562 = vunpack.c.l.b16 %v896
    %v1563 = vunpack.c.l.b16 %v897
    %v1564 = vunpack.c.l.b16 %v898
    %v1565 = vunpack.c.l.b16 %v899
    %v1566 = vunpack.c.l.b16 %v900
    %v1567 = vunpack.c.l.b16 %v901
    %v1568 = vunpack.c.l.b16 %v902
    %v1569 = vunpack.c.l.b16 %v903
    %v1570 = vunpack.c.l.b16 %v904
    %v1571 = vunpack.c.l.b16 %v905
    %v1572 = vunpack.c.l.b16 %v906
    %v1573 = vunpack.c.l.b16 %v907
    %v1574 = vunpack.c.l.b16 %v908
    %v1575 = vunpack.c.l.b16 %v909
    %v1576 = vunpack.c.l.b16 %v910
    %v1577 = vunpack.c.l.b16 %v911
    %v1578 = vunpack.c.l.b16 %v912
    %v1579 = vunpack.c.l.b16 %v913
    %v1580 = vunpack.c.l.b16 %v914
    %v1581 = vunpack.c.l.b16 %v915
    %v1582 = vunpack.c.l.b16 %v916
    %v1583 = vunpack.c.l.b16 %v917
    %v1584 = vunpack.c.l.b16 %v918
    %v1585 = vunpack.c.l.b16 %v919
    %v1586 = vunpack.c.l.b16 %v920
    %v1587 = vunpack.c.l.b16 %v921
    %v1588 = vunpack.c.l.b16 %v922
    %v1589 = vunpack.c.l.b16 %v923
    %v1590 = vunpack.c.l.b16 %v924
    %v1591 = vunpack.c.l.b16 %v925
    %v1592 = vunpack.c.l.b16 %v926
    %v1593 = vunpack.c.l.b16 %v927
    %v1594 = vunpack.c.l.b16 %v928
    %v1595 = vunpack.c.l.b16 %v929
    %v1596 = vunpack.c.l.b16 %v930
    %v1597 = vunpack.c.l.b16 %v931
    %v1598 = vunpack.c.l.b16 %v932
    %v1599 = vunpack.c.l.b16 %v933
    %v1600 = vunpack.c.l.b16 %v934
    %v1601 = vunpack.c.l.b16 %v935
    %v1602 = vunpack.c.l.b16 %v936
    %v1603 = vunpack.c.l.b16 %v937
    %v1604 = vunpack.c.l.b16 %v938
    %v1605 = vunpack.c.l.b16 %v939
    %v1606 = vunpack.c.l.b16 %v940
    %v1607 = vunpack.c.l.b16 %v941
    %v1608 = vunpack.c.l.b16 %v942
    %v1609 = vunpack.c.l.b16 %v943
    %v1610 = vunpack.c.l.b16 %v944
    %v1611 = vunpack.c.l.b16 %v945
    %v1612 = vunpack.c.l.b16 %v946
    %v1613 = vunpack.c.l.b16 %v947
    %v1614 = vunpack.c.l.b16 %v948
    %v1615 = vunpack.c.l.b16 %v949
    %v1616 = vunpack.c.l.b16 %v950
    %v1617 = vunpack.c.l.b16 %v951
    %v1618 = vunpack.c.l.b16 %v952
    %v1619 = vunpack.c.l.b16 %v953
    %v1620 = vunpack.c.l.b16 %v954
    %v1621 = vunpack.c.l.b16 %v955
    %v1622 = vunpack.c.l.b16 %v956
    %v1623 = vunpack.c.l.b16 %v957
    %v1624 = vunpack.c.l.b16 %v958
    %v1625 = vunpack.c.l.b16 %v959
    %v1626 = vunpack.c.l.b16 %v960
    %v1627 = vunpack.c.l.b16 %v961
    %v1628 = vunpack.c.l.b16 %v962
    %v1629 = vunpack.c.l.b16 %v963
    %v1630 = vunpack.c.l.b16 %v964
    %v1631 = vunpack.c.l.b16 %v965
    %v1632 = vunpack.c.l.b16 %v966
    %v1633 = vunpack.c.l.b16 %v967
    %v1634 = vunpack.c.l.b16 %v968
    %v1635 = vunpack.c.l.b16 %v969
    %v1636 = vunpack.c.l.b16 %v970
    %v1637 = vunpack.c.l.b16 %v971
    %v1638 = vunpack.c.l.b16 %v972
    %v1639 = vunpack.c.l.b16 %v973
    %v1640 = vunpack.c.l.b16 %v974
    %v1641 = vunpack.c.l.b16 %v975
    %v1642 = vunpack.c.l.b16 %v976
    %v1643 = vunpack.c.l.b16 %v977
    %v1644 = vunpack.c.l.b16 %v978
    %v1645 = vunpack.c.l.b16 %v979
    %v1646 = vunpack.c.l.b16 %v980
    %v1647 = vunpack.c.l.b16 %v981
    %v1648 = vunpack.c.l.b16 %v982
    %v1649 = vunpack.c.l.b16 %v983
    %v1650 = vunpack.c.l.b16 %v984
    %v1651 = vunpack.c.l.b16 %v985
    %v1652 = vunpack.c.l.b16 %v986
    %v1653 = vunpack.c.l.b16 %v987
    %v1654 = vunpack.c.l.b16 %v988
    %v1655 = vunpack.c.l.b16 %v989
    %v1656 = vunpack.c.l.b16 %v990
    %v1657 = vunpack.c.l.b16 %v991
    %v1658 = vunpack.c.l.b16 %v992
    %v1659 = vunpack.c.l.b16 %v993
    %v1660 = vunpack.c.l.b16 %v994
    %v1661 = vunpack.c.l.b16 %v995
    %v1662 = vunpack.c.l.b16 %v996
    %v1663 = vunpack.c.l.b16 %v997
    %v1664 = vunpack.c.l.b16 %v998
    %v1665 = vunpack.c.l.b16 %v999
    %v1666 = vunpack.c.l.b16 %v1000
    %v1667 = vunpack.c.l.b16 %v1001
    %v1668 = vunpack.c.l.b16 %v1002
    %v1669 = vunpack.c.l.b16 %v1003
    %v1670 = vunpack.c.l.b16 %v1004
    %v1671 = vunpack.c.l.b16 %v1005
    %v1672 = vunpack.c.l.b16 %v1006
    %v1673 = vunpack.c.l.b16 %v1007
    %v1674 = vunpack.c.l.b16 %v1008
    %v1675 = vunpack.c.l.b16 %v1009
    %v1676 = vunpack.c.l.b16 %v1010
    %v1677 = vunpack.c.l.b16 %v1011
    %v1678 = vunpack.c.l.b16 %v1012
    %v1679 = vunpack.c.l.b16 %v1013
    %v1680 = vunpack.c.l.b16 %v1014
    %v1681 = vunpack.c.l.b16 %v1015
    %v1682 = vunpack.c.l.b16 %v1016
    %v1683 = vunpack.c.l.b16 %v1017
    %v1684 = vunpack.c.l.b16 %v1018
    %v1685 = vunpack.c.l.b16 %v1019
    %v1686 = vunpack.c.l.b16 %v1020
    %v1687 = vunpack.c.l.b16 %v1021
    %v1688 = vunpack.c.l.b16 %v1022
    %v1689 = vunpack.c.l.b16 %v1023
    %v1690 = vunpack.c.l.b16 %v1024
    %v1691 = vunpack.c.l.b16 %v1025
    %v1692 = vunpack.c.l.b16 %v1026
    %v1693 = vunpack.c.l.b16 %v1027
    %v1694 = vunpack.c.l.b16 %v1028
    %v1695 = vunpack.c.l.b16 %v1029
    %v1696 = vunpack.c.l.b16 %v1030
    %v1697 = vunpack.c.l.b16 %v1031
    %v1698 = vunpack.c.l.b16 %v1032
    %v1699 = vunpack.c.l.b16 %v1033
    %v1700 = vunpack.c.l.b16 %v1034
    %v1701 = vunpack.c.l.b16 %v1035
    %v1702 = vunpack.c.l.b16 %v1036
    %v1703 = vunpack.c.l.b16 %v1037
    %v1704 = vunpack.c.l.b16 %v1038
    %v1705 = vunpack.c.l.b16 %v1039
    %v1706 = vunpack.c.l.b16 %v1040
    %v1707 = vunpack.c.l.b16 %v1041
    %v1708 = vunpack.c.l.b16 %v1042
    %v1709 = vunpack.c.l.b16 %v1043
    %v1710 = vunpack.c.l.b16 %v1044
    %v1711 = vunpack.c.l.b16 %v1045
    %v1712 = vunpack.c.l.b16 %v1046
    %v1713 = vunpack.c.l.b16 %v1047
    %v1714 = vunpack.c.l.b16 %v1048
    %v1715 = vunpack.c.l.b16 %v1049
    %v1716 = vunpack.c.l.b16 %v1050
    %v1717 = vunpack.c.l.b16 %v1051
    %v1718 = vunpack.c.l.b16 %v1052
    %v1719 = vunpack.c.l.b16 %v1053
    %v1720 = vunpack.c.l.b16 %v1054
    %v1721 = vunpack.c.l.b16 %v1055
    %v1722 = vunpack.c.l.b16 %v1056
    %v1723 = vunpack.c.l.b16 %v1057
    %v1724 = vunpack.c.l.b16 %v1058
    %v1725 = vunpack.c.l.b16 %v1059
    %v1726 = vunpack.c.l.b16 %v1060
    %v1727 = vunpack.c.l.b16 %v1061
    %v1728 = vunpack.c.l.b16 %v1062
    %v1729 = vunpack.c.l.b16 %v1063
    %v1730 = vunpack.c.l.b16 %v1064
    %v1731 = vunpack.c.l.b16 %v1065
    %v1732 = vunpack.c.l.b16 %v1066
    %v1733 = vunpack.c.l.b16 %v1067
    %v1734 = vunpack.c.l.b16 %v1068
    %v1735 = vunpack.c.l.b16 %v1069
    %v1736 = vunpack.c.l.b16 %v1070
    %v1737 = vunpack.c.l.b16 %v1071
    %v1738 = vunpack.c.l.b16 %v1072
    %v1739 = vunpack.c.l.b16 %v1073
    %v1740 = vunpack.c.l.b16 %v1074
    %v1741 = vunpack.c.l.b16 %v1075
    %v1742 = vunpack.c.l.b16 %v1076
    %v1743 = vunpack.c.l.b16 %v1077
    %v1744 = vunpack.c.l.b16 %v1078
    %v1745 = vunpack.c.l.b16 %v1079
    %v1746 = vunpack.c.l.b16 %v1080
    %v1747 = vunpack.c.l.b16 %v1081
    %v1748 = vunpack.c.l.b16 %v1082
    %v1749 = vunpack.c.l.b16 %v1083
    %v1750 = vunpack.c.l.b16 %v1084
    %v1751 = vunpack.c.l.b16 %v1085
    %v1752 = vunpack.c.l.b16 %v1086
    %v1753 = vunpack.c.l.b16 %v1087
    %v1754 = vunpack.c.l.b16 %v1088
    %v1755 = vunpack.c.l.b16 %v1089
    %v1756 = vpack.c.b16 %v1469, %v1468
    %v1757 = vpack.c.b16 %v1471, %v1470
    %v1758 = vpack.c.b16 %v1473, %v1472
    %v1759 = vpack.c.b16 %v1475, %v1474
    %v1760 = vpack.c.b16 %v1477, %v1476
    %v1761 = vpack.c.b16 %v1479, %v1478
    %v1762 = vpack.c.b16 %v1481, %v1480
    %v1763 = vpack.c.b16 %v1483, %v1482
    %v1764 = vpack.c.b16 %v1485, %v1484
    %v1765 = vpack.c.b16 %v1487, %v1486
    %v1766 = vpack.c.b16 %v1489, %v1488
    %v1767 = vpack.c.b16 %v1491, %v1490
    %v1768 = vpack.c.b16 %v1493, %v1492
    %v1769 = vpack.c.b16 %v1495, %v1494
    %v1770 = vpack.c.b16 %v1497, %v1496
    %v1771 = vpack.c.b16 %v1499, %v1498
    %v1772 = vpack.c.b16 %v1501, %v1500
    %v1773 = vpack.c.b16 %v1503, %v1502
    %v1774 = vpack.c.b16 %v1505, %v1504
    %v1775 = vpack.c.b16 %v1507, %v1506
    %v1776 = vpack.c.b16 %v1509, %v1508
    %v1777 = vpack.c.b16 %v1511, %v1510
    %v1778 = vpack.c.b16 %v1513, %v1512
    %v1779 = vpack.c.b16 %v1515, %v1514
    %v1780 = vpack.c.b16 %v1517, %v1516
    %v1781 = vpack.c.b16 %v1519, %v1518
    %v1782 = vpack.c.b16 %v1521, %v1520
    %v1783 = vpack.c.b16 %v1523, %v1522
    %v1784 = vpack.c.b16 %v1525, %v1524
    %v1785 = vpack.c.b16 %v1527, %v1526
    %v1786 = vpack.c.b16 %v1529, %v1528
    %v1787 = vpack.c.b16 %v1531, %v1530
    %v1788 = vpack.c.b16 %v1533, %v1532
    %v1789 = vpack.c.b16 %v1535, %v1534
    %v1790 = vpack.c.b16 %v1537, %v1536
    %v1791 = vpack.c.b16 %v1539, %v1538
    %v1792 = vpack.c.b16 %v1541, %v1540
    %v1793 = vpack.c.b16 %v1543, %v1542
    %v1794 = vpack.c.b16 %v1545, %v1544
    %v1795 = vpack.c.b16 %v1547, %v1546
    %v1796 = vpack.c.b16 %v1549, %v1548
    %v1797 = vpack.c.b16 %v1551, %v1550
    %v1798 = vpack.c.b16 %v1553, %v1552
    %v1799 = vpack.c.b16 %v1555, %v1554
    %v1800 = vpack.c.b16 %v1557, %v1556
    %v1801 = vpack.c.b16 %v1559, %v1558
    %v1802 = vpack.c.b16 %v1561, %v1560
    %v1803 = vpack.c.b16 %v1563, %v1562
    %v1804 = vpack.c.b16 %v1565, %v1564
    %v1805 = vpack.c.b16 %v1567, %v1566
    %v1806 = vpack.c.b16 %v1569, %v1568
    %v1807 = vpack.c.b16 %v1571, %v1570
    %v1808 = vpack.c.b16 %v1573, %v1572
    %v1809 = vpack.c.b16 %v1575, %v1574
    %v1810 = vpack.c.b16 %v1577, %v1576
    %v1811 = vpack.c.b16 %v1579, %v1578
    %v1812 = vpack.c.b16 %v1581, %v1580
    %v1813 = vpack.c.b16 %v1583, %v1582
    %v1814 = vpack.c.b16 %v1585, %v1584
    %v1815 = vpack.c.b16 %v1587, %v1586
    %v1816 = vpack.c.b16 %v1589, %v1588
    %v1817 = vpack.c.b16 %v1591, %v1590
    %v1818 = vpack.c.b16 %v1593, %v1592
    %v1819 = vpack.c.b16 %v1595, %v1594
    %v1820 = vpack.c.b16 %v1597, %v1596
    %v1821 = vpack.c.b16 %v1599, %v1598
    %v1822 = vpack.c.b16 %v1601, %v1600
    %v1823 = vpack.c.b16 %v1603, %v1602
    %v1824 = vpack.c.b16 %v1605, %v1604
    %v1825 = vpack.c.b16 %v1607, %v1606
    %v1826 = vpack.c.b16 %v1609, %v1608
    %v1827 = vpack.c.b16 %v1611, %v1610
    %v1828 = vpack.c.b16 %v1613, %v1612
    %v1829 = vpack.c.b16 %v1615, %v1614
    %v1830 = vpack.c.b16 %v1617, %v1616
    %v1831 = vpack.c.b16 %v1619, %v1618
    %v1832 = vpack.c.b16 %v1621, %v1620
    %v1833 = vpack.c.b16 %v1623, %v1622
    %v1834 = vpack.c.b16 %v1625, %v1624
    %v1835 = vpack.c.b16 %v1627, %v1626
    %v1836 = vpack.c.b16 %v1629, %v1628
    %v1837 = vpack.c.b16 %v1631, %v1630
    %v1838 = vpack.c.b16 %v1633, %v1632
    %v1839 = vpack.c.b16 %v1635, %v1634
    %v1840 = vpack.c.b16 %v1637, %v1636
    %v1841 = vpack.c.b16 %v1639, %v1638
    %v1842 = vpack.c.b16 %v1641, %v1640
    %v1843 = vpack.c.b16 %v1643, %v1642
    %v1844 = vpack.c.b16 %v1645, %v1644
    %v1845 = vpack.c.b16 %v1647, %v1646
    %v1846 = vpack.c.b16 %v1649, %v1648
    %v1847 = vpack.c.b16 %v1651, %v1650
    %v1848 = vpack.c.b16 %v1653, %v1652
    %v1849 = vpack.c.b16 %v1655, %v1654
    %v1850 = vpack.c.b16 %v1657, %v1656
    %v1851 = vpack.c.b16 %v1659, %v1658
    %v1852 = vpack.c.b16 %v1661, %v1660
    %v1853 = vpack.c.b16 %v1663, %v1662
    %v1854 = vpack.c.b16 %v1665, %v1664
    %v1855 = vpack.c.b16 %v1667, %v1666
    %v1856 = vpack.c.b16 %v1669, %v1668
    %v1857 = vpack.c.b16 %v1671, %v1670
    %v1858 = vpack.c.b16 %v1673, %v1672
    %v1859 = vpack.c.b16 %v1675, %v1674
    %v1860 = vpack.c.b16 %v1677, %v1676
    %v1861 = vpack.c.b16 %v1679, %v1678
    %v1862 = vpack.c.b16 %v1681, %v1680
    %v1863 = vpack.c.b16 %v1683, %v1682
    %v1864 = vpack.c.b16 %v1685, %v1684
    %v1865 = vpack.c.b16 %v1687, %v1686
    %v1866 = vpack.c.b16 %v1689, %v1688
    %v1867 = vpack.c.b16 %v1691, %v1690
    %v1868 = vpack.c.b16 %v1693, %v1692
    %v1869 = vpack.c.b16 %v1695, %v1694
    %v1870 = vpack.c.b16 %v1697, %v1696
    %v1871 = vpack.c.b16 %v1699, %v1698
    %v1872 = vpack.c.b16 %v1701, %v1700
    %v1873 = vpack.c.b16 %v1703, %v1702
    %v1874 = vpack.c.b16 %v1705, %v1704
    %v1875 = vpack.c.b16 %v1707, %v1706
    %v1876 = vpack.c.b16 %v1709, %v1708
    %v1877 = vpack.c.b16 %v1711, %v1710
    %v1878 = vpack.c.b16 %v1713, %v1712
    %v1879 = vpack.c.b16 %v1715, %v1714
    %v1880 = vpack.c.b16 %v1717, %v1716
    %v1881 = vpack.c.b16 %v1719, %v1718
    %v1882 = vpack.c.b16 %v1721, %v1720
    %v1883 = vpack.c.b16 %v1723, %v1722
    %v1884 = vpack.c.b16 %v1725, %v1724
    %v1885 = vpack.c.b16 %v1727, %v1726
    %v1886 = vpack.c.b16 %v1729, %v1728
    %v1887 = vpack.c.b16 %v1731, %v1730
    %v1888 = vpack.c.b16 %v1733, %v1732
    %v1889 = vpack.c.b16 %v1735, %v1734
    %v1890 = vpack.c.b16 %v1737, %v1736
    %v1891 = vpack.c.b16 %v1739, %v1738
    %v1892 = vpack.c.b16 %v1741, %v1740
    %v1893 = vpack.c.b16 %v1743, %v1742
    %v1894 = vpack.c.b16 %v1745, %v1744
    %v1895 = vpack.c.b16 %v1747, %v1746
    %v1896 = vpack.c.b16 %v1749, %v1748
    %v1897 = vpack.c.b16 %v1751, %v1750
    %v1898 = vpack.c.b16 %v1753, %v1752
    %v1899 = vpack.c.b16 %v1755, %v1754
    %2044 = vmatprep.subr.bf16.mxu0 0
    %2045 = vmatpush1.bf16.msra.mxu0 %v1756
    %2046 = vmatprep.subr.bf16.mxu0 0
    %2047 = vmatpush1.bf16.msra.mxu0 %v1757
    %2048 = vmatprep.subr.bf16.mxu0 0
    %2049 = vmatpush1.bf16.msra.mxu0 %v1758
    %2050 = vmatprep.subr.bf16.mxu0 0
    %2051 = vmatpush1.bf16.msra.mxu0 %v1759
    %2052 = vmatprep.subr.bf16.mxu0 0
    %2053 = vmatpush1.bf16.msra.mxu0 %v1760
    %2054 = vmatprep.subr.bf16.mxu0 0
    %2055 = vmatpush1.bf16.msra.mxu0 %v1761
    %2056 = vmatprep.subr.bf16.mxu0 0
    %2057 = vmatpush1.bf16.msra.mxu0 %v1762
    %2058 = vmatprep.subr.bf16.mxu0 0
    %2059 = vmatpush1.bf16.msra.mxu0 %v1763
    %2060 = vmatprep.subr.bf16.mxu0 0
    %2061 = vmatpush1.bf16.msra.mxu0 %v1764
    %2062 = vmatprep.subr.bf16.mxu0 0
    %2063 = vmatpush1.bf16.msra.mxu0 %v1765
    %2064 = vmatprep.subr.bf16.mxu0 0
    %2065 = vmatpush1.bf16.msra.mxu0 %v1766
    %2066 = vmatprep.subr.bf16.mxu0 0
    %2067 = vmatpush1.bf16.msra.mxu0 %v1767
    %2068 = vmatprep.subr.bf16.mxu0 0
    %2069 = vmatpush1.bf16.msra.mxu0 %v1768
    %2070 = vmatprep.subr.bf16.mxu0 0
    %2071 = vmatpush1.bf16.msra.mxu0 %v1769
    %2072 = vmatprep.subr.bf16.mxu0 0
    %2073 = vmatpush1.bf16.msra.mxu0 %v1770
    %2074 = vmatprep.subr.bf16.mxu0 0
    %2075 = vmatpush1.bf16.msra.mxu0 %v1771
    %2076 = vmatprep.mubr.bf16.mxu0 %v1145
    %2077 = vmatmul.mubr.bf16.gmra.mrb[0].mxu0 %v1144
    %v2078 = vpop.f32.mrb[0].mxu0
    %v2079 = vadd.f32 0.0, %v2078
    %v2080 = vpop.f32.mrb[0].mxu0
    %v2081 = vpop.f32.mrb[0].mxu0
    %v2082 = vadd.f32 0.0, %v2081
    %v2083 = vpop.f32.mrb[0].mxu0
    %2084 = vdwg.mxu0
    %2085 = vmatprep.subr.bf16.mxu0 0
    %2086 = vmatpush1.bf16.msra.mxu0 %v1772
    %2087 = vmatprep.subr.bf16.mxu0 0
    %2088 = vmatpush1.bf16.msra.mxu0 %v1773
    %2089 = vmatprep.subr.bf16.mxu0 0
    %2090 = vmatpush1.bf16.msra.mxu0 %v1774
    %2091 = vmatprep.subr.bf16.mxu0 0
    %2092 = vmatpush1.bf16.msra.mxu0 %v1775
    %2093 = vmatprep.subr.bf16.mxu0 0
    %2094 = vmatpush1.bf16.msra.mxu0 %v1776
    %2095 = vmatprep.subr.bf16.mxu0 0
    %2096 = vmatpush1.bf16.msra.mxu0 %v1777
    %2097 = vmatprep.subr.bf16.mxu0 0
    %2098 = vmatpush1.bf16.msra.mxu0 %v1778
    %2099 = vmatprep.subr.bf16.mxu0 0
    %2100 = vmatpush1.bf16.msra.mxu0 %v1779
    %2101 = vmatprep.subr.bf16.mxu0 0
    %2102 = vmatpush1.bf16.msra.mxu0 %v1780
    %2103 = vmatprep.subr.bf16.mxu0 0
    %2104 = vmatpush1.bf16.msra.mxu0 %v1781
    %2105 = vmatprep.subr.bf16.mxu0 0
    %2106 = vmatpush1.bf16.msra.mxu0 %v1782
    %2107 = vmatprep.subr.bf16.mxu0 0
    %2108 = vmatpush1.bf16.msra.mxu0 %v1783
    %2109 = vmatprep.subr.bf16.mxu0 0
    %2110 = vmatpush1.bf16.msra.mxu0 %v1784
    %2111 = vmatprep.subr.bf16.mxu0 0
    %2112 = vmatpush1.bf16.msra.mxu0 %v1785
    %2113 = vmatprep.subr.bf16.mxu0 0
    %2114 = vmatpush1.bf16.msra.mxu0 %v1786
    %2115 = vmatprep.subr.bf16.mxu0 0
    %2116 = vmatpush1.bf16.msra.mxu0 %v1787
    %2117 = vmatprep.mubr.bf16.mxu0 %v1147
    %2118 = vmatmul.mubr.bf16.gmra.mrb[0].mxu0 %v1146
    %v2119 = vpop.f32.mrb[0].mxu0
    %v2120 = vadd.f32 %v2079, %v2119
    %v2121 = vpop.f32.mrb[0].mxu0
    %v2122 = vpop.f32.mrb[0].mxu0
    %v2123 = vadd.f32 %v2082, %v2122
    %v2124 = vpop.f32.mrb[0].mxu0
    %2125 = vdwg.mxu0
    %2126 = vmatprep.subr.bf16.mxu0 0
    %2127 = vmatpush1.bf16.msra.mxu0 %v1788
    %2128 = vmatprep.subr.bf16.mxu0 0
    %2129 = vmatpush1.bf16.msra.mxu0 %v1789
    %2130 = vmatprep.subr.bf16.mxu0 0
    %2131 = vmatpush1.bf16.msra.mxu0 %v1790
    %2132 = vmatprep.subr.bf16.mxu0 0
    %2133 = vmatpush1.bf16.msra.mxu0 %v1791
    %2134 = vmatprep.subr.bf16.mxu0 0
    %2135 = vmatpush1.bf16.msra.mxu0 %v1792
    %2136 = vmatprep.subr.bf16.mxu0 0
    %2137 = vmatpush1.bf16.msra.mxu0 %v1793
    %2138 = vmatprep.subr.bf16.mxu0 0
    %2139 = vmatpush1.bf16.msra.mxu0 %v1794
    %2140 = vmatprep.subr.bf16.mxu0 0
    %2141 = vmatpush1.bf16.msra.mxu0 %v1795
    %2142 = vmatprep.subr.bf16.mxu0 0
    %2143 = vmatpush1.bf16.msra.mxu0 %v1796
    %2144 = vmatprep.subr.bf16.mxu0 0
    %2145 = vmatpush1.bf16.msra.mxu0 %v1797
    %2146 = vmatprep.subr.bf16.mxu0 0
    %2147 = vmatpush1.bf16.msra.mxu0 %v1798
    %2148 = vmatprep.subr.bf16.mxu0 0
    %2149 = vmatpush1.bf16.msra.mxu0 %v1799
    %2150 = vmatprep.subr.bf16.mxu0 0
    %2151 = vmatpush1.bf16.msra.mxu0 %v1800
    %2152 = vmatprep.subr.bf16.mxu0 0
    %2153 = vmatpush1.bf16.msra.mxu0 %v1801
    %2154 = vmatprep.subr.bf16.mxu0 0
    %2155 = vmatpush1.bf16.msra.mxu0 %v1802
    %2156 = vmatprep.subr.bf16.mxu0 0
    %2157 = vmatpush1.bf16.msra.mxu0 %v1803
    %2158 = vmatprep.mubr.bf16.mxu0 %v1149
    %2159 = vmatmul.mubr.bf16.gmra.mrb[0].mxu0 %v1148
    %v2160 = vpop.f32.mrb[0].mxu0
    %v2161 = vadd.f32 %v2120, %v2160
    %v2162 = vpop.f32.mrb[0].mxu0
    %v2163 = vpop.f32.mrb[0].mxu0
    %v2164 = vadd.f32 %v2123, %v2163
    %v2165 = vpop.f32.mrb[0].mxu0
    %2166 = vdwg.mxu0
    %2167 = vmatprep.subr.bf16.mxu0 0
    %2168 = vmatpush1.bf16.msra.mxu0 %v1804
    %2169 = vmatprep.subr.bf16.mxu0 0
    %2170 = vmatpush1.bf16.msra.mxu0 %v1805
    %2171 = vmatprep.subr.bf16.mxu0 0
    %2172 = vmatpush1.bf16.msra.mxu0 %v1806
    %2173 = vmatprep.subr.bf16.mxu0 0
    %2174 = vmatpush1.bf16.msra.mxu0 %v1807
    %2175 = vmatprep.subr.bf16.mxu0 0
    %2176 = vmatpush1.bf16.msra.mxu0 %v1808
    %2177 = vmatprep.subr.bf16.mxu0 0
    %2178 = vmatpush1.bf16.msra.mxu0 %v1809
    %2179 = vmatprep.subr.bf16.mxu0 0
    %2180 = vmatpush1.bf16.msra.mxu0 %v1810
    %2181 = vmatprep.subr.bf16.mxu0 0
    %2182 = vmatpush1.bf16.msra.mxu0 %v1811
    %2183 = vmatprep.subr.bf16.mxu0 0
    %2184 = vmatpush1.bf16.msra.mxu0 %v1812
    %2185 = vmatprep.subr.bf16.mxu0 0
    %2186 = vmatpush1.bf16.msra.mxu0 %v1813
    %2187 = vmatprep.subr.bf16.mxu0 0
    %2188 = vmatpush1.bf16.msra.mxu0 %v1814
    %2189 = vmatprep.subr.bf16.mxu0 0
    %2190 = vmatpush1.bf16.msra.mxu0 %v1815
    %2191 = vmatprep.subr.bf16.mxu0 0
    %2192 = vmatpush1.bf16.msra.mxu0 %v1816
    %2193 = vmatprep.subr.bf16.mxu0 0
    %2194 = vmatpush1.bf16.msra.mxu0 %v1817
    %2195 = vmatprep.subr.bf16.mxu0 0
    %2196 = vmatpush1.bf16.msra.mxu0 %v1818
    %2197 = vmatprep.subr.bf16.mxu0 0
    %2198 = vmatpush1.bf16.msra.mxu0 %v1819
    %2199 = vmatprep.mubr.bf16.mxu0 %v1151
    %2200 = vmatmul.mubr.bf16.gmra.mrb[0].mxu0 %v1150
    %v2201 = vpop.f32.mrb[0].mxu0
    %v2202 = vadd.f32 %v2161, %v2201
    %v2203 = vpop.f32.mrb[0].mxu0
    %v2204 = vpop.f32.mrb[0].mxu0
    %v2205 = vadd.f32 %v2164, %v2204
    %v2206 = vpop.f32.mrb[0].mxu0
    %2207 = vdwg.mxu0
    %2208 = vmatprep.subr.bf16.mxu0 0
    %2209 = vmatpush1.bf16.msra.mxu0 %v1820
    %2210 = vmatprep.subr.bf16.mxu0 0
    %2211 = vmatpush1.bf16.msra.mxu0 %v1821
    %2212 = vmatprep.subr.bf16.mxu0 0
    %2213 = vmatpush1.bf16.msra.mxu0 %v1822
    %2214 = vmatprep.subr.bf16.mxu0 0
    %2215 = vmatpush1.bf16.msra.mxu0 %v1823
    %2216 = vmatprep.subr.bf16.mxu0 0
    %2217 = vmatpush1.bf16.msra.mxu0 %v1824
    %2218 = vmatprep.subr.bf16.mxu0 0
    %2219 = vmatpush1.bf16.msra.mxu0 %v1825
    %2220 = vmatprep.subr.bf16.mxu0 0
    %2221 = vmatpush1.bf16.msra.mxu0 %v1826
    %2222 = vmatprep.subr.bf16.mxu0 0
    %2223 = vmatpush1.bf16.msra.mxu0 %v1827
    %2224 = vmatprep.subr.bf16.mxu0 0
    %2225 = vmatpush1.bf16.msra.mxu0 %v1828
    %2226 = vmatprep.subr.bf16.mxu0 0
    %2227 = vmatpush1.bf16.msra.mxu0 %v1829
    %2228 = vmatprep.subr.bf16.mxu0 0
    %2229 = vmatpush1.bf16.msra.mxu0 %v1830
    %2230 = vmatprep.subr.bf16.mxu0 0
    %2231 = vmatpush1.bf16.msra.mxu0 %v1831
    %2232 = vmatprep.subr.bf16.mxu0 0
    %2233 = vmatpush1.bf16.msra.mxu0 %v1832
    %2234 = vmatprep.subr.bf16.mxu0 0
    %2235 = vmatpush1.bf16.msra.mxu0 %v1833
    %2236 = vmatprep.subr.bf16.mxu0 0
    %2237 = vmatpush1.bf16.msra.mxu0 %v1834
    %2238 = vmatprep.subr.bf16.mxu0 0
    %2239 = vmatpush1.bf16.msra.mxu0 %v1835
    %2240 = vmatprep.mubr.bf16.mxu0 %v1153
    %2241 = vmatmul.mubr.bf16.gmra.mrb[0].mxu0 %v1152
    %v2242 = vpop.f32.mrb[0].mxu0
    %v2243 = vadd.f32 %v2202, %v2242
    %v2244 = vpop.f32.mrb[0].mxu0
    %v2245 = vpop.f32.mrb[0].mxu0
    %v2246 = vadd.f32 %v2205, %v2245
    %v2247 = vpop.f32.mrb[0].mxu0
    %2248 = vdwg.mxu0
    %2249 = vmatprep.subr.bf16.mxu0 0
    %2250 = vmatpush1.bf16.msra.mxu0 %v1836
    %2251 = vmatprep.subr.bf16.mxu0 0
    %2252 = vmatpush1.bf16.msra.mxu0 %v1837
    %2253 = vmatprep.subr.bf16.mxu0 0
    %2254 = vmatpush1.bf16.msra.mxu0 %v1838
    %2255 = vmatprep.subr.bf16.mxu0 0
    %2256 = vmatpush1.bf16.msra.mxu0 %v1839
    %2257 = vmatprep.subr.bf16.mxu0 0
    %2258 = vmatpush1.bf16.msra.mxu0 %v1840
    %2259 = vmatprep.subr.bf16.mxu0 0
    %2260 = vmatpush1.bf16.msra.mxu0 %v1841
    %2261 = vmatprep.subr.bf16.mxu0 0
    %2262 = vmatpush1.bf16.msra.mxu0 %v1842
    %2263 = vmatprep.subr.bf16.mxu0 0
    %2264 = vmatpush1.bf16.msra.mxu0 %v1843
    %2265 = vmatprep.subr.bf16.mxu0 0
    %2266 = vmatpush1.bf16.msra.mxu0 %v1844
    %2267 = vmatprep.subr.bf16.mxu0 0
    %2268 = vmatpush1.bf16.msra.mxu0 %v1845
    %2269 = vmatprep.subr.bf16.mxu0 0
    %2270 = vmatpush1.bf16.msra.mxu0 %v1846
    %2271 = vmatprep.subr.bf16.mxu0 0
    %2272 = vmatpush1.bf16.msra.mxu0 %v1847
    %2273 = vmatprep.subr.bf16.mxu0 0
    %2274 = vmatpush1.bf16.msra.mxu0 %v1848
    %2275 = vmatprep.subr.bf16.mxu0 0
    %2276 = vmatpush1.bf16.msra.mxu0 %v1849
    %2277 = vmatprep.subr.bf16.mxu0 0
    %2278 = vmatpush1.bf16.msra.mxu0 %v1850
    %2279 = vmatprep.subr.bf16.mxu0 0
    %2280 = vmatpush1.bf16.msra.mxu0 %v1851
    %2281 = vmatprep.mubr.bf16.mxu0 %v1155
    %2282 = vmatmul.mubr.bf16.gmra.mrb[0].mxu0 %v1154
    %v2283 = vpop.f32.mrb[0].mxu0
    %v2284 = vadd.f32 %v2243, %v2283
    %v2285 = vpop.f32.mrb[0].mxu0
    %v2286 = vpop.f32.mrb[0].mxu0
    %v2287 = vadd.f32 %v2246, %v2286
    %v2288 = vpop.f32.mrb[0].mxu0
    %2289 = vdwg.mxu0
    %2290 = vmatprep.subr.bf16.mxu0 0
    %2291 = vmatpush1.bf16.msra.mxu0 %v1852
    %2292 = vmatprep.subr.bf16.mxu0 0
    %2293 = vmatpush1.bf16.msra.mxu0 %v1853
    %2294 = vmatprep.subr.bf16.mxu0 0
    %2295 = vmatpush1.bf16.msra.mxu0 %v1854
    %2296 = vmatprep.subr.bf16.mxu0 0
    %2297 = vmatpush1.bf16.msra.mxu0 %v1855
    %2298 = vmatprep.subr.bf16.mxu0 0
    %2299 = vmatpush1.bf16.msra.mxu0 %v1856
    %2300 = vmatprep.subr.bf16.mxu0 0
    %2301 = vmatpush1.bf16.msra.mxu0 %v1857
    %2302 = vmatprep.subr.bf16.mxu0 0
    %2303 = vmatpush1.bf16.msra.mxu0 %v1858
    %2304 = vmatprep.subr.bf16.mxu0 0
    %2305 = vmatpush1.bf16.msra.mxu0 %v1859
    %2306 = vmatprep.subr.bf16.mxu0 0
    %2307 = vmatpush1.bf16.msra.mxu0 %v1860
    %2308 = vmatprep.subr.bf16.mxu0 0
    %2309 = vmatpush1.bf16.msra.mxu0 %v1861
    %2310 = vmatprep.subr.bf16.mxu0 0
    %2311 = vmatpush1.bf16.msra.mxu0 %v1862
    %2312 = vmatprep.subr.bf16.mxu0 0
    %2313 = vmatpush1.bf16.msra.mxu0 %v1863
    %2314 = vmatprep.subr.bf16.mxu0 0
    %2315 = vmatpush1.bf16.msra.mxu0 %v1864
    %2316 = vmatprep.subr.bf16.mxu0 0
    %2317 = vmatpush1.bf16.msra.mxu0 %v1865
    %2318 = vmatprep.subr.bf16.mxu0 0
    %2319 = vmatpush1.bf16.msra.mxu0 %v1866
    %2320 = vmatprep.subr.bf16.mxu0 0
    %2321 = vmatpush1.bf16.msra.mxu0 %v1867
    %2322 = vmatprep.mubr.bf16.mxu0 %v1157
    %2323 = vmatmul.mubr.bf16.gmra.mrb[0].mxu0 %v1156
    %v2324 = vpop.f32.mrb[0].mxu0
    %v2325 = vadd.f32 %v2284, %v2324
    %v2326 = vpop.f32.mrb[0].mxu0
    %v2327 = vpop.f32.mrb[0].mxu0
    %v2328 = vadd.f32 %v2287, %v2327
    %v2329 = vpop.f32.mrb[0].mxu0
    %2330 = vdwg.mxu0
    %2331 = vmatprep.subr.bf16.mxu0 0
    %2332 = vmatpush1.bf16.msra.mxu0 %v1868
    %2333 = vmatprep.subr.bf16.mxu0 0
    %2334 = vmatpush1.bf16.msra.mxu0 %v1869
    %2335 = vmatprep.subr.bf16.mxu0 0
    %2336 = vmatpush1.bf16.msra.mxu0 %v1870
    %2337 = vmatprep.subr.bf16.mxu0 0
    %2338 = vmatpush1.bf16.msra.mxu0 %v1871
    %2339 = vmatprep.subr.bf16.mxu0 0
    %2340 = vmatpush1.bf16.msra.mxu0 %v1872
    %2341 = vmatprep.subr.bf16.mxu0 0
    %2342 = vmatpush1.bf16.msra.mxu0 %v1873
    %2343 = vmatprep.subr.bf16.mxu0 0
    %2344 = vmatpush1.bf16.msra.mxu0 %v1874
    %2345 = vmatprep.subr.bf16.mxu0 0
    %2346 = vmatpush1.bf16.msra.mxu0 %v1875
    %2347 = vmatprep.subr.bf16.mxu0 0
    %2348 = vmatpush1.bf16.msra.mxu0 %v1876
    %2349 = vmatprep.subr.bf16.mxu0 0
    %2350 = vmatpush1.bf16.msra.mxu0 %v1877
    %2351 = vmatprep.subr.bf16.mxu0 0
    %2352 = vmatpush1.bf16.msra.mxu0 %v1878
    %2353 = vmatprep.subr.bf16.mxu0 0
    %2354 = vmatpush1.bf16.msra.mxu0 %v1879
    %2355 = vmatprep.subr.bf16.mxu0 0
    %2356 = vmatpush1.bf16.msra.mxu0 %v1880
    %2357 = vmatprep.subr.bf16.mxu0 0
    %2358 = vmatpush1.bf16.msra.mxu0 %v1881
    %2359 = vmatprep.subr.bf16.mxu0 0
    %2360 = vmatpush1.bf16.msra.mxu0 %v1882
    %2361 = vmatprep.subr.bf16.mxu0 0
    %2362 = vmatpush1.bf16.msra.mxu0 %v1883
    %2363 = vmatprep.mubr.bf16.mxu0 %v1159
    %2364 = vmatmul.mubr.bf16.gmra.mrb[0].mxu0 %v1158
    %v2365 = vpop.f32.mrb[0].mxu0
    %v2366 = vadd.f32 %v2325, %v2365
    %v2367 = vpop.f32.mrb[0].mxu0
    %v2368 = vpop.f32.mrb[0].mxu0
    %v2369 = vadd.f32 %v2328, %v2368
    %v2370 = vpop.f32.mrb[0].mxu0
    %2371 = vdwg.mxu0
    %2372 = vmatprep.subr.bf16.mxu0 0
    %2373 = vmatpush1.bf16.msra.mxu0 %v1884
    %2374 = vmatprep.subr.bf16.mxu0 0
    %2375 = vmatpush1.bf16.msra.mxu0 %v1885
    %2376 = vmatprep.subr.bf16.mxu0 0
    %2377 = vmatpush1.bf16.msra.mxu0 %v1886
    %2378 = vmatprep.subr.bf16.mxu0 0
    %2379 = vmatpush1.bf16.msra.mxu0 %v1887
    %2380 = vmatprep.subr.bf16.mxu0 0
    %2381 = vmatpush1.bf16.msra.mxu0 %v1888
    %2382 = vmatprep.subr.bf16.mxu0 0
    %2383 = vmatpush1.bf16.msra.mxu0 %v1889
    %2384 = vmatprep.subr.bf16.mxu0 0
    %2385 = vmatpush1.bf16.msra.mxu0 %v1890
    %2386 = vmatprep.subr.bf16.mxu0 0
    %2387 = vmatpush1.bf16.msra.mxu0 %v1891
    %2388 = vmatprep.subr.bf16.mxu0 0
    %2389 = vmatpush1.bf16.msra.mxu0 %v1892
    %2390 = vmatprep.subr.bf16.mxu0 0
    %2391 = vmatpush1.bf16.msra.mxu0 %v1893
    %2392 = vmatprep.subr.bf16.mxu0 0
    %2393 = vmatpush1.bf16.msra.mxu0 %v1894
    %2394 = vmatprep.subr.bf16.mxu0 0
    %2395 = vmatpush1.bf16.msra.mxu0 %v1895
    %2396 = vmatprep.subr.bf16.mxu0 0
    %2397 = vmatpush1.bf16.msra.mxu0 %v1896
    %2398 = vmatprep.subr.bf16.mxu0 0
    %2399 = vmatpush1.bf16.msra.mxu0 %v1897
    %2400 = vmatprep.subr.bf16.mxu0 0
    %2401 = vmatpush1.bf16.msra.mxu0 %v1898
    %2402 = vmatprep.subr.bf16.mxu0 0
    %2403 = vmatpush1.bf16.msra.mxu0 %v1899
    %2404 = vmatprep.mubr.bf16.mxu0 %v1161
    %2405 = vmatmul.mubr.bf16.gmra.mrb[0].mxu0 %v1160
    %v2406 = vpop.f32.mrb[0].mxu0
    %v2407 = vadd.f32 %v2366, %v2406
    %v2408 = vpop.f32.mrb[0].mxu0
    %v2409 = vpop.f32.mrb[0].mxu0
    %v2410 = vadd.f32 %v2369, %v2409
    %v2411 = vpop.f32.mrb[0].mxu0
    %2412 = vdwg.mxu0
    %v2413 = vrot.slane %v2407, 4
    %v2414 = vmax.f32 %v2407, %v2413
    %v2415 = vrot.slane %v2414, 2
    %v2416 = vmax.f32 %v2414, %v2415
    %v2417 = vrot.slane %v2416, 1
    %v2418 = vmax.f32 %v2416, %v2417
    %v2419 = vrot.slane %v2410, 4
    %v2420 = vmax.f32 %v2410, %v2419
    %v2421 = vrot.slane %v2420, 2
    %v2422 = vmax.f32 %v2420, %v2421
    %v2423 = vrot.slane %v2422, 1
    %v2424 = vmax.f32 %v2422, %v2423
    %v2425 = vld [vmem:[%s2] sm:$0xff]
    %v2426 = vld [vmem:[%s2 + $0x8] sm:$0xff]
    %v2427 = vld [vmem:[%s2 + $0x10] sm:$0xff]
    %v2428 = vld [vmem:[%s2 + $0x18] sm:$0xff]
    %v2429 = vld [vmem:[%s2 + $0x20] sm:$0xff]
    %v2430 = vld [vmem:[%s2 + $0x28] sm:$0xff]
    %v2431 = vld [vmem:[%s2 + $0x30] sm:$0xff]
    %v2432 = vld [vmem:[%s2 + $0x38] sm:$0xff]
    %v2433 = vld [vmem:[%s2 + $0x40] sm:$0xff]
    %v2434 = vld [vmem:[%s2 + $0x48] sm:$0xff]
    %v2435 = vld [vmem:[%s2 + $0x50] sm:$0xff]
    %v2436 = vld [vmem:[%s2 + $0x58] sm:$0xff]
    %v2437 = vld [vmem:[%s2 + $0x60] sm:$0xff]
    %v2438 = vld [vmem:[%s2 + $0x68] sm:$0xff]
    %v2439 = vld [vmem:[%s2 + $0x70] sm:$0xff]
    %v2440 = vld [vmem:[%s2 + $0x78] sm:$0xff]
    %v2441 = vld [vmem:[%s2 + $0x80] sm:$0xff]
    %v2442 = vld [vmem:[%s2 + $0x88] sm:$0xff]
    %v2443 = vld [vmem:[%s2 + $0x90] sm:$0xff]
    %v2444 = vld [vmem:[%s2 + $0x98] sm:$0xff]
    %v2445 = vld [vmem:[%s2 + $0xa0] sm:$0xff]
    %v2446 = vld [vmem:[%s2 + $0xa8] sm:$0xff]
    %v2447 = vld [vmem:[%s2 + $0xb0] sm:$0xff]
    %v2448 = vld [vmem:[%s2 + $0xb8] sm:$0xff]
    %v2449 = vld [vmem:[%s2 + $0xc0] sm:$0xff]
    %v2450 = vld [vmem:[%s2 + $0xc8] sm:$0xff]
    %v2451 = vld [vmem:[%s5] sm:$0xf]
    %v2452 = vld [vmem:[%s5 + $0x4] sm:$0xf]
    %v2453 = vld [vmem:[%s5 + $0x8] sm:$0xf]
    %v2454 = vld [vmem:[%s5 + $0xc] sm:$0xf]
    %v2455 = vld [vmem:[%s5 + $0x10] sm:$0xf]
    %v2456 = vld [vmem:[%s5 + $0x14] sm:$0xf]
    %v2457 = vld [vmem:[%s5 + $0x18] sm:$0xf]
    %v2458 = vld [vmem:[%s5 + $0x1c] sm:$0xf]
    %v2459 = vld [vmem:[%s5 + $0x20] sm:$0xf]
    %v2460 = vld [vmem:[%s5 + $0x24] sm:$0xf]
    %v2461 = vld [vmem:[%s5 + $0x28] sm:$0xf]
    %v2462 = vld [vmem:[%s5 + $0x2c] sm:$0xf]
    %v2463 = vld [vmem:[%s5 + $0x30] sm:$0xf]
    %v2464 = vld [vmem:[%s5 + $0x34] sm:$0xf]
    %v2465 = vld [vmem:[%s5 + $0x38] sm:$0xf]
    %v2466 = vld [vmem:[%s5 + $0x3c] sm:$0xf]
    %v2467 = vld [vmem:[%s5 + $0x40] sm:$0xf]
    %v2468 = vld [vmem:[%s5 + $0x44] sm:$0xf]
    %v2469 = vld [vmem:[%s5 + $0x48] sm:$0xf]
    %v2470 = vld [vmem:[%s5 + $0x4c] sm:$0xf]
    %v2471 = vld [vmem:[%s5 + $0x50] sm:$0xf]
    %v2472 = vld [vmem:[%s5 + $0x54] sm:$0xf]
    %v2473 = vld [vmem:[%s5 + $0x58] sm:$0xf]
    %v2474 = vld [vmem:[%s5 + $0x5c] sm:$0xf]
    %v2475 = vld [vmem:[%s5 + $0x60] sm:$0xf]
    %v2476 = vld [vmem:[%s5 + $0x64] sm:$0xf]
    %v2477 = vld [vmem:[%s5 + $0x68] sm:$0xf]
    %v2478 = vld [vmem:[%s5 + $0x6c] sm:$0xf]
    %v2479 = vld [vmem:[%s5 + $0x70] sm:$0xf]
    %v2480 = vld [vmem:[%s5 + $0x74] sm:$0xf]
    %v2481 = vld [vmem:[%s5 + $0x78] sm:$0xf]
    %v2482 = vld [vmem:[%s5 + $0x7c] sm:$0xf]
    %v2483 = vld [vmem:[%s5 + $0x80] sm:$0xf]
    %v2484 = vld [vmem:[%s5 + $0x84] sm:$0xf]
    %v2485 = vld [vmem:[%s5 + $0x88] sm:$0xf]
    %v2486 = vld [vmem:[%s5 + $0x8c] sm:$0xf]
    %v2487 = vld [vmem:[%s5 + $0x90] sm:$0xf]
    %v2488 = vld [vmem:[%s5 + $0x94] sm:$0xf]
    %v2489 = vld [vmem:[%s5 + $0x98] sm:$0xf]
    %v2490 = vld [vmem:[%s5 + $0x9c] sm:$0xf]
    %v2491 = vld [vmem:[%s5 + $0xa0] sm:$0xf]
    %v2492 = vld [vmem:[%s5 + $0xa4] sm:$0xf]
    %v2493 = vld [vmem:[%s5 + $0xa8] sm:$0xf]
    %v2494 = vld [vmem:[%s5 + $0xac] sm:$0xf]
    %v2495 = vld [vmem:[%s5 + $0xb0] sm:$0xf]
    %v2496 = vld [vmem:[%s5 + $0xb4] sm:$0xf]
    %v2497 = vld [vmem:[%s5 + $0xb8] sm:$0xf]
    %v2498 = vld [vmem:[%s5 + $0xbc] sm:$0xf]
    %v2499 = vld [vmem:[%s5 + $0xc0] sm:$0xf]
    %v2500 = vld [vmem:[%s5 + $0xc4] sm:$0xf]
    %v2501 = vld [vmem:[%s5 + $0xc8] sm:$0xf]
    %v2502 = vld [vmem:[%s5 + $0xcc] sm:$0xf]
    %v2503 = vld [vmem:[%s5 + $0xd0] sm:$0xf]
    %v2504 = vld [vmem:[%s5 + $0xd4] sm:$0xf]
    %v2505 = vld [vmem:[%s5 + $0xd8] sm:$0xf]
    %v2506 = vld [vmem:[%s5 + $0xdc] sm:$0xf]
    %v2507 = vld [vmem:[%s5 + $0xe0] sm:$0xf]
    %v2508 = vld [vmem:[%s5 + $0xe4] sm:$0xf]
    %v2509 = vld [vmem:[%s5 + $0xe8] sm:$0xf]
    %v2510 = vld [vmem:[%s5 + $0xec] sm:$0xf]
    %v2511 = vld [vmem:[%s5 + $0xf0] sm:$0xf]
    %v2512 = vld [vmem:[%s5 + $0xf4] sm:$0xf]
    %v2513 = vld [vmem:[%s5 + $0xf8] sm:$0xf]
    %v2514 = vld [vmem:[%s5 + $0xfc] sm:$0xf]
    %v2515 = vld [vmem:[%s5 + $0x100] sm:$0xf]
    %v2516 = vld [vmem:[%s5 + $0x104] sm:$0xf]
    %v2517 = vld [vmem:[%s5 + $0x108] sm:$0xf]
    %v2518 = vld [vmem:[%s5 + $0x10c] sm:$0xf]
    %v2519 = vld [vmem:[%s5 + $0x110] sm:$0xf]
    %v2520 = vld [vmem:[%s5 + $0x114] sm:$0xf]
    %v2521 = vld [vmem:[%s5 + $0x118] sm:$0xf]
    %v2522 = vld [vmem:[%s5 + $0x11c] sm:$0xf]
    %v2523 = vld [vmem:[%s5 + $0x120] sm:$0xf]
    %v2524 = vld [vmem:[%s5 + $0x124] sm:$0xf]
    %v2525 = vld [vmem:[%s5 + $0x128] sm:$0xf]
    %v2526 = vld [vmem:[%s5 + $0x12c] sm:$0xf]
    %v2527 = vld [vmem:[%s5 + $0x130] sm:$0xf]
    %v2528 = vld [vmem:[%s5 + $0x134] sm:$0xf]
    %v2529 = vld [vmem:[%s5 + $0x138] sm:$0xf]
    %v2530 = vld [vmem:[%s5 + $0x13c] sm:$0xf]
    %v2531 = vld [vmem:[%s5 + $0x140] sm:$0xf]
    %v2532 = vld [vmem:[%s5 + $0x144] sm:$0xf]
    %v2533 = vld [vmem:[%s5 + $0x148] sm:$0xf]
    %v2534 = vld [vmem:[%s5 + $0x14c] sm:$0xf]
    %v2535 = vld [vmem:[%s5 + $0x150] sm:$0xf]
    %v2536 = vld [vmem:[%s5 + $0x154] sm:$0xf]
    %v2537 = vld [vmem:[%s5 + $0x158] sm:$0xf]
    %v2538 = vld [vmem:[%s5 + $0x15c] sm:$0xf]
    %v2539 = vld [vmem:[%s5 + $0x160] sm:$0xf]
    %v2540 = vld [vmem:[%s5 + $0x164] sm:$0xf]
    %v2541 = vld [vmem:[%s5 + $0x168] sm:$0xf]
    %v2542 = vld [vmem:[%s5 + $0x16c] sm:$0xf]
    %v2543 = vld [vmem:[%s5 + $0x170] sm:$0xf]
    %v2544 = vld [vmem:[%s5 + $0x174] sm:$0xf]
    %v2545 = vld [vmem:[%s5 + $0x178] sm:$0xf]
    %v2546 = vld [vmem:[%s5 + $0x17c] sm:$0xf]
    %v2547 = vld [vmem:[%s5 + $0x180] sm:$0xf]
    %v2548 = vld [vmem:[%s5 + $0x184] sm:$0xf]
    %v2549 = vld [vmem:[%s5 + $0x188] sm:$0xf]
    %v2550 = vld [vmem:[%s5 + $0x18c] sm:$0xf]
    %v2551 = vld [vmem:[%s5 + $0x190] sm:$0xf]
    %v2552 = vld [vmem:[%s5 + $0x194] sm:$0xf]
    %v2553 = vld [vmem:[%s5 + $0x198] sm:$0xf]
    %v2554 = vld [vmem:[%s5 + $0x19c] sm:$0xf]
    %v2555 = vld [vmem:[%s5 + $0x1a0] sm:$0xf]
    %v2556 = vld [vmem:[%s5 + $0x1a4] sm:$0xf]
    %v2557 = vld [vmem:[%s5 + $0x1a8] sm:$0xf]
    %v2558 = vld [vmem:[%s5 + $0x1ac] sm:$0xf]
    %v2559 = vld [vmem:[%s5 + $0x1b0] sm:$0xf]
    %v2560 = vld [vmem:[%s5 + $0x1b4] sm:$0xf]
    %v2561 = vld [vmem:[%s5 + $0x1b8] sm:$0xf]
    %v2562 = vld [vmem:[%s5 + $0x1bc] sm:$0xf]
    %v2563 = vld [vmem:[%s5 + $0x1c0] sm:$0xf]
    %v2564 = vld [vmem:[%s5 + $0x1c4] sm:$0xf]
    %v2565 = vld [vmem:[%s5 + $0x1c8] sm:$0xf]
    %v2566 = vld [vmem:[%s5 + $0x1cc] sm:$0xf]
    %v2567 = vld [vmem:[%s5 + $0x1d0] sm:$0xf]
    %v2568 = vld [vmem:[%s5 + $0x1d4] sm:$0xf]
    %v2569 = vld [vmem:[%s5 + $0x1d8] sm:$0xf]
    %v2570 = vld [vmem:[%s5 + $0x1dc] sm:$0xf]
    %v2571 = vld [vmem:[%s5 + $0x1e0] sm:$0xf]
    %v2572 = vld [vmem:[%s5 + $0x1e4] sm:$0xf]
    %v2573 = vld [vmem:[%s5 + $0x1e8] sm:$0xf]
    %v2574 = vld [vmem:[%s5 + $0x1ec] sm:$0xf]
    %v2575 = vld [vmem:[%s5 + $0x1f0] sm:$0xf]
    %v2576 = vld [vmem:[%s5 + $0x1f4] sm:$0xf]
    %v2577 = vld [vmem:[%s5 + $0x1f8] sm:$0xf]
    %v2578 = vld [vmem:[%s5 + $0x1fc] sm:$0xf]
    %v2579 = vld [vmem:[%s5 + $0x200] sm:$0xf]
    %v2580 = vld [vmem:[%s5 + $0x204] sm:$0xf]
    %v2581 = vld [vmem:[%s5 + $0x208] sm:$0xf]
    %v2582 = vld [vmem:[%s5 + $0x20c] sm:$0xf]
    %v2583 = vld [vmem:[%s5 + $0x210] sm:$0xf]
    %v2584 = vld [vmem:[%s5 + $0x214] sm:$0xf]
    %v2585 = vld [vmem:[%s5 + $0x218] sm:$0xf]
    %v2586 = vld [vmem:[%s5 + $0x21c] sm:$0xf]
    %v2587 = vld [vmem:[%s5 + $0x220] sm:$0xf]
    %v2588 = vld [vmem:[%s5 + $0x224] sm:$0xf]
    %v2589 = vld [vmem:[%s5 + $0x228] sm:$0xf]
    %v2590 = vld [vmem:[%s5 + $0x22c] sm:$0xf]
    %v2591 = vld [vmem:[%s5 + $0x230] sm:$0xf]
    %v2592 = vld [vmem:[%s5 + $0x234] sm:$0xf]
    %v2593 = vld [vmem:[%s5 + $0x238] sm:$0xf]
    %v2594 = vld [vmem:[%s5 + $0x23c] sm:$0xf]
    %v2595 = vld [vmem:[%s5 + $0x240] sm:$0xf]
    %v2596 = vld [vmem:[%s5 + $0x244] sm:$0xf]
    %v2597 = vld [vmem:[%s5 + $0x248] sm:$0xf]
    %v2598 = vld [vmem:[%s5 + $0x24c] sm:$0xf]
    %v2599 = vld [vmem:[%s5 + $0x250] sm:$0xf]
    %v2600 = vld [vmem:[%s5 + $0x254] sm:$0xf]
    %v2601 = vld [vmem:[%s5 + $0x258] sm:$0xf]
    %v2602 = vld [vmem:[%s5 + $0x25c] sm:$0xf]
    %v2603 = vld [vmem:[%s5 + $0x260] sm:$0xf]
    %v2604 = vld [vmem:[%s5 + $0x264] sm:$0xf]
    %v2605 = vld [vmem:[%s5 + $0x268] sm:$0xf]
    %v2606 = vld [vmem:[%s5 + $0x26c] sm:$0xf]
    %v2607 = vld [vmem:[%s5 + $0x270] sm:$0xf]
    %v2608 = vld [vmem:[%s5 + $0x274] sm:$0xf]
    %v2609 = vld [vmem:[%s5 + $0x278] sm:$0xf]
    %v2610 = vld [vmem:[%s5 + $0x27c] sm:$0xf]
    %v2611 = vld [vmem:[%s5 + $0x280] sm:$0xf]
    %v2612 = vld [vmem:[%s5 + $0x284] sm:$0xf]
    %v2613 = vld [vmem:[%s5 + $0x288] sm:$0xf]
    %v2614 = vld [vmem:[%s5 + $0x28c] sm:$0xf]
    %v2615 = vld [vmem:[%s5 + $0x290] sm:$0xf]
    %v2616 = vld [vmem:[%s5 + $0x294] sm:$0xf]
    %v2617 = vld [vmem:[%s5 + $0x298] sm:$0xf]
    %v2618 = vld [vmem:[%s5 + $0x29c] sm:$0xf]
    %v2619 = vld [vmem:[%s5 + $0x2a0] sm:$0xf]
    %v2620 = vld [vmem:[%s5 + $0x2a4] sm:$0xf]
    %v2621 = vld [vmem:[%s5 + $0x2a8] sm:$0xf]
    %v2622 = vld [vmem:[%s5 + $0x2ac] sm:$0xf]
    %v2623 = vld [vmem:[%s5 + $0x2b0] sm:$0xf]
    %v2624 = vld [vmem:[%s5 + $0x2b4] sm:$0xf]
    %v2625 = vld [vmem:[%s5 + $0x2b8] sm:$0xf]
    %v2626 = vld [vmem:[%s5 + $0x2bc] sm:$0xf]
    %v2627 = vld [vmem:[%s5 + $0x2c0] sm:$0xf]
    %v2628 = vld [vmem:[%s5 + $0x2c4] sm:$0xf]
    %v2629 = vld [vmem:[%s5 + $0x2c8] sm:$0xf]
    %v2630 = vld [vmem:[%s5 + $0x2cc] sm:$0xf]
    %v2631 = vld [vmem:[%s5 + $0x2d0] sm:$0xf]
    %v2632 = vld [vmem:[%s5 + $0x2d4] sm:$0xf]
    %v2633 = vld [vmem:[%s5 + $0x2d8] sm:$0xf]
    %v2634 = vld [vmem:[%s5 + $0x2dc] sm:$0xf]
    %v2635 = vld [vmem:[%s5 + $0x2e0] sm:$0xf]
    %v2636 = vld [vmem:[%s5 + $0x2e4] sm:$0xf]
    %v2637 = vld [vmem:[%s5 + $0x2e8] sm:$0xf]
    %v2638 = vld [vmem:[%s5 + $0x2ec] sm:$0xf]
    %v2639 = vld [vmem:[%s5 + $0x2f0] sm:$0xf]
    %v2640 = vld [vmem:[%s5 + $0x2f4] sm:$0xf]
    %v2641 = vld [vmem:[%s5 + $0x2f8] sm:$0xf]
    %v2642 = vld [vmem:[%s5 + $0x2fc] sm:$0xf]
    %v2643 = vld [vmem:[%s5 + $0x300] sm:$0xf]
    %v2644 = vld [vmem:[%s5 + $0x304] sm:$0xf]
    %v2645 = vld [vmem:[%s5 + $0x308] sm:$0xf]
    %v2646 = vld [vmem:[%s5 + $0x30c] sm:$0xf]
    %v2647 = vld [vmem:[%s5 + $0x310] sm:$0xf]
    %v2648 = vld [vmem:[%s5 + $0x314] sm:$0xf]
    %v2649 = vld [vmem:[%s5 + $0x318] sm:$0xf]
    %v2650 = vld [vmem:[%s5 + $0x31c] sm:$0xf]
    %v2651 = vld [vmem:[%s5 + $0x320] sm:$0xf]
    %v2652 = vld [vmem:[%s5 + $0x324] sm:$0xf]
    %v2653 = vld [vmem:[%s5 + $0x328] sm:$0xf]
    %v2654 = vld [vmem:[%s5 + $0x32c] sm:$0xf]
    %v2655 = vld [vmem:[%s5 + $0x330] sm:$0xf]
    %v2656 = vld [vmem:[%s5 + $0x334] sm:$0xf]
    %v2657 = vld [vmem:[%s5 + $0x338] sm:$0xf]
    %v2658 = vld [vmem:[%s5 + $0x33c] sm:$0xf]
    %v2659 = vld [vmem:[%s5 + $0x340] sm:$0xf]
    %v2660 = vld [vmem:[%s5 + $0x344] sm:$0xf]
    %v2661 = vld [vmem:[%s5 + $0x348] sm:$0xf]
    %v2662 = vld [vmem:[%s5 + $0x34c] sm:$0xf]
    %v2663 = vld [vmem:[%s5 + $0x350] sm:$0xf]
    %v2664 = vld [vmem:[%s5 + $0x354] sm:$0xf]
    %v2665 = vld [vmem:[%s5 + $0x358] sm:$0xf]
    %v2666 = vld [vmem:[%s5 + $0x35c] sm:$0xf]
    %v2667 = vld [vmem:[%s5 + $0x360] sm:$0xf]
    %v2668 = vld [vmem:[%s5 + $0x364] sm:$0xf]
    %v2669 = vld [vmem:[%s5 + $0x368] sm:$0xf]
    %v2670 = vld [vmem:[%s5 + $0x36c] sm:$0xf]
    %v2671 = vld [vmem:[%s5 + $0x370] sm:$0xf]
    %v2672 = vld [vmem:[%s5 + $0x374] sm:$0xf]
    %v2673 = vld [vmem:[%s5 + $0x378] sm:$0xf]
    %v2674 = vld [vmem:[%s5 + $0x37c] sm:$0xf]
    %v2675 = vld [vmem:[%s5 + $0x380] sm:$0xf]
    %v2676 = vld [vmem:[%s5 + $0x384] sm:$0xf]
    %v2677 = vld [vmem:[%s5 + $0x388] sm:$0xf]
    %v2678 = vld [vmem:[%s5 + $0x38c] sm:$0xf]
    %v2679 = vld [vmem:[%s5 + $0x390] sm:$0xf]
    %v2680 = vld [vmem:[%s5 + $0x394] sm:$0xf]
    %v2681 = vld [vmem:[%s5 + $0x398] sm:$0xf]
    %v2682 = vld [vmem:[%s5 + $0x39c] sm:$0xf]
    %v2683 = vld [vmem:[%s5 + $0x3a0] sm:$0xf]
    %v2684 = vld [vmem:[%s5 + $0x3a4] sm:$0xf]
    %v2685 = vld [vmem:[%s5 + $0x3a8] sm:$0xf]
    %v2686 = vld [vmem:[%s5 + $0x3ac] sm:$0xf]
    %v2687 = vld [vmem:[%s5 + $0x3b0] sm:$0xf]
    %v2688 = vld [vmem:[%s5 + $0x3b4] sm:$0xf]
    %v2689 = vld [vmem:[%s5 + $0x3b8] sm:$0xf]
    %v2690 = vld [vmem:[%s5 + $0x3bc] sm:$0xf]
    %v2691 = vld [vmem:[%s5 + $0x3c0] sm:$0xf]
    %v2692 = vld [vmem:[%s5 + $0x3c4] sm:$0xf]
    %v2693 = vld [vmem:[%s5 + $0x3c8] sm:$0xf]
    %v2694 = vld [vmem:[%s5 + $0x3cc] sm:$0xf]
    %v2695 = vld [vmem:[%s5 + $0x3d0] sm:$0xf]
    %v2696 = vld [vmem:[%s5 + $0x3d4] sm:$0xf]
    %v2697 = vld [vmem:[%s5 + $0x3d8] sm:$0xf]
    %v2698 = vld [vmem:[%s5 + $0x3dc] sm:$0xf]
    %v2699 = vld [vmem:[%s5 + $0x3e0] sm:$0xf]
    %v2700 = vld [vmem:[%s5 + $0x3e4] sm:$0xf]
    %v2701 = vld [vmem:[%s5 + $0x3e8] sm:$0xf]
    %v2702 = vld [vmem:[%s5 + $0x3ec] sm:$0xf]
    %v2703 = vld [vmem:[%s5 + $0x3f0] sm:$0xf]
    %v2704 = vld [vmem:[%s5 + $0x3f4] sm:$0xf]
    %v2705 = vld [vmem:[%s5 + $0x3f8] sm:$0xf]
    %v2706 = vld [vmem:[%s5 + $0x3fc] sm:$0xf]
    %v2707 = vld [vmem:[%s5 + $0x400] sm:$0xf]
    %v2708 = vld [vmem:[%s5 + $0x404] sm:$0xf]
    %v2709 = vld [vmem:[%s5 + $0x408] sm:$0xf]
    %v2710 = vld [vmem:[%s5 + $0x40c] sm:$0xf]
    %v2711 = vld [vmem:[%s5 + $0x410] sm:$0xf]
    %v2712 = vld [vmem:[%s5 + $0x414] sm:$0xf]
    %v2713 = vld [vmem:[%s5 + $0x418] sm:$0xf]
    %v2714 = vld [vmem:[%s5 + $0x41c] sm:$0xf]
    %v2715 = vld [vmem:[%s5 + $0x420] sm:$0xf]
    %v2716 = vld [vmem:[%s5 + $0x424] sm:$0xf]
    %v2717 = vld [vmem:[%s5 + $0x428] sm:$0xf]
    %v2718 = vld [vmem:[%s5 + $0x42c] sm:$0xf]
    %v2719 = vld [vmem:[%s5 + $0x430] sm:$0xf]
    %v2720 = vld [vmem:[%s5 + $0x434] sm:$0xf]
    %v2721 = vld [vmem:[%s5 + $0x438] sm:$0xf]
    %v2722 = vld [vmem:[%s5 + $0x43c] sm:$0xf]
    %v2723 = vld [vmem:[%s5 + $0x440] sm:$0xf]
    %v2724 = vld [vmem:[%s5 + $0x444] sm:$0xf]
    %v2725 = vld [vmem:[%s5 + $0x448] sm:$0xf]
    %v2726 = vld [vmem:[%s5 + $0x44c] sm:$0xf]
    %v2727 = vld [vmem:[%s5 + $0x450] sm:$0xf]
    %v2728 = vld [vmem:[%s5 + $0x454] sm:$0xf]
    %v2729 = vld [vmem:[%s5 + $0x458] sm:$0xf]
    %v2730 = vld [vmem:[%s5 + $0x45c] sm:$0xf]
    %v2731 = vld [vmem:[%s5 + $0x460] sm:$0xf]
    %v2732 = vld [vmem:[%s5 + $0x464] sm:$0xf]
    %v2733 = vld [vmem:[%s5 + $0x468] sm:$0xf]
    %v2734 = vld [vmem:[%s5 + $0x46c] sm:$0xf]
    %v2735 = vld [vmem:[%s5 + $0x470] sm:$0xf]
    %v2736 = vld [vmem:[%s5 + $0x474] sm:$0xf]
    %v2737 = vld [vmem:[%s5 + $0x478] sm:$0xf]
    %v2738 = vld [vmem:[%s5 + $0x47c] sm:$0xf]
    %v2739 = vld [vmem:[%s5 + $0x480] sm:$0xf]
    %v2740 = vld [vmem:[%s5 + $0x484] sm:$0xf]
    %v2741 = vld [vmem:[%s5 + $0x488] sm:$0xf]
    %v2742 = vld [vmem:[%s5 + $0x48c] sm:$0xf]
    %v2743 = vld [vmem:[%s5 + $0x490] sm:$0xf]
    %v2744 = vld [vmem:[%s5 + $0x494] sm:$0xf]
    %v2745 = vld [vmem:[%s5 + $0x498] sm:$0xf]
    %v2746 = vld [vmem:[%s5 + $0x49c] sm:$0xf]
    %v2747 = vld [vmem:[%s5 + $0x4a0] sm:$0xf]
    %v2748 = vld [vmem:[%s5 + $0x4a4] sm:$0xf]
    %v2749 = vld [vmem:[%s5 + $0x4a8] sm:$0xf]
    %v2750 = vld [vmem:[%s5 + $0x4ac] sm:$0xf]
    %v2751 = vld [vmem:[%s5 + $0x4b0] sm:$0xf]
    %v2752 = vld [vmem:[%s5 + $0x4b4] sm:$0xf]
    %v2753 = vld [vmem:[%s5 + $0x4b8] sm:$0xf]
    %v2754 = vld [vmem:[%s5 + $0x4bc] sm:$0xf]
    %v2755 = vld [vmem:[%s5 + $0x4c0] sm:$0xf]
    %v2756 = vld [vmem:[%s5 + $0x4c4] sm:$0xf]
    %v2757 = vld [vmem:[%s5 + $0x4c8] sm:$0xf]
    %v2758 = vld [vmem:[%s5 + $0x4cc] sm:$0xf]
    %v2759 = vld [vmem:[%s5 + $0x4d0] sm:$0xf]
    %v2760 = vld [vmem:[%s5 + $0x4d4] sm:$0xf]
    %v2761 = vld [vmem:[%s5 + $0x4d8] sm:$0xf]
    %v2762 = vld [vmem:[%s5 + $0x4dc] sm:$0xf]
    %v2763 = vld [vmem:[%s5 + $0x4e0] sm:$0xf]
    %v2764 = vld [vmem:[%s5 + $0x4e4] sm:$0xf]
    %v2765 = vld [vmem:[%s5 + $0x4e8] sm:$0xf]
    %v2766 = vld [vmem:[%s5 + $0x4ec] sm:$0xf]
    %v2767 = vld [vmem:[%s5 + $0x4f0] sm:$0xf]
    %v2768 = vld [vmem:[%s5 + $0x4f4] sm:$0xf]
    %v2769 = vld [vmem:[%s5 + $0x4f8] sm:$0xf]
    %v2770 = vld [vmem:[%s5 + $0x4fc] sm:$0xf]
    %v2771 = vld [vmem:[%s5 + $0x500] sm:$0xf]
    %v2772 = vld [vmem:[%s5 + $0x504] sm:$0xf]
    %v2773 = vld [vmem:[%s5 + $0x508] sm:$0xf]
    %v2774 = vld [vmem:[%s5 + $0x50c] sm:$0xf]
    %v2775 = vld [vmem:[%s5 + $0x510] sm:$0xf]
    %v2776 = vld [vmem:[%s5 + $0x514] sm:$0xf]
    %v2777 = vld [vmem:[%s5 + $0x518] sm:$0xf]
    %v2778 = vld [vmem:[%s5 + $0x51c] sm:$0xf]
    %v2779 = vld [vmem:[%s5 + $0x520] sm:$0xf]
    %v2780 = vld [vmem:[%s5 + $0x524] sm:$0xf]
    %v2781 = vld [vmem:[%s5 + $0x528] sm:$0xf]
    %v2782 = vld [vmem:[%s5 + $0x52c] sm:$0xf]
    %v2783 = vld [vmem:[%s5 + $0x530] sm:$0xf]
    %v2784 = vld [vmem:[%s5 + $0x534] sm:$0xf]
    %v2785 = vld [vmem:[%s5 + $0x538] sm:$0xf]
    %v2786 = vld [vmem:[%s5 + $0x53c] sm:$0xf]
    %v2787 = vld [vmem:[%s5 + $0x540] sm:$0xf]
    %v2788 = vld [vmem:[%s5 + $0x544] sm:$0xf]
    %v2789 = vld [vmem:[%s5 + $0x548] sm:$0xf]
    %v2790 = vld [vmem:[%s5 + $0x54c] sm:$0xf]
    %v2791 = vld [vmem:[%s5 + $0x550] sm:$0xf]
    %v2792 = vld [vmem:[%s5 + $0x554] sm:$0xf]
    %v2793 = vld [vmem:[%s5 + $0x558] sm:$0xf]
    %v2794 = vld [vmem:[%s5 + $0x55c] sm:$0xf]
    %v2795 = vld [vmem:[%s5 + $0x560] sm:$0xf]
    %v2796 = vld [vmem:[%s5 + $0x564] sm:$0xf]
    %v2797 = vld [vmem:[%s5 + $0x568] sm:$0xf]
    %v2798 = vld [vmem:[%s5 + $0x56c] sm:$0xf]
    %v2799 = vld [vmem:[%s5 + $0x570] sm:$0xf]
    %v2800 = vld [vmem:[%s5 + $0x574] sm:$0xf]
    %v2801 = vld [vmem:[%s5 + $0x578] sm:$0xf]
    %v2802 = vld [vmem:[%s5 + $0x57c] sm:$0xf]
    %v2803 = vld [vmem:[%s5 + $0x580] sm:$0xf]
    %v2804 = vld [vmem:[%s5 + $0x584] sm:$0xf]
    %v2805 = vld [vmem:[%s5 + $0x588] sm:$0xf]
    %v2806 = vld [vmem:[%s5 + $0x58c] sm:$0xf]
    %v2807 = vld [vmem:[%s5 + $0x590] sm:$0xf]
    %v2808 = vld [vmem:[%s5 + $0x594] sm:$0xf]
    %v2809 = vld [vmem:[%s5 + $0x598] sm:$0xf]
    %v2810 = vld [vmem:[%s5 + $0x59c] sm:$0xf]
    %v2811 = vld [vmem:[%s5 + $0x5a0] sm:$0xf]
    %v2812 = vld [vmem:[%s5 + $0x5a4] sm:$0xf]
    %v2813 = vld [vmem:[%s5 + $0x5a8] sm:$0xf]
    %v2814 = vld [vmem:[%s5 + $0x5ac] sm:$0xf]
    %v2815 = vld [vmem:[%s5 + $0x5b0] sm:$0xf]
    %v2816 = vld [vmem:[%s5 + $0x5b4] sm:$0xf]
    %v2817 = vld [vmem:[%s5 + $0x5b8] sm:$0xf]
    %v2818 = vld [vmem:[%s5 + $0x5bc] sm:$0xf]
    %v2819 = vld [vmem:[%s5 + $0x5c0] sm:$0xf]
    %v2820 = vld [vmem:[%s5 + $0x5c4] sm:$0xf]
    %v2821 = vld [vmem:[%s5 + $0x5c8] sm:$0xf]
    %v2822 = vld [vmem:[%s5 + $0x5cc] sm:$0xf]
    %v2823 = vld [vmem:[%s5 + $0x5d0] sm:$0xf]
    %v2824 = vld [vmem:[%s5 + $0x5d4] sm:$0xf]
    %v2825 = vld [vmem:[%s5 + $0x5d8] sm:$0xf]
    %v2826 = vld [vmem:[%s5 + $0x5dc] sm:$0xf]
    %v2827 = vld [vmem:[%s5 + $0x5e0] sm:$0xf]
    %v2828 = vld [vmem:[%s5 + $0x5e4] sm:$0xf]
    %v2829 = vld [vmem:[%s5 + $0x5e8] sm:$0xf]
    %v2830 = vld [vmem:[%s5 + $0x5ec] sm:$0xf]
    %v2831 = vld [vmem:[%s5 + $0x5f0] sm:$0xf]
    %v2832 = vld [vmem:[%s5 + $0x5f4] sm:$0xf]
    %v2833 = vld [vmem:[%s5 + $0x5f8] sm:$0xf]
    %v2834 = vld [vmem:[%s5 + $0x5fc] sm:$0xf]
    %v2835 = vld [vmem:[%s5 + $0x600] sm:$0xf]
    %v2836 = vld [vmem:[%s5 + $0x604] sm:$0xf]
    %v2837 = vld [vmem:[%s5 + $0x608] sm:$0xf]
    %v2838 = vld [vmem:[%s5 + $0x60c] sm:$0xf]
    %v2839 = vld [vmem:[%s5 + $0x610] sm:$0xf]
    %v2840 = vld [vmem:[%s5 + $0x614] sm:$0xf]
    %v2841 = vld [vmem:[%s5 + $0x618] sm:$0xf]
    %v2842 = vld [vmem:[%s5 + $0x61c] sm:$0xf]
    %v2843 = vld [vmem:[%s5 + $0x620] sm:$0xf]
    %v2844 = vld [vmem:[%s5 + $0x624] sm:$0xf]
    %v2845 = vld [vmem:[%s5 + $0x628] sm:$0xf]
    %v2846 = vld [vmem:[%s5 + $0x62c] sm:$0xf]
    %v2847 = vld [vmem:[%s5 + $0x630] sm:$0xf]
    %v2848 = vld [vmem:[%s5 + $0x634] sm:$0xf]
    %v2849 = vld [vmem:[%s5 + $0x638] sm:$0xf]
    %v2850 = vld [vmem:[%s5 + $0x63c] sm:$0xf]
    %v2851 = vld [vmem:[%s5 + $0x640] sm:$0xf]
    %v2852 = vld [vmem:[%s5 + $0x644] sm:$0xf]
    %v2853 = vld [vmem:[%s5 + $0x648] sm:$0xf]
    %v2854 = vld [vmem:[%s5 + $0x64c] sm:$0xf]
    %v2855 = vld [vmem:[%s5 + $0x650] sm:$0xf]
    %v2856 = vld [vmem:[%s5 + $0x654] sm:$0xf]
    %v2857 = vld [vmem:[%s5 + $0x658] sm:$0xf]
    %v2858 = vld [vmem:[%s5 + $0x65c] sm:$0xf]
    %v2859 = vld [vmem:[%s5 + $0x660] sm:$0xf]
    %v2860 = vld [vmem:[%s5 + $0x664] sm:$0xf]
    %v2861 = vld [vmem:[%s5 + $0x668] sm:$0xf]
    %v2862 = vld [vmem:[%s5 + $0x66c] sm:$0xf]
    %v2863 = vld [vmem:[%s5 + $0x670] sm:$0xf]
    %v2864 = vld [vmem:[%s5 + $0x674] sm:$0xf]
    %v2865 = vld [vmem:[%s5 + $0x678] sm:$0xf]
    %v2866 = vld [vmem:[%s5 + $0x67c] sm:$0xf]
    %v2893 = vunpack.c.l.b16 %v2425
    %v2894 = vunpack.c.h.b16 %v2425
    %v2895 = vunpack.c.l.b16 %v2426
    %v2896 = vunpack.c.h.b16 %v2426
    %v2897 = vunpack.c.l.b16 %v2427
    %v2898 = vunpack.c.h.b16 %v2427
    %v2899 = vunpack.c.l.b16 %v2428
    %v2900 = vunpack.c.h.b16 %v2428
    %v2901 = vunpack.c.l.b16 %v2429
    %v2902 = vunpack.c.h.b16 %v2429
    %v2903 = vunpack.c.l.b16 %v2430
    %v2904 = vunpack.c.h.b16 %v2430
    %v2905 = vunpack.c.l.b16 %v2431
    %v2906 = vunpack.c.h.b16 %v2431
    %v2907 = vunpack.c.l.b16 %v2432
    %v2908 = vunpack.c.h.b16 %v2432
    %v2909 = vunpack.c.l.b16 %v2433
    %v2910 = vunpack.c.h.b16 %v2433
    %v2911 = vunpack.c.l.b16 %v2434
    %v2912 = vunpack.c.h.b16 %v2434
    %v2913 = vunpack.c.l.b16 %v2435
    %v2914 = vunpack.c.h.b16 %v2435
    %v2915 = vunpack.c.l.b16 %v2436
    %v2916 = vunpack.c.h.b16 %v2436
    %v2917 = vunpack.c.l.b16 %v2437
    %v2918 = vunpack.c.h.b16 %v2437
    %v2919 = vunpack.c.l.b16 %v2438
    %v2920 = vunpack.c.h.b16 %v2438
    %v2921 = vunpack.c.l.b16 %v2439
    %v2922 = vunpack.c.h.b16 %v2439
    %v2923 = vunpack.c.l.b16 %v2440
    %v2924 = vunpack.c.h.b16 %v2440
    %v2925 = vunpack.c.l.b16 %v2441
    %v2926 = vunpack.c.h.b16 %v2441
    %v2927 = vunpack.c.l.b16 %v2442
    %v2928 = vunpack.c.h.b16 %v2442
    %v2929 = vunpack.c.l.b16 %v2443
    %v2930 = vunpack.c.h.b16 %v2443
    %v2931 = vunpack.c.l.b16 %v2444
    %v2932 = vunpack.c.h.b16 %v2444
    %v2933 = vunpack.c.l.b16 %v2445
    %v2934 = vunpack.c.h.b16 %v2445
    %v2935 = vunpack.c.l.b16 %v2446
    %v2936 = vunpack.c.h.b16 %v2446
    %v2937 = vunpack.c.l.b16 %v2447
    %v2938 = vunpack.c.h.b16 %v2447
    %v2939 = vunpack.c.l.b16 %v2448
    %v2940 = vunpack.c.h.b16 %v2448
    %v2941 = vunpack.c.l.b16 %v2449
    %v2942 = vunpack.c.h.b16 %v2449
    %v2943 = vunpack.c.l.b16 %v2450
    %v2944 = vunpack.c.h.b16 %v2450
    %v2945 = vpack.c.b16 %v2919, %v2893
    %v2946 = vpack.c.b16 %v2920, %v2894
    %v2947 = vpack.c.b16 %v2921, %v2895
    %v2948 = vpack.c.b16 %v2922, %v2896
    %v2949 = vpack.c.b16 %v2923, %v2897
    %v2950 = vpack.c.b16 %v2924, %v2898
    %v2951 = vpack.c.b16 %v2925, %v2899
    %v2952 = vpack.c.b16 %v2926, %v2900
    %v2953 = vpack.c.b16 %v2927, %v2901
    %v2954 = vpack.c.b16 %v2928, %v2902
    %v2955 = vpack.c.b16 %v2929, %v2903
    %v2956 = vpack.c.b16 %v2930, %v2904
    %v2957 = vpack.c.b16 %v2931, %v2905
    %v2958 = vpack.c.b16 %v2932, %v2906
    %v2959 = vpack.c.b16 %v2933, %v2907
    %v2960 = vpack.c.b16 %v2934, %v2908
    %v2961 = vpack.c.b16 %v2935, %v2909
    %v2962 = vpack.c.b16 %v2936, %v2910
    %v2963 = vpack.c.b16 %v2937, %v2911
    %v2964 = vpack.c.b16 %v2938, %v2912
    %v2965 = vpack.c.b16 %v2939, %v2913
    %v2966 = vpack.c.b16 %v2940, %v2914
    %v2967 = vpack.c.b16 %v2941, %v2915
    %v2968 = vpack.c.b16 %v2942, %v2916
    %v2969 = vpack.c.b16 %v2943, %v2917
    %v2970 = vpack.c.b16 %v2944, %v2918
    %v3413 = vunpack.c.l.b16 %v2451
    %v3414 = vunpack.c.l.b16 %v2452
    %v3415 = vunpack.c.l.b16 %v2453
    %v3416 = vunpack.c.l.b16 %v2454
    %v3417 = vunpack.c.l.b16 %v2455
    %v3418 = vunpack.c.l.b16 %v2456
    %v3419 = vunpack.c.l.b16 %v2457
    %v3420 = vunpack.c.l.b16 %v2458
    %v3421 = vunpack.c.l.b16 %v2459
    %v3422 = vunpack.c.l.b16 %v2460
    %v3423 = vunpack.c.l.b16 %v2461
    %v3424 = vunpack.c.l.b16 %v2462
    %v3425 = vunpack.c.l.b16 %v2463
    %v3426 = vunpack.c.l.b16 %v2464
    %v3427 = vunpack.c.l.b16 %v2465
    %v3428 = vunpack.c.l.b16 %v2466
    %v3429 = vunpack.c.l.b16 %v2467
    %v3430 = vunpack.c.l.b16 %v2468
    %v3431 = vunpack.c.l.b16 %v2469
    %v3432 = vunpack.c.l.b16 %v2470
    %v3433 = vunpack.c.l.b16 %v2471
    %v3434 = vunpack.c.l.b16 %v2472
    %v3435 = vunpack.c.l.b16 %v2473
    %v3436 = vunpack.c.l.b16 %v2474
    %v3437 = vunpack.c.l.b16 %v2475
    %v3438 = vunpack.c.l.b16 %v2476
    %v3439 = vunpack.c.l.b16 %v2477
    %v3440 = vunpack.c.l.b16 %v2478
    %v3441 = vunpack.c.l.b16 %v2479
    %v3442 = vunpack.c.l.b16 %v2480
    %v3443 = vunpack.c.l.b16 %v2481
    %v3444 = vunpack.c.l.b16 %v2482
    %v3445 = vunpack.c.l.b16 %v2483
    %v3446 = vunpack.c.l.b16 %v2484
    %v3447 = vunpack.c.l.b16 %v2485
    %v3448 = vunpack.c.l.b16 %v2486
    %v3449 = vunpack.c.l.b16 %v2487
    %v3450 = vunpack.c.l.b16 %v2488
    %v3451 = vunpack.c.l.b16 %v2489
    %v3452 = vunpack.c.l.b16 %v2490
    %v3453 = vunpack.c.l.b16 %v2491
    %v3454 = vunpack.c.l.b16 %v2492
    %v3455 = vunpack.c.l.b16 %v2493
    %v3456 = vunpack.c.l.b16 %v2494
    %v3457 = vunpack.c.l.b16 %v2495
    %v3458 = vunpack.c.l.b16 %v2496
    %v3459 = vunpack.c.l.b16 %v2497
    %v3460 = vunpack.c.l.b16 %v2498
    %v3461 = vunpack.c.l.b16 %v2499
    %v3462 = vunpack.c.l.b16 %v2500
    %v3463 = vunpack.c.l.b16 %v2501
    %v3464 = vunpack.c.l.b16 %v2502
    %v3465 = vunpack.c.l.b16 %v2503
    %v3466 = vunpack.c.l.b16 %v2504
    %v3467 = vunpack.c.l.b16 %v2505
    %v3468 = vunpack.c.l.b16 %v2506
    %v3469 = vunpack.c.l.b16 %v2507
    %v3470 = vunpack.c.l.b16 %v2508
    %v3471 = vunpack.c.l.b16 %v2509
    %v3472 = vunpack.c.l.b16 %v2510
    %v3473 = vunpack.c.l.b16 %v2511
    %v3474 = vunpack.c.l.b16 %v2512
    %v3475 = vunpack.c.l.b16 %v2513
    %v3476 = vunpack.c.l.b16 %v2514
    %v3477 = vunpack.c.l.b16 %v2515
    %v3478 = vunpack.c.l.b16 %v2516
    %v3479 = vunpack.c.l.b16 %v2517
    %v3480 = vunpack.c.l.b16 %v2518
    %v3481 = vunpack.c.l.b16 %v2519
    %v3482 = vunpack.c.l.b16 %v2520
    %v3483 = vunpack.c.l.b16 %v2521
    %v3484 = vunpack.c.l.b16 %v2522
    %v3485 = vunpack.c.l.b16 %v2523
    %v3486 = vunpack.c.l.b16 %v2524
    %v3487 = vunpack.c.l.b16 %v2525
    %v3488 = vunpack.c.l.b16 %v2526
    %v3489 = vunpack.c.l.b16 %v2527
    %v3490 = vunpack.c.l.b16 %v2528
    %v3491 = vunpack.c.l.b16 %v2529
    %v3492 = vunpack.c.l.b16 %v2530
    %v3493 = vunpack.c.l.b16 %v2531
    %v3494 = vunpack.c.l.b16 %v2532
    %v3495 = vunpack.c.l.b16 %v2533
    %v3496 = vunpack.c.l.b16 %v2534
    %v3497 = vunpack.c.l.b16 %v2535
    %v3498 = vunpack.c.l.b16 %v2536
    %v3499 = vunpack.c.l.b16 %v2537
    %v3500 = vunpack.c.l.b16 %v2538
    %v3501 = vunpack.c.l.b16 %v2539
    %v3502 = vunpack.c.l.b16 %v2540
    %v3503 = vunpack.c.l.b16 %v2541
    %v3504 = vunpack.c.l.b16 %v2542
    %v3505 = vunpack.c.l.b16 %v2543
    %v3506 = vunpack.c.l.b16 %v2544
    %v3507 = vunpack.c.l.b16 %v2545
    %v3508 = vunpack.c.l.b16 %v2546
    %v3509 = vunpack.c.l.b16 %v2547
    %v3510 = vunpack.c.l.b16 %v2548
    %v3511 = vunpack.c.l.b16 %v2549
    %v3512 = vunpack.c.l.b16 %v2550
    %v3513 = vunpack.c.l.b16 %v2551
    %v3514 = vunpack.c.l.b16 %v2552
    %v3515 = vunpack.c.l.b16 %v2553
    %v3516 = vunpack.c.l.b16 %v2554
    %v3517 = vunpack.c.l.b16 %v2555
    %v3518 = vunpack.c.l.b16 %v2556
    %v3519 = vunpack.c.l.b16 %v2557
    %v3520 = vunpack.c.l.b16 %v2558
    %v3521 = vunpack.c.l.b16 %v2559
    %v3522 = vunpack.c.l.b16 %v2560
    %v3523 = vunpack.c.l.b16 %v2561
    %v3524 = vunpack.c.l.b16 %v2562
    %v3525 = vunpack.c.l.b16 %v2563
    %v3526 = vunpack.c.l.b16 %v2564
    %v3527 = vunpack.c.l.b16 %v2565
    %v3528 = vunpack.c.l.b16 %v2566
    %v3529 = vunpack.c.l.b16 %v2567
    %v3530 = vunpack.c.l.b16 %v2568
    %v3531 = vunpack.c.l.b16 %v2569
    %v3532 = vunpack.c.l.b16 %v2570
    %v3533 = vunpack.c.l.b16 %v2571
    %v3534 = vunpack.c.l.b16 %v2572
    %v3535 = vunpack.c.l.b16 %v2573
    %v3536 = vunpack.c.l.b16 %v2574
    %v3537 = vunpack.c.l.b16 %v2575
    %v3538 = vunpack.c.l.b16 %v2576
    %v3539 = vunpack.c.l.b16 %v2577
    %v3540 = vunpack.c.l.b16 %v2578
    %v3541 = vunpack.c.l.b16 %v2579
    %v3542 = vunpack.c.l.b16 %v2580
    %v3543 = vunpack.c.l.b16 %v2581
    %v3544 = vunpack.c.l.b16 %v2582
    %v3545 = vunpack.c.l.b16 %v2583
    %v3546 = vunpack.c.l.b16 %v2584
    %v3547 = vunpack.c.l.b16 %v2585
    %v3548 = vunpack.c.l.b16 %v2586
    %v3549 = vunpack.c.l.b16 %v2587
    %v3550 = vunpack.c.l.b16 %v2588
    %v3551 = vunpack.c.l.b16 %v2589
    %v3552 = vunpack.c.l.b16 %v2590
    %v3553 = vunpack.c.l.b16 %v2591
    %v3554 = vunpack.c.l.b16 %v2592
    %v3555 = vunpack.c.l.b16 %v2593
    %v3556 = vunpack.c.l.b16 %v2594
    %v3557 = vunpack.c.l.b16 %v2595
    %v3558 = vunpack.c.l.b16 %v2596
    %v3559 = vunpack.c.l.b16 %v2597
    %v3560 = vunpack.c.l.b16 %v2598
    %v3561 = vunpack.c.l.b16 %v2599
    %v3562 = vunpack.c.l.b16 %v2600
    %v3563 = vunpack.c.l.b16 %v2601
    %v3564 = vunpack.c.l.b16 %v2602
    %v3565 = vunpack.c.l.b16 %v2603
    %v3566 = vunpack.c.l.b16 %v2604
    %v3567 = vunpack.c.l.b16 %v2605
    %v3568 = vunpack.c.l.b16 %v2606
    %v3569 = vunpack.c.l.b16 %v2607
    %v3570 = vunpack.c.l.b16 %v2608
    %v3571 = vunpack.c.l.b16 %v2609
    %v3572 = vunpack.c.l.b16 %v2610
    %v3573 = vunpack.c.l.b16 %v2611
    %v3574 = vunpack.c.l.b16 %v2612
    %v3575 = vunpack.c.l.b16 %v2613
    %v3576 = vunpack.c.l.b16 %v2614
    %v3577 = vunpack.c.l.b16 %v2615
    %v3578 = vunpack.c.l.b16 %v2616
    %v3579 = vunpack.c.l.b16 %v2617
    %v3580 = vunpack.c.l.b16 %v2618
    %v3581 = vunpack.c.l.b16 %v2619
    %v3582 = vunpack.c.l.b16 %v2620
    %v3583 = vunpack.c.l.b16 %v2621
    %v3584 = vunpack.c.l.b16 %v2622
    %v3585 = vunpack.c.l.b16 %v2623
    %v3586 = vunpack.c.l.b16 %v2624
    %v3587 = vunpack.c.l.b16 %v2625
    %v3588 = vunpack.c.l.b16 %v2626
    %v3589 = vunpack.c.l.b16 %v2627
    %v3590 = vunpack.c.l.b16 %v2628
    %v3591 = vunpack.c.l.b16 %v2629
    %v3592 = vunpack.c.l.b16 %v2630
    %v3593 = vunpack.c.l.b16 %v2631
    %v3594 = vunpack.c.l.b16 %v2632
    %v3595 = vunpack.c.l.b16 %v2633
    %v3596 = vunpack.c.l.b16 %v2634
    %v3597 = vunpack.c.l.b16 %v2635
    %v3598 = vunpack.c.l.b16 %v2636
    %v3599 = vunpack.c.l.b16 %v2637
    %v3600 = vunpack.c.l.b16 %v2638
    %v3601 = vunpack.c.l.b16 %v2639
    %v3602 = vunpack.c.l.b16 %v2640
    %v3603 = vunpack.c.l.b16 %v2641
    %v3604 = vunpack.c.l.b16 %v2642
    %v3605 = vunpack.c.l.b16 %v2643
    %v3606 = vunpack.c.l.b16 %v2644
    %v3607 = vunpack.c.l.b16 %v2645
    %v3608 = vunpack.c.l.b16 %v2646
    %v3609 = vunpack.c.l.b16 %v2647
    %v3610 = vunpack.c.l.b16 %v2648
    %v3611 = vunpack.c.l.b16 %v2649
    %v3612 = vunpack.c.l.b16 %v2650
    %v3613 = vunpack.c.l.b16 %v2651
    %v3614 = vunpack.c.l.b16 %v2652
    %v3615 = vunpack.c.l.b16 %v2653
    %v3616 = vunpack.c.l.b16 %v2654
    %v3617 = vunpack.c.l.b16 %v2655
    %v3618 = vunpack.c.l.b16 %v2656
    %v3619 = vunpack.c.l.b16 %v2657
    %v3620 = vunpack.c.l.b16 %v2658
    %v3621 = vunpack.c.l.b16 %v2659
    %v3622 = vunpack.c.l.b16 %v2660
    %v3623 = vunpack.c.l.b16 %v2661
    %v3624 = vunpack.c.l.b16 %v2662
    %v3625 = vunpack.c.l.b16 %v2663
    %v3626 = vunpack.c.l.b16 %v2664
    %v3627 = vunpack.c.l.b16 %v2665
    %v3628 = vunpack.c.l.b16 %v2666
    %v3629 = vunpack.c.l.b16 %v2667
    %v3630 = vunpack.c.l.b16 %v2668
    %v3631 = vunpack.c.l.b16 %v2669
    %v3632 = vunpack.c.l.b16 %v2670
    %v3633 = vunpack.c.l.b16 %v2671
    %v3634 = vunpack.c.l.b16 %v2672
    %v3635 = vunpack.c.l.b16 %v2673
    %v3636 = vunpack.c.l.b16 %v2674
    %v3637 = vunpack.c.l.b16 %v2675
    %v3638 = vunpack.c.l.b16 %v2676
    %v3639 = vunpack.c.l.b16 %v2677
    %v3640 = vunpack.c.l.b16 %v2678
    %v3641 = vunpack.c.l.b16 %v2679
    %v3642 = vunpack.c.l.b16 %v2680
    %v3643 = vunpack.c.l.b16 %v2681
    %v3644 = vunpack.c.l.b16 %v2682
    %v3645 = vunpack.c.l.b16 %v2683
    %v3646 = vunpack.c.l.b16 %v2684
    %v3647 = vunpack.c.l.b16 %v2685
    %v3648 = vunpack.c.l.b16 %v2686
    %v3649 = vunpack.c.l.b16 %v2687
    %v3650 = vunpack.c.l.b16 %v2688
    %v3651 = vunpack.c.l.b16 %v2689
    %v3652 = vunpack.c.l.b16 %v2690
    %v3653 = vunpack.c.l.b16 %v2691
    %v3654 = vunpack.c.l.b16 %v2692
    %v3655 = vunpack.c.l.b16 %v2693
    %v3656 = vunpack.c.l.b16 %v2694
    %v3657 = vunpack.c.l.b16 %v2695
    %v3658 = vunpack.c.l.b16 %v2696
    %v3659 = vunpack.c.l.b16 %v2697
    %v3660 = vunpack.c.l.b16 %v2698
    %v3661 = vunpack.c.l.b16 %v2699
    %v3662 = vunpack.c.l.b16 %v2700
    %v3663 = vunpack.c.l.b16 %v2701
    %v3664 = vunpack.c.l.b16 %v2702
    %v3665 = vunpack.c.l.b16 %v2703
    %v3666 = vunpack.c.l.b16 %v2704
    %v3667 = vunpack.c.l.b16 %v2705
    %v3668 = vunpack.c.l.b16 %v2706
    %v3669 = vunpack.c.l.b16 %v2707
    %v3670 = vunpack.c.l.b16 %v2708
    %v3671 = vunpack.c.l.b16 %v2709
    %v3672 = vunpack.c.l.b16 %v2710
    %v3673 = vunpack.c.l.b16 %v2711
    %v3674 = vunpack.c.l.b16 %v2712
    %v3675 = vunpack.c.l.b16 %v2713
    %v3676 = vunpack.c.l.b16 %v2714
    %v3677 = vunpack.c.l.b16 %v2715
    %v3678 = vunpack.c.l.b16 %v2716
    %v3679 = vunpack.c.l.b16 %v2717
    %v3680 = vunpack.c.l.b16 %v2718
    %v3681 = vunpack.c.l.b16 %v2719
    %v3682 = vunpack.c.l.b16 %v2720
    %v3683 = vunpack.c.l.b16 %v2721
    %v3684 = vunpack.c.l.b16 %v2722
    %v3685 = vunpack.c.l.b16 %v2723
    %v3686 = vunpack.c.l.b16 %v2724
    %v3687 = vunpack.c.l.b16 %v2725
    %v3688 = vunpack.c.l.b16 %v2726
    %v3689 = vunpack.c.l.b16 %v2727
    %v3690 = vunpack.c.l.b16 %v2728
    %v3691 = vunpack.c.l.b16 %v2729
    %v3692 = vunpack.c.l.b16 %v2730
    %v3693 = vunpack.c.l.b16 %v2731
    %v3694 = vunpack.c.l.b16 %v2732
    %v3695 = vunpack.c.l.b16 %v2733
    %v3696 = vunpack.c.l.b16 %v2734
    %v3697 = vunpack.c.l.b16 %v2735
    %v3698 = vunpack.c.l.b16 %v2736
    %v3699 = vunpack.c.l.b16 %v2737
    %v3700 = vunpack.c.l.b16 %v2738
    %v3701 = vunpack.c.l.b16 %v2739
    %v3702 = vunpack.c.l.b16 %v2740
    %v3703 = vunpack.c.l.b16 %v2741
    %v3704 = vunpack.c.l.b16 %v2742
    %v3705 = vunpack.c.l.b16 %v2743
    %v3706 = vunpack.c.l.b16 %v2744
    %v3707 = vunpack.c.l.b16 %v2745
    %v3708 = vunpack.c.l.b16 %v2746
    %v3709 = vunpack.c.l.b16 %v2747
    %v3710 = vunpack.c.l.b16 %v2748
    %v3711 = vunpack.c.l.b16 %v2749
    %v3712 = vunpack.c.l.b16 %v2750
    %v3713 = vunpack.c.l.b16 %v2751
    %v3714 = vunpack.c.l.b16 %v2752
    %v3715 = vunpack.c.l.b16 %v2753
    %v3716 = vunpack.c.l.b16 %v2754
    %v3717 = vunpack.c.l.b16 %v2755
    %v3718 = vunpack.c.l.b16 %v2756
    %v3719 = vunpack.c.l.b16 %v2757
    %v3720 = vunpack.c.l.b16 %v2758
    %v3721 = vunpack.c.l.b16 %v2759
    %v3722 = vunpack.c.l.b16 %v2760
    %v3723 = vunpack.c.l.b16 %v2761
    %v3724 = vunpack.c.l.b16 %v2762
    %v3725 = vunpack.c.l.b16 %v2763
    %v3726 = vunpack.c.l.b16 %v2764
    %v3727 = vunpack.c.l.b16 %v2765
    %v3728 = vunpack.c.l.b16 %v2766
    %v3729 = vunpack.c.l.b16 %v2767
    %v3730 = vunpack.c.l.b16 %v2768
    %v3731 = vunpack.c.l.b16 %v2769
    %v3732 = vunpack.c.l.b16 %v2770
    %v3733 = vunpack.c.l.b16 %v2771
    %v3734 = vunpack.c.l.b16 %v2772
    %v3735 = vunpack.c.l.b16 %v2773
    %v3736 = vunpack.c.l.b16 %v2774
    %v3737 = vunpack.c.l.b16 %v2775
    %v3738 = vunpack.c.l.b16 %v2776
    %v3739 = vunpack.c.l.b16 %v2777
    %v3740 = vunpack.c.l.b16 %v2778
    %v3741 = vunpack.c.l.b16 %v2779
    %v3742 = vunpack.c.l.b16 %v2780
    %v3743 = vunpack.c.l.b16 %v2781
    %v3744 = vunpack.c.l.b16 %v2782
    %v3745 = vunpack.c.l.b16 %v2783
    %v3746 = vunpack.c.l.b16 %v2784
    %v3747 = vunpack.c.l.b16 %v2785
    %v3748 = vunpack.c.l.b16 %v2786
    %v3749 = vunpack.c.l.b16 %v2787
    %v3750 = vunpack.c.l.b16 %v2788
    %v3751 = vunpack.c.l.b16 %v2789
    %v3752 = vunpack.c.l.b16 %v2790
    %v3753 = vunpack.c.l.b16 %v2791
    %v3754 = vunpack.c.l.b16 %v2792
    %v3755 = vunpack.c.l.b16 %v2793
    %v3756 = vunpack.c.l.b16 %v2794
    %v3757 = vunpack.c.l.b16 %v2795
    %v3758 = vunpack.c.l.b16 %v2796
    %v3759 = vunpack.c.l.b16 %v2797
    %v3760 = vunpack.c.l.b16 %v2798
    %v3761 = vunpack.c.l.b16 %v2799
    %v3762 = vunpack.c.l.b16 %v2800
    %v3763 = vunpack.c.l.b16 %v2801
    %v3764 = vunpack.c.l.b16 %v2802
    %v3765 = vunpack.c.l.b16 %v2803
    %v3766 = vunpack.c.l.b16 %v2804
    %v3767 = vunpack.c.l.b16 %v2805
    %v3768 = vunpack.c.l.b16 %v2806
    %v3769 = vunpack.c.l.b16 %v2807
    %v3770 = vunpack.c.l.b16 %v2808
    %v3771 = vunpack.c.l.b16 %v2809
    %v3772 = vunpack.c.l.b16 %v2810
    %v3773 = vunpack.c.l.b16 %v2811
    %v3774 = vunpack.c.l.b16 %v2812
    %v3775 = vunpack.c.l.b16 %v2813
    %v3776 = vunpack.c.l.b16 %v2814
    %v3777 = vunpack.c.l.b16 %v2815
    %v3778 = vunpack.c.l.b16 %v2816
    %v3779 = vunpack.c.l.b16 %v2817
    %v3780 = vunpack.c.l.b16 %v2818
    %v3781 = vunpack.c.l.b16 %v2819
    %v3782 = vunpack.c.l.b16 %v2820
    %v3783 = vunpack.c.l.b16 %v2821
    %v3784 = vunpack.c.l.b16 %v2822
    %v3785 = vunpack.c.l.b16 %v2823
    %v3786 = vunpack.c.l.b16 %v2824
    %v3787 = vunpack.c.l.b16 %v2825
    %v3788 = vunpack.c.l.b16 %v2826
    %v3789 = vunpack.c.l.b16 %v2827
    %v3790 = vunpack.c.l.b16 %v2828
    %v3791 = vunpack.c.l.b16 %v2829
    %v3792 = vunpack.c.l.b16 %v2830
    %v3793 = vunpack.c.l.b16 %v2831
    %v3794 = vunpack.c.l.b16 %v2832
    %v3795 = vunpack.c.l.b16 %v2833
    %v3796 = vunpack.c.l.b16 %v2834
    %v3797 = vunpack.c.l.b16 %v2835
    %v3798 = vunpack.c.l.b16 %v2836
    %v3799 = vunpack.c.l.b16 %v2837
    %v3800 = vunpack.c.l.b16 %v2838
    %v3801 = vunpack.c.l.b16 %v2839
    %v3802 = vunpack.c.l.b16 %v2840
    %v3803 = vunpack.c.l.b16 %v2841
    %v3804 = vunpack.c.l.b16 %v2842
    %v3805 = vunpack.c.l.b16 %v2843
    %v3806 = vunpack.c.l.b16 %v2844
    %v3807 = vunpack.c.l.b16 %v2845
    %v3808 = vunpack.c.l.b16 %v2846
    %v3809 = vunpack.c.l.b16 %v2847
    %v3810 = vunpack.c.l.b16 %v2848
    %v3811 = vunpack.c.l.b16 %v2849
    %v3812 = vunpack.c.l.b16 %v2850
    %v3813 = vunpack.c.l.b16 %v2851
    %v3814 = vunpack.c.l.b16 %v2852
    %v3815 = vunpack.c.l.b16 %v2853
    %v3816 = vunpack.c.l.b16 %v2854
    %v3817 = vunpack.c.l.b16 %v2855
    %v3818 = vunpack.c.l.b16 %v2856
    %v3819 = vunpack.c.l.b16 %v2857
    %v3820 = vunpack.c.l.b16 %v2858
    %v3821 = vunpack.c.l.b16 %v2859
    %v3822 = vunpack.c.l.b16 %v2860
    %v3823 = vunpack.c.l.b16 %v2861
    %v3824 = vunpack.c.l.b16 %v2862
    %v3825 = vunpack.c.l.b16 %v2863
    %v3826 = vunpack.c.l.b16 %v2864
    %v3827 = vunpack.c.l.b16 %v2865
    %v3828 = vunpack.c.l.b16 %v2866
    %v3829 = vpack.c.b16 %v3414, %v3413
    %v3830 = vpack.c.b16 %v3416, %v3415
    %v3831 = vpack.c.b16 %v3418, %v3417
    %v3832 = vpack.c.b16 %v3420, %v3419
    %v3833 = vpack.c.b16 %v3422, %v3421
    %v3834 = vpack.c.b16 %v3424, %v3423
    %v3835 = vpack.c.b16 %v3426, %v3425
    %v3836 = vpack.c.b16 %v3428, %v3427
    %v3837 = vpack.c.b16 %v3430, %v3429
    %v3838 = vpack.c.b16 %v3432, %v3431
    %v3839 = vpack.c.b16 %v3434, %v3433
    %v3840 = vpack.c.b16 %v3436, %v3435
    %v3841 = vpack.c.b16 %v3438, %v3437
    %v3842 = vpack.c.b16 %v3440, %v3439
    %v3843 = vpack.c.b16 %v3442, %v3441
    %v3844 = vpack.c.b16 %v3444, %v3443
    %v3845 = vpack.c.b16 %v3446, %v3445
    %v3846 = vpack.c.b16 %v3448, %v3447
    %v3847 = vpack.c.b16 %v3450, %v3449
    %v3848 = vpack.c.b16 %v3452, %v3451
    %v3849 = vpack.c.b16 %v3454, %v3453
    %v3850 = vpack.c.b16 %v3456, %v3455
    %v3851 = vpack.c.b16 %v3458, %v3457
    %v3852 = vpack.c.b16 %v3460, %v3459
    %v3853 = vpack.c.b16 %v3462, %v3461
    %v3854 = vpack.c.b16 %v3464, %v3463
    %v3855 = vpack.c.b16 %v3466, %v3465
    %v3856 = vpack.c.b16 %v3468, %v3467
    %v3857 = vpack.c.b16 %v3470, %v3469
    %v3858 = vpack.c.b16 %v3472, %v3471
    %v3859 = vpack.c.b16 %v3474, %v3473
    %v3860 = vpack.c.b16 %v3476, %v3475
    %v3861 = vpack.c.b16 %v3478, %v3477
    %v3862 = vpack.c.b16 %v3480, %v3479
    %v3863 = vpack.c.b16 %v3482, %v3481
    %v3864 = vpack.c.b16 %v3484, %v3483
    %v3865 = vpack.c.b16 %v3486, %v3485
    %v3866 = vpack.c.b16 %v3488, %v3487
    %v3867 = vpack.c.b16 %v3490, %v3489
    %v3868 = vpack.c.b16 %v3492, %v3491
    %v3869 = vpack.c.b16 %v3494, %v3493
    %v3870 = vpack.c.b16 %v3496, %v3495
    %v3871 = vpack.c.b16 %v3498, %v3497
    %v3872 = vpack.c.b16 %v3500, %v3499
    %v3873 = vpack.c.b16 %v3502, %v3501
    %v3874 = vpack.c.b16 %v3504, %v3503
    %v3875 = vpack.c.b16 %v3506, %v3505
    %v3876 = vpack.c.b16 %v3508, %v3507
    %v3877 = vpack.c.b16 %v3510, %v3509
    %v3878 = vpack.c.b16 %v3512, %v3511
    %v3879 = vpack.c.b16 %v3514, %v3513
    %v3880 = vpack.c.b16 %v3516, %v3515
    %v3881 = vpack.c.b16 %v3518, %v3517
    %v3882 = vpack.c.b16 %v3520, %v3519
    %v3883 = vpack.c.b16 %v3522, %v3521
    %v3884 = vpack.c.b16 %v3524, %v3523
    %v3885 = vpack.c.b16 %v3526, %v3525
    %v3886 = vpack.c.b16 %v3528, %v3527
    %v3887 = vpack.c.b16 %v3530, %v3529
    %v3888 = vpack.c.b16 %v3532, %v3531
    %v3889 = vpack.c.b16 %v3534, %v3533
    %v3890 = vpack.c.b16 %v3536, %v3535
    %v3891 = vpack.c.b16 %v3538, %v3537
    %v3892 = vpack.c.b16 %v3540, %v3539
    %v3893 = vpack.c.b16 %v3542, %v3541
    %v3894 = vpack.c.b16 %v3544, %v3543
    %v3895 = vpack.c.b16 %v3546, %v3545
    %v3896 = vpack.c.b16 %v3548, %v3547
    %v3897 = vpack.c.b16 %v3550, %v3549
    %v3898 = vpack.c.b16 %v3552, %v3551
    %v3899 = vpack.c.b16 %v3554, %v3553
    %v3900 = vpack.c.b16 %v3556, %v3555
    %v3901 = vpack.c.b16 %v3558, %v3557
    %v3902 = vpack.c.b16 %v3560, %v3559
    %v3903 = vpack.c.b16 %v3562, %v3561
    %v3904 = vpack.c.b16 %v3564, %v3563
    %v3905 = vpack.c.b16 %v3566, %v3565
    %v3906 = vpack.c.b16 %v3568, %v3567
    %v3907 = vpack.c.b16 %v3570, %v3569
    %v3908 = vpack.c.b16 %v3572, %v3571
    %v3909 = vpack.c.b16 %v3574, %v3573
    %v3910 = vpack.c.b16 %v3576, %v3575
    %v3911 = vpack.c.b16 %v3578, %v3577
    %v3912 = vpack.c.b16 %v3580, %v3579
    %v3913 = vpack.c.b16 %v3582, %v3581
    %v3914 = vpack.c.b16 %v3584, %v3583
    %v3915 = vpack.c.b16 %v3586, %v3585
    %v3916 = vpack.c.b16 %v3588, %v3587
    %v3917 = vpack.c.b16 %v3590, %v3589
    %v3918 = vpack.c.b16 %v3592, %v3591
    %v3919 = vpack.c.b16 %v3594, %v3593
    %v3920 = vpack.c.b16 %v3596, %v3595
    %v3921 = vpack.c.b16 %v3598, %v3597
    %v3922 = vpack.c.b16 %v3600, %v3599
    %v3923 = vpack.c.b16 %v3602, %v3601
    %v3924 = vpack.c.b16 %v3604, %v3603
    %v3925 = vpack.c.b16 %v3606, %v3605
    %v3926 = vpack.c.b16 %v3608, %v3607
    %v3927 = vpack.c.b16 %v3610, %v3609
    %v3928 = vpack.c.b16 %v3612, %v3611
    %v3929 = vpack.c.b16 %v3614, %v3613
    %v3930 = vpack.c.b16 %v3616, %v3615
    %v3931 = vpack.c.b16 %v3618, %v3617
    %v3932 = vpack.c.b16 %v3620, %v3619
    %v3933 = vpack.c.b16 %v3622, %v3621
    %v3934 = vpack.c.b16 %v3624, %v3623
    %v3935 = vpack.c.b16 %v3626, %v3625
    %v3936 = vpack.c.b16 %v3628, %v3627
    %v3937 = vpack.c.b16 %v3630, %v3629
    %v3938 = vpack.c.b16 %v3632, %v3631
    %v3939 = vpack.c.b16 %v3634, %v3633
    %v3940 = vpack.c.b16 %v3636, %v3635
    %v3941 = vpack.c.b16 %v3638, %v3637
    %v3942 = vpack.c.b16 %v3640, %v3639
    %v3943 = vpack.c.b16 %v3642, %v3641
    %v3944 = vpack.c.b16 %v3644, %v3643
    %v3945 = vpack.c.b16 %v3646, %v3645
    %v3946 = vpack.c.b16 %v3648, %v3647
    %v3947 = vpack.c.b16 %v3650, %v3649
    %v3948 = vpack.c.b16 %v3652, %v3651
    %v3949 = vpack.c.b16 %v3654, %v3653
    %v3950 = vpack.c.b16 %v3656, %v3655
    %v3951 = vpack.c.b16 %v3658, %v3657
    %v3952 = vpack.c.b16 %v3660, %v3659
    %v3953 = vpack.c.b16 %v3662, %v3661
    %v3954 = vpack.c.b16 %v3664, %v3663
    %v3955 = vpack.c.b16 %v3666, %v3665
    %v3956 = vpack.c.b16 %v3668, %v3667
    %v3957 = vpack.c.b16 %v3670, %v3669
    %v3958 = vpack.c.b16 %v3672, %v3671
    %v3959 = vpack.c.b16 %v3674, %v3673
    %v3960 = vpack.c.b16 %v3676, %v3675
    %v3961 = vpack.c.b16 %v3678, %v3677
    %v3962 = vpack.c.b16 %v3680, %v3679
    %v3963 = vpack.c.b16 %v3682, %v3681
    %v3964 = vpack.c.b16 %v3684, %v3683
    %v3965 = vpack.c.b16 %v3686, %v3685
    %v3966 = vpack.c.b16 %v3688, %v3687
    %v3967 = vpack.c.b16 %v3690, %v3689
    %v3968 = vpack.c.b16 %v3692, %v3691
    %v3969 = vpack.c.b16 %v3694, %v3693
    %v3970 = vpack.c.b16 %v3696, %v3695
    %v3971 = vpack.c.b16 %v3698, %v3697
    %v3972 = vpack.c.b16 %v3700, %v3699
    %v3973 = vpack.c.b16 %v3702, %v3701
    %v3974 = vpack.c.b16 %v3704, %v3703
    %v3975 = vpack.c.b16 %v3706, %v3705
    %v3976 = vpack.c.b16 %v3708, %v3707
    %v3977 = vpack.c.b16 %v3710, %v3709
    %v3978 = vpack.c.b16 %v3712, %v3711
    %v3979 = vpack.c.b16 %v3714, %v3713
    %v3980 = vpack.c.b16 %v3716, %v3715
    %v3981 = vpack.c.b16 %v3718, %v3717
    %v3982 = vpack.c.b16 %v3720, %v3719
    %v3983 = vpack.c.b16 %v3722, %v3721
    %v3984 = vpack.c.b16 %v3724, %v3723
    %v3985 = vpack.c.b16 %v3726, %v3725
    %v3986 = vpack.c.b16 %v3728, %v3727
    %v3987 = vpack.c.b16 %v3730, %v3729
    %v3988 = vpack.c.b16 %v3732, %v3731
    %v3989 = vpack.c.b16 %v3734, %v3733
    %v3990 = vpack.c.b16 %v3736, %v3735
    %v3991 = vpack.c.b16 %v3738, %v3737
    %v3992 = vpack.c.b16 %v3740, %v3739
    %v3993 = vpack.c.b16 %v3742, %v3741
    %v3994 = vpack.c.b16 %v3744, %v3743
    %v3995 = vpack.c.b16 %v3746, %v3745
    %v3996 = vpack.c.b16 %v3748, %v3747
    %v3997 = vpack.c.b16 %v3750, %v3749
    %v3998 = vpack.c.b16 %v3752, %v3751
    %v3999 = vpack.c.b16 %v3754, %v3753
    %v4000 = vpack.c.b16 %v3756, %v3755
    %v4001 = vpack.c.b16 %v3758, %v3757
    %v4002 = vpack.c.b16 %v3760, %v3759
    %v4003 = vpack.c.b16 %v3762, %v3761
    %v4004 = vpack.c.b16 %v3764, %v3763
    %v4005 = vpack.c.b16 %v3766, %v3765
    %v4006 = vpack.c.b16 %v3768, %v3767
    %v4007 = vpack.c.b16 %v3770, %v3769
    %v4008 = vpack.c.b16 %v3772, %v3771
    %v4009 = vpack.c.b16 %v3774, %v3773
    %v4010 = vpack.c.b16 %v3776, %v3775
    %v4011 = vpack.c.b16 %v3778, %v3777
    %v4012 = vpack.c.b16 %v3780, %v3779
    %v4013 = vpack.c.b16 %v3782, %v3781
    %v4014 = vpack.c.b16 %v3784, %v3783
    %v4015 = vpack.c.b16 %v3786, %v3785
    %v4016 = vpack.c.b16 %v3788, %v3787
    %v4017 = vpack.c.b16 %v3790, %v3789
    %v4018 = vpack.c.b16 %v3792, %v3791
    %v4019 = vpack.c.b16 %v3794, %v3793
    %v4020 = vpack.c.b16 %v3796, %v3795
    %v4021 = vpack.c.b16 %v3798, %v3797
    %v4022 = vpack.c.b16 %v3800, %v3799
    %v4023 = vpack.c.b16 %v3802, %v3801
    %v4024 = vpack.c.b16 %v3804, %v3803
    %v4025 = vpack.c.b16 %v3806, %v3805
    %v4026 = vpack.c.b16 %v3808, %v3807
    %v4027 = vpack.c.b16 %v3810, %v3809
    %v4028 = vpack.c.b16 %v3812, %v3811
    %v4029 = vpack.c.b16 %v3814, %v3813
    %v4030 = vpack.c.b16 %v3816, %v3815
    %v4031 = vpack.c.b16 %v3818, %v3817
    %v4032 = vpack.c.b16 %v3820, %v3819
    %v4033 = vpack.c.b16 %v3822, %v3821
    %v4034 = vpack.c.b16 %v3824, %v3823
    %v4035 = vpack.c.b16 %v3826, %v3825
    %v4036 = vpack.c.b16 %v3828, %v3827
    %4245 = vmatprep.subr.bf16.mxu0 0
    %4246 = vmatpush1.bf16.msra.mxu0 %v3829
    %4247 = vmatprep.subr.bf16.mxu0 0
    %4248 = vmatpush1.bf16.msra.mxu0 %v3830
    %4249 = vmatprep.subr.bf16.mxu0 0
    %4250 = vmatpush1.bf16.msra.mxu0 %v3831
    %4251 = vmatprep.subr.bf16.mxu0 0
    %4252 = vmatpush1.bf16.msra.mxu0 %v3832
    %4253 = vmatprep.subr.bf16.mxu0 0
    %4254 = vmatpush1.bf16.msra.mxu0 %v3833
    %4255 = vmatprep.subr.bf16.mxu0 0
    %4256 = vmatpush1.bf16.msra.mxu0 %v3834
    %4257 = vmatprep.subr.bf16.mxu0 0
    %4258 = vmatpush1.bf16.msra.mxu0 %v3835
    %4259 = vmatprep.subr.bf16.mxu0 0
    %4260 = vmatpush1.bf16.msra.mxu0 %v3836
    %4261 = vmatprep.subr.bf16.mxu0 0
    %4262 = vmatpush1.bf16.msra.mxu0 %v3837
    %4263 = vmatprep.subr.bf16.mxu0 0
    %4264 = vmatpush1.bf16.msra.mxu0 %v3838
    %4265 = vmatprep.subr.bf16.mxu0 0
    %4266 = vmatpush1.bf16.msra.mxu0 %v3839
    %4267 = vmatprep.subr.bf16.mxu0 0
    %4268 = vmatpush1.bf16.msra.mxu0 %v3840
    %4269 = vmatprep.subr.bf16.mxu0 0
    %4270 = vmatpush1.bf16.msra.mxu0 %v3841
    %4271 = vmatprep.subr.bf16.mxu0 0
    %4272 = vmatpush1.bf16.msra.mxu0 %v3842
    %4273 = vmatprep.subr.bf16.mxu0 0
    %4274 = vmatpush1.bf16.msra.mxu0 %v3843
    %4275 = vmatprep.subr.bf16.mxu0 0
    %4276 = vmatpush1.bf16.msra.mxu0 %v3844
    %4277 = vmatprep.mubr.bf16.mxu0 %v2946
    %4278 = vmatmul.mubr.bf16.gmra.mrb[0].mxu0 %v2945
    %v4279 = vpop.f32.mrb[0].mxu0
    %v4280 = vadd.f32 0.0, %v4279
    %v4281 = vpop.f32.mrb[0].mxu0
    %v4282 = vpop.f32.mrb[0].mxu0
    %v4283 = vadd.f32 0.0, %v4282
    %v4284 = vpop.f32.mrb[0].mxu0
    %4285 = vdwg.mxu0
    %4286 = vmatprep.subr.bf16.mxu0 0
    %4287 = vmatpush1.bf16.msra.mxu0 %v3845
    %4288 = vmatprep.subr.bf16.mxu0 0
    %4289 = vmatpush1.bf16.msra.mxu0 %v3846
    %4290 = vmatprep.subr.bf16.mxu0 0
    %4291 = vmatpush1.bf16.msra.mxu0 %v3847
    %4292 = vmatprep.subr.bf16.mxu0 0
    %4293 = vmatpush1.bf16.msra.mxu0 %v3848
    %4294 = vmatprep.subr.bf16.mxu0 0
    %4295 = vmatpush1.bf16.msra.mxu0 %v3849
    %4296 = vmatprep.subr.bf16.mxu0 0
    %4297 = vmatpush1.bf16.msra.mxu0 %v3850
    %4298 = vmatprep.subr.bf16.mxu0 0
    %4299 = vmatpush1.bf16.msra.mxu0 %v3851
    %4300 = vmatprep.subr.bf16.mxu0 0
    %4301 = vmatpush1.bf16.msra.mxu0 %v3852
    %4302 = vmatprep.subr.bf16.mxu0 0
    %4303 = vmatpush1.bf16.msra.mxu0 %v3853
    %4304 = vmatprep.subr.bf16.mxu0 0
    %4305 = vmatpush1.bf16.msra.mxu0 %v3854
    %4306 = vmatprep.subr.bf16.mxu0 0
    %4307 = vmatpush1.bf16.msra.mxu0 %v3855
    %4308 = vmatprep.subr.bf16.mxu0 0
    %4309 = vmatpush1.bf16.msra.mxu0 %v3856
    %4310 = vmatprep.subr.bf16.mxu0 0
    %4311 = vmatpush1.bf16.msra.mxu0 %v3857
    %4312 = vmatprep.subr.bf16.mxu0 0
    %4313 = vmatpush1.bf16.msra.mxu0 %v3858
    %4314 = vmatprep.subr.bf16.mxu0 0
    %4315 = vmatpush1.bf16.msra.mxu0 %v3859
    %4316 = vmatprep.subr.bf16.mxu0 0
    %4317 = vmatpush1.bf16.msra.mxu0 %v3860
    %4318 = vmatprep.mubr.bf16.mxu0 %v2948
    %4319 = vmatmul.mubr.bf16.gmra.mrb[0].mxu0 %v2947
    %v4320 = vpop.f32.mrb[0].mxu0
    %v4321 = vadd.f32 %v4280, %v4320
    %v4322 = vpop.f32.mrb[0].mxu0
    %v4323 = vpop.f32.mrb[0].mxu0
    %v4324 = vadd.f32 %v4283, %v4323
    %v4325 = vpop.f32.mrb[0].mxu0
    %4326 = vdwg.mxu0
    %4327 = vmatprep.subr.bf16.mxu0 0
    %4328 = vmatpush1.bf16.msra.mxu0 %v3861
    %4329 = vmatprep.subr.bf16.mxu0 0
    %4330 = vmatpush1.bf16.msra.mxu0 %v3862
    %4331 = vmatprep.subr.bf16.mxu0 0
    %4332 = vmatpush1.bf16.msra.mxu0 %v3863
    %4333 = vmatprep.subr.bf16.mxu0 0
    %4334 = vmatpush1.bf16.msra.mxu0 %v3864
    %4335 = vmatprep.subr.bf16.mxu0 0
    %4336 = vmatpush1.bf16.msra.mxu0 %v3865
    %4337 = vmatprep.subr.bf16.mxu0 0
    %4338 = vmatpush1.bf16.msra.mxu0 %v3866
    %4339 = vmatprep.subr.bf16.mxu0 0
    %4340 = vmatpush1.bf16.msra.mxu0 %v3867
    %4341 = vmatprep.subr.bf16.mxu0 0
    %4342 = vmatpush1.bf16.msra.mxu0 %v3868
    %4343 = vmatprep.subr.bf16.mxu0 0
    %4344 = vmatpush1.bf16.msra.mxu0 %v3869
    %4345 = vmatprep.subr.bf16.mxu0 0
    %4346 = vmatpush1.bf16.msra.mxu0 %v3870
    %4347 = vmatprep.subr.bf16.mxu0 0
    %4348 = vmatpush1.bf16.msra.mxu0 %v3871
    %4349 = vmatprep.subr.bf16.mxu0 0
    %4350 = vmatpush1.bf16.msra.mxu0 %v3872
    %4351 = vmatprep.subr.bf16.mxu0 0
    %4352 = vmatpush1.bf16.msra.mxu0 %v3873
    %4353 = vmatprep.subr.bf16.mxu0 0
    %4354 = vmatpush1.bf16.msra.mxu0 %v3874
    %4355 = vmatprep.subr.bf16.mxu0 0
    %4356 = vmatpush1.bf16.msra.mxu0 %v3875
    %4357 = vmatprep.subr.bf16.mxu0 0
    %4358 = vmatpush1.bf16.msra.mxu0 %v3876
    %4359 = vmatprep.mubr.bf16.mxu0 %v2950
    %4360 = vmatmul.mubr.bf16.gmra.mrb[0].mxu0 %v2949
    %v4361 = vpop.f32.mrb[0].mxu0
    %v4362 = vadd.f32 %v4321, %v4361
    %v4363 = vpop.f32.mrb[0].mxu0
    %v4364 = vpop.f32.mrb[0].mxu0
    %v4365 = vadd.f32 %v4324, %v4364
    %v4366 = vpop.f32.mrb[0].mxu0
    %4367 = vdwg.mxu0
    %4368 = vmatprep.subr.bf16.mxu0 0
    %4369 = vmatpush1.bf16.msra.mxu0 %v3877
    %4370 = vmatprep.subr.bf16.mxu0 0
    %4371 = vmatpush1.bf16.msra.mxu0 %v3878
    %4372 = vmatprep.subr.bf16.mxu0 0
    %4373 = vmatpush1.bf16.msra.mxu0 %v3879
    %4374 = vmatprep.subr.bf16.mxu0 0
    %4375 = vmatpush1.bf16.msra.mxu0 %v3880
    %4376 = vmatprep.subr.bf16.mxu0 0
    %4377 = vmatpush1.bf16.msra.mxu0 %v3881
    %4378 = vmatprep.subr.bf16.mxu0 0
    %4379 = vmatpush1.bf16.msra.mxu0 %v3882
    %4380 = vmatprep.subr.bf16.mxu0 0
    %4381 = vmatpush1.bf16.msra.mxu0 %v3883
    %4382 = vmatprep.subr.bf16.mxu0 0
    %4383 = vmatpush1.bf16.msra.mxu0 %v3884
    %4384 = vmatprep.subr.bf16.mxu0 0
    %4385 = vmatpush1.bf16.msra.mxu0 %v3885
    %4386 = vmatprep.subr.bf16.mxu0 0
    %4387 = vmatpush1.bf16.msra.mxu0 %v3886
    %4388 = vmatprep.subr.bf16.mxu0 0
    %4389 = vmatpush1.bf16.msra.mxu0 %v3887
    %4390 = vmatprep.subr.bf16.mxu0 0
    %4391 = vmatpush1.bf16.msra.mxu0 %v3888
    %4392 = vmatprep.subr.bf16.mxu0 0
    %4393 = vmatpush1.bf16.msra.mxu0 %v3889
    %4394 = vmatprep.subr.bf16.mxu0 0
    %4395 = vmatpush1.bf16.msra.mxu0 %v3890
    %4396 = vmatprep.subr.bf16.mxu0 0
    %4397 = vmatpush1.bf16.msra.mxu0 %v3891
    %4398 = vmatprep.subr.bf16.mxu0 0
    %4399 = vmatpush1.bf16.msra.mxu0 %v3892
    %4400 = vmatprep.mubr.bf16.mxu0 %v2952
    %4401 = vmatmul.mubr.bf16.gmra.mrb[0].mxu0 %v2951
    %v4402 = vpop.f32.mrb[0].mxu0
    %v4403 = vadd.f32 %v4362, %v4402
    %v4404 = vpop.f32.mrb[0].mxu0
    %v4405 = vpop.f32.mrb[0].mxu0
    %v4406 = vadd.f32 %v4365, %v4405
    %v4407 = vpop.f32.mrb[0].mxu0
    %4408 = vdwg.mxu0
    %4409 = vmatprep.subr.bf16.mxu0 0
    %4410 = vmatpush1.bf16.msra.mxu0 %v3893
    %4411 = vmatprep.subr.bf16.mxu0 0
    %4412 = vmatpush1.bf16.msra.mxu0 %v3894
    %4413 = vmatprep.subr.bf16.mxu0 0
    %4414 = vmatpush1.bf16.msra.mxu0 %v3895
    %4415 = vmatprep.subr.bf16.mxu0 0
    %4416 = vmatpush1.bf16.msra.mxu0 %v3896
    %4417 = vmatprep.subr.bf16.mxu0 0
    %4418 = vmatpush1.bf16.msra.mxu0 %v3897
    %4419 = vmatprep.subr.bf16.mxu0 0
    %4420 = vmatpush1.bf16.msra.mxu0 %v3898
    %4421 = vmatprep.subr.bf16.mxu0 0
    %4422 = vmatpush1.bf16.msra.mxu0 %v3899
    %4423 = vmatprep.subr.bf16.mxu0 0
    %4424 = vmatpush1.bf16.msra.mxu0 %v3900
    %4425 = vmatprep.subr.bf16.mxu0 0
    %4426 = vmatpush1.bf16.msra.mxu0 %v3901
    %4427 = vmatprep.subr.bf16.mxu0 0
    %4428 = vmatpush1.bf16.msra.mxu0 %v3902
    %4429 = vmatprep.subr.bf16.mxu0 0
    %4430 = vmatpush1.bf16.msra.mxu0 %v3903
    %4431 = vmatprep.subr.bf16.mxu0 0
    %4432 = vmatpush1.bf16.msra.mxu0 %v3904
    %4433 = vmatprep.subr.bf16.mxu0 0
    %4434 = vmatpush1.bf16.msra.mxu0 %v3905
    %4435 = vmatprep.subr.bf16.mxu0 0
    %4436 = vmatpush1.bf16.msra.mxu0 %v3906
    %4437 = vmatprep.subr.bf16.mxu0 0
    %4438 = vmatpush1.bf16.msra.mxu0 %v3907
    %4439 = vmatprep.subr.bf16.mxu0 0
    %4440 = vmatpush1.bf16.msra.mxu0 %v3908
    %4441 = vmatprep.mubr.bf16.mxu0 %v2954
    %4442 = vmatmul.mubr.bf16.gmra.mrb[0].mxu0 %v2953
    %v4443 = vpop.f32.mrb[0].mxu0
    %v4444 = vadd.f32 %v4403, %v4443
    %v4445 = vpop.f32.mrb[0].mxu0
    %v4446 = vpop.f32.mrb[0].mxu0
    %v4447 = vadd.f32 %v4406, %v4446
    %v4448 = vpop.f32.mrb[0].mxu0
    %4449 = vdwg.mxu0
    %4450 = vmatprep.subr.bf16.mxu0 0
    %4451 = vmatpush1.bf16.msra.mxu0 %v3909
    %4452 = vmatprep.subr.bf16.mxu0 0
    %4453 = vmatpush1.bf16.msra.mxu0 %v3910
    %4454 = vmatprep.subr.bf16.mxu0 0
    %4455 = vmatpush1.bf16.msra.mxu0 %v3911
    %4456 = vmatprep.subr.bf16.mxu0 0
    %4457 = vmatpush1.bf16.msra.mxu0 %v3912
    %4458 = vmatprep.subr.bf16.mxu0 0
    %4459 = vmatpush1.bf16.msra.mxu0 %v3913
    %4460 = vmatprep.subr.bf16.mxu0 0
    %4461 = vmatpush1.bf16.msra.mxu0 %v3914
    %4462 = vmatprep.subr.bf16.mxu0 0
    %4463 = vmatpush1.bf16.msra.mxu0 %v3915
    %4464 = vmatprep.subr.bf16.mxu0 0
    %4465 = vmatpush1.bf16.msra.mxu0 %v3916
    %4466 = vmatprep.subr.bf16.mxu0 0
    %4467 = vmatpush1.bf16.msra.mxu0 %v3917
    %4468 = vmatprep.subr.bf16.mxu0 0
    %4469 = vmatpush1.bf16.msra.mxu0 %v3918
    %4470 = vmatprep.subr.bf16.mxu0 0
    %4471 = vmatpush1.bf16.msra.mxu0 %v3919
    %4472 = vmatprep.subr.bf16.mxu0 0
    %4473 = vmatpush1.bf16.msra.mxu0 %v3920
    %4474 = vmatprep.subr.bf16.mxu0 0
    %4475 = vmatpush1.bf16.msra.mxu0 %v3921
    %4476 = vmatprep.subr.bf16.mxu0 0
    %4477 = vmatpush1.bf16.msra.mxu0 %v3922
    %4478 = vmatprep.subr.bf16.mxu0 0
    %4479 = vmatpush1.bf16.msra.mxu0 %v3923
    %4480 = vmatprep.subr.bf16.mxu0 0
    %4481 = vmatpush1.bf16.msra.mxu0 %v3924
    %4482 = vmatprep.mubr.bf16.mxu0 %v2956
    %4483 = vmatmul.mubr.bf16.gmra.mrb[0].mxu0 %v2955
    %v4484 = vpop.f32.mrb[0].mxu0
    %v4485 = vadd.f32 %v4444, %v4484
    %v4486 = vpop.f32.mrb[0].mxu0
    %v4487 = vpop.f32.mrb[0].mxu0
    %v4488 = vadd.f32 %v4447, %v4487
    %v4489 = vpop.f32.mrb[0].mxu0
    %4490 = vdwg.mxu0
    %4491 = vmatprep.subr.bf16.mxu0 0
    %4492 = vmatpush1.bf16.msra.mxu0 %v3925
    %4493 = vmatprep.subr.bf16.mxu0 0
    %4494 = vmatpush1.bf16.msra.mxu0 %v3926
    %4495 = vmatprep.subr.bf16.mxu0 0
    %4496 = vmatpush1.bf16.msra.mxu0 %v3927
    %4497 = vmatprep.subr.bf16.mxu0 0
    %4498 = vmatpush1.bf16.msra.mxu0 %v3928
    %4499 = vmatprep.subr.bf16.mxu0 0
    %4500 = vmatpush1.bf16.msra.mxu0 %v3929
    %4501 = vmatprep.subr.bf16.mxu0 0
    %4502 = vmatpush1.bf16.msra.mxu0 %v3930
    %4503 = vmatprep.subr.bf16.mxu0 0
    %4504 = vmatpush1.bf16.msra.mxu0 %v3931
    %4505 = vmatprep.subr.bf16.mxu0 0
    %4506 = vmatpush1.bf16.msra.mxu0 %v3932
    %4507 = vmatprep.subr.bf16.mxu0 0
    %4508 = vmatpush1.bf16.msra.mxu0 %v3933
    %4509 = vmatprep.subr.bf16.mxu0 0
    %4510 = vmatpush1.bf16.msra.mxu0 %v3934
    %4511 = vmatprep.subr.bf16.mxu0 0
    %4512 = vmatpush1.bf16.msra.mxu0 %v3935
    %4513 = vmatprep.subr.bf16.mxu0 0
    %4514 = vmatpush1.bf16.msra.mxu0 %v3936
    %4515 = vmatprep.subr.bf16.mxu0 0
    %4516 = vmatpush1.bf16.msra.mxu0 %v3937
    %4517 = vmatprep.subr.bf16.mxu0 0
    %4518 = vmatpush1.bf16.msra.mxu0 %v3938
    %4519 = vmatprep.subr.bf16.mxu0 0
    %4520 = vmatpush1.bf16.msra.mxu0 %v3939
    %4521 = vmatprep.subr.bf16.mxu0 0
    %4522 = vmatpush1.bf16.msra.mxu0 %v3940
    %4523 = vmatprep.mubr.bf16.mxu0 %v2958
    %4524 = vmatmul.mubr.bf16.gmra.mrb[0].mxu0 %v2957
    %v4525 = vpop.f32.mrb[0].mxu0
    %v4526 = vadd.f32 %v4485, %v4525
    %v4527 = vpop.f32.mrb[0].mxu0
    %v4528 = vpop.f32.mrb[0].mxu0
    %v4529 = vadd.f32 %v4488, %v4528
    %v4530 = vpop.f32.mrb[0].mxu0
    %4531 = vdwg.mxu0
    %4532 = vmatprep.subr.bf16.mxu0 0
    %4533 = vmatpush1.bf16.msra.mxu0 %v3941
    %4534 = vmatprep.subr.bf16.mxu0 0
    %4535 = vmatpush1.bf16.msra.mxu0 %v3942
    %4536 = vmatprep.subr.bf16.mxu0 0
    %4537 = vmatpush1.bf16.msra.mxu0 %v3943
    %4538 = vmatprep.subr.bf16.mxu0 0
    %4539 = vmatpush1.bf16.msra.mxu0 %v3944
    %4540 = vmatprep.subr.bf16.mxu0 0
    %4541 = vmatpush1.bf16.msra.mxu0 %v3945
    %4542 = vmatprep.subr.bf16.mxu0 0
    %4543 = vmatpush1.bf16.msra.mxu0 %v3946
    %4544 = vmatprep.subr.bf16.mxu0 0
    %4545 = vmatpush1.bf16.msra.mxu0 %v3947
    %4546 = vmatprep.subr.bf16.mxu0 0
    %4547 = vmatpush1.bf16.msra.mxu0 %v3948
    %4548 = vmatprep.subr.bf16.mxu0 0
    %4549 = vmatpush1.bf16.msra.mxu0 %v3949
    %4550 = vmatprep.subr.bf16.mxu0 0
    %4551 = vmatpush1.bf16.msra.mxu0 %v3950
    %4552 = vmatprep.subr.bf16.mxu0 0
    %4553 = vmatpush1.bf16.msra.mxu0 %v3951
    %4554 = vmatprep.subr.bf16.mxu0 0
    %4555 = vmatpush1.bf16.msra.mxu0 %v3952
    %4556 = vmatprep.subr.bf16.mxu0 0
    %4557 = vmatpush1.bf16.msra.mxu0 %v3953
    %4558 = vmatprep.subr.bf16.mxu0 0
    %4559 = vmatpush1.bf16.msra.mxu0 %v3954
    %4560 = vmatprep.subr.bf16.mxu0 0
    %4561 = vmatpush1.bf16.msra.mxu0 %v3955
    %4562 = vmatprep.subr.bf16.mxu0 0
    %4563 = vmatpush1.bf16.msra.mxu0 %v3956
    %4564 = vmatprep.mubr.bf16.mxu0 %v2960
    %4565 = vmatmul.mubr.bf16.gmra.mrb[0].mxu0 %v2959
    %v4566 = vpop.f32.mrb[0].mxu0
    %v4567 = vadd.f32 %v4526, %v4566
    %v4568 = vpop.f32.mrb[0].mxu0
    %v4569 = vpop.f32.mrb[0].mxu0
    %v4570 = vadd.f32 %v4529, %v4569
    %v4571 = vpop.f32.mrb[0].mxu0
    %4572 = vdwg.mxu0
    %4573 = vmatprep.subr.bf16.mxu0 0
    %4574 = vmatpush1.bf16.msra.mxu0 %v3957
    %4575 = vmatprep.subr.bf16.mxu0 0
    %4576 = vmatpush1.bf16.msra.mxu0 %v3958
    %4577 = vmatprep.subr.bf16.mxu0 0
    %4578 = vmatpush1.bf16.msra.mxu0 %v3959
    %4579 = vmatprep.subr.bf16.mxu0 0
    %4580 = vmatpush1.bf16.msra.mxu0 %v3960
    %4581 = vmatprep.subr.bf16.mxu0 0
    %4582 = vmatpush1.bf16.msra.mxu0 %v3961
    %4583 = vmatprep.subr.bf16.mxu0 0
    %4584 = vmatpush1.bf16.msra.mxu0 %v3962
    %4585 = vmatprep.subr.bf16.mxu0 0
    %4586 = vmatpush1.bf16.msra.mxu0 %v3963
    %4587 = vmatprep.subr.bf16.mxu0 0
    %4588 = vmatpush1.bf16.msra.mxu0 %v3964
    %4589 = vmatprep.subr.bf16.mxu0 0
    %4590 = vmatpush1.bf16.msra.mxu0 %v3965
    %4591 = vmatprep.subr.bf16.mxu0 0
    %4592 = vmatpush1.bf16.msra.mxu0 %v3966
    %4593 = vmatprep.subr.bf16.mxu0 0
    %4594 = vmatpush1.bf16.msra.mxu0 %v3967
    %4595 = vmatprep.subr.bf16.mxu0 0
    %4596 = vmatpush1.bf16.msra.mxu0 %v3968
    %4597 = vmatprep.subr.bf16.mxu0 0
    %4598 = vmatpush1.bf16.msra.mxu0 %v3969
    %4599 = vmatprep.subr.bf16.mxu0 0
    %4600 = vmatpush1.bf16.msra.mxu0 %v3970
    %4601 = vmatprep.subr.bf16.mxu0 0
    %4602 = vmatpush1.bf16.msra.mxu0 %v3971
    %4603 = vmatprep.subr.bf16.mxu0 0
    %4604 = vmatpush1.bf16.msra.mxu0 %v3972
    %4605 = vmatprep.mubr.bf16.mxu0 %v2962
    %4606 = vmatmul.mubr.bf16.gmra.mrb[0].mxu0 %v2961
    %v4607 = vpop.f32.mrb[0].mxu0
    %v4608 = vadd.f32 %v4567, %v4607
    %v4609 = vpop.f32.mrb[0].mxu0
    %v4610 = vpop.f32.mrb[0].mxu0
    %v4611 = vadd.f32 %v4570, %v4610
    %v4612 = vpop.f32.mrb[0].mxu0
    %4613 = vdwg.mxu0
    %4614 = vmatprep.subr.bf16.mxu0 0
    %4615 = vmatpush1.bf16.msra.mxu0 %v3973
    %4616 = vmatprep.subr.bf16.mxu0 0
    %4617 = vmatpush1.bf16.msra.mxu0 %v3974
    %4618 = vmatprep.subr.bf16.mxu0 0
    %4619 = vmatpush1.bf16.msra.mxu0 %v3975
    %4620 = vmatprep.subr.bf16.mxu0 0
    %4621 = vmatpush1.bf16.msra.mxu0 %v3976
    %4622 = vmatprep.subr.bf16.mxu0 0
    %4623 = vmatpush1.bf16.msra.mxu0 %v3977
    %4624 = vmatprep.subr.bf16.mxu0 0
    %4625 = vmatpush1.bf16.msra.mxu0 %v3978
    %4626 = vmatprep.subr.bf16.mxu0 0
    %4627 = vmatpush1.bf16.msra.mxu0 %v3979
    %4628 = vmatprep.subr.bf16.mxu0 0
    %4629 = vmatpush1.bf16.msra.mxu0 %v3980
    %4630 = vmatprep.subr.bf16.mxu0 0
    %4631 = vmatpush1.bf16.msra.mxu0 %v3981
    %4632 = vmatprep.subr.bf16.mxu0 0
    %4633 = vmatpush1.bf16.msra.mxu0 %v3982
    %4634 = vmatprep.subr.bf16.mxu0 0
    %4635 = vmatpush1.bf16.msra.mxu0 %v3983
    %4636 = vmatprep.subr.bf16.mxu0 0
    %4637 = vmatpush1.bf16.msra.mxu0 %v3984
    %4638 = vmatprep.subr.bf16.mxu0 0
    %4639 = vmatpush1.bf16.msra.mxu0 %v3985
    %4640 = vmatprep.subr.bf16.mxu0 0
    %4641 = vmatpush1.bf16.msra.mxu0 %v3986
    %4642 = vmatprep.subr.bf16.mxu0 0
    %4643 = vmatpush1.bf16.msra.mxu0 %v3987
    %4644 = vmatprep.subr.bf16.mxu0 0
    %4645 = vmatpush1.bf16.msra.mxu0 %v3988
    %4646 = vmatprep.mubr.bf16.mxu0 %v2964
    %4647 = vmatmul.mubr.bf16.gmra.mrb[0].mxu0 %v2963
    %v4648 = vpop.f32.mrb[0].mxu0
    %v4649 = vadd.f32 %v4608, %v4648
    %v4650 = vpop.f32.mrb[0].mxu0
    %v4651 = vpop.f32.mrb[0].mxu0
    %v4652 = vadd.f32 %v4611, %v4651
    %v4653 = vpop.f32.mrb[0].mxu0
    %4654 = vdwg.mxu0
    %4655 = vmatprep.subr.bf16.mxu0 0
    %4656 = vmatpush1.bf16.msra.mxu0 %v3989
    %4657 = vmatprep.subr.bf16.mxu0 0
    %4658 = vmatpush1.bf16.msra.mxu0 %v3990
    %4659 = vmatprep.subr.bf16.mxu0 0
    %4660 = vmatpush1.bf16.msra.mxu0 %v3991
    %4661 = vmatprep.subr.bf16.mxu0 0
    %4662 = vmatpush1.bf16.msra.mxu0 %v3992
    %4663 = vmatprep.subr.bf16.mxu0 0
    %4664 = vmatpush1.bf16.msra.mxu0 %v3993
    %4665 = vmatprep.subr.bf16.mxu0 0
    %4666 = vmatpush1.bf16.msra.mxu0 %v3994
    %4667 = vmatprep.subr.bf16.mxu0 0
    %4668 = vmatpush1.bf16.msra.mxu0 %v3995
    %4669 = vmatprep.subr.bf16.mxu0 0
    %4670 = vmatpush1.bf16.msra.mxu0 %v3996
    %4671 = vmatprep.subr.bf16.mxu0 0
    %4672 = vmatpush1.bf16.msra.mxu0 %v3997
    %4673 = vmatprep.subr.bf16.mxu0 0
    %4674 = vmatpush1.bf16.msra.mxu0 %v3998
    %4675 = vmatprep.subr.bf16.mxu0 0
    %4676 = vmatpush1.bf16.msra.mxu0 %v3999
    %4677 = vmatprep.subr.bf16.mxu0 0
    %4678 = vmatpush1.bf16.msra.mxu0 %v4000
    %4679 = vmatprep.subr.bf16.mxu0 0
    %4680 = vmatpush1.bf16.msra.mxu0 %v4001
    %4681 = vmatprep.subr.bf16.mxu0 0
    %4682 = vmatpush1.bf16.msra.mxu0 %v4002
    %4683 = vmatprep.subr.bf16.mxu0 0
    %4684 = vmatpush1.bf16.msra.mxu0 %v4003
    %4685 = vmatprep.subr.bf16.mxu0 0
    %4686 = vmatpush1.bf16.msra.mxu0 %v4004
    %4687 = vmatprep.mubr.bf16.mxu0 %v2966
    %4688 = vmatmul.mubr.bf16.gmra.mrb[0].mxu0 %v2965
    %v4689 = vpop.f32.mrb[0].mxu0
    %v4690 = vadd.f32 %v4649, %v4689
    %v4691 = vpop.f32.mrb[0].mxu0
    %v4692 = vpop.f32.mrb[0].mxu0
    %v4693 = vadd.f32 %v4652, %v4692
    %v4694 = vpop.f32.mrb[0].mxu0
    %4695 = vdwg.mxu0
    %4696 = vmatprep.subr.bf16.mxu0 0
    %4697 = vmatpush1.bf16.msra.mxu0 %v4005
    %4698 = vmatprep.subr.bf16.mxu0 0
    %4699 = vmatpush1.bf16.msra.mxu0 %v4006
    %4700 = vmatprep.subr.bf16.mxu0 0
    %4701 = vmatpush1.bf16.msra.mxu0 %v4007
    %4702 = vmatprep.subr.bf16.mxu0 0
    %4703 = vmatpush1.bf16.msra.mxu0 %v4008
    %4704 = vmatprep.subr.bf16.mxu0 0
    %4705 = vmatpush1.bf16.msra.mxu0 %v4009
    %4706 = vmatprep.subr.bf16.mxu0 0
    %4707 = vmatpush1.bf16.msra.mxu0 %v4010
    %4708 = vmatprep.subr.bf16.mxu0 0
    %4709 = vmatpush1.bf16.msra.mxu0 %v4011
    %4710 = vmatprep.subr.bf16.mxu0 0
    %4711 = vmatpush1.bf16.msra.mxu0 %v4012
    %4712 = vmatprep.subr.bf16.mxu0 0
    %4713 = vmatpush1.bf16.msra.mxu0 %v4013
    %4714 = vmatprep.subr.bf16.mxu0 0
    %4715 = vmatpush1.bf16.msra.mxu0 %v4014
    %4716 = vmatprep.subr.bf16.mxu0 0
    %4717 = vmatpush1.bf16.msra.mxu0 %v4015
    %4718 = vmatprep.subr.bf16.mxu0 0
    %4719 = vmatpush1.bf16.msra.mxu0 %v4016
    %4720 = vmatprep.subr.bf16.mxu0 0
    %4721 = vmatpush1.bf16.msra.mxu0 %v4017
    %4722 = vmatprep.subr.bf16.mxu0 0
    %4723 = vmatpush1.bf16.msra.mxu0 %v4018
    %4724 = vmatprep.subr.bf16.mxu0 0
    %4725 = vmatpush1.bf16.msra.mxu0 %v4019
    %4726 = vmatprep.subr.bf16.mxu0 0
    %4727 = vmatpush1.bf16.msra.mxu0 %v4020
    %4728 = vmatprep.mubr.bf16.mxu0 %v2968
    %4729 = vmatmul.mubr.bf16.gmra.mrb[0].mxu0 %v2967
    %v4730 = vpop.f32.mrb[0].mxu0
    %v4731 = vadd.f32 %v4690, %v4730
    %v4732 = vpop.f32.mrb[0].mxu0
    %v4733 = vpop.f32.mrb[0].mxu0
    %v4734 = vadd.f32 %v4693, %v4733
    %v4735 = vpop.f32.mrb[0].mxu0
    %4736 = vdwg.mxu0
    %4737 = vmatprep.subr.bf16.mxu0 0
    %4738 = vmatpush1.bf16.msra.mxu0 %v4021
    %4739 = vmatprep.subr.bf16.mxu0 0
    %4740 = vmatpush1.bf16.msra.mxu0 %v4022
    %4741 = vmatprep.subr.bf16.mxu0 0
    %4742 = vmatpush1.bf16.msra.mxu0 %v4023
    %4743 = vmatprep.subr.bf16.mxu0 0
    %4744 = vmatpush1.bf16.msra.mxu0 %v4024
    %4745 = vmatprep.subr.bf16.mxu0 0
    %4746 = vmatpush1.bf16.msra.mxu0 %v4025
    %4747 = vmatprep.subr.bf16.mxu0 0
    %4748 = vmatpush1.bf16.msra.mxu0 %v4026
    %4749 = vmatprep.subr.bf16.mxu0 0
    %4750 = vmatpush1.bf16.msra.mxu0 %v4027
    %4751 = vmatprep.subr.bf16.mxu0 0
    %4752 = vmatpush1.bf16.msra.mxu0 %v4028
    %4753 = vmatprep.subr.bf16.mxu0 0
    %4754 = vmatpush1.bf16.msra.mxu0 %v4029
    %4755 = vmatprep.subr.bf16.mxu0 0
    %4756 = vmatpush1.bf16.msra.mxu0 %v4030
    %4757 = vmatprep.subr.bf16.mxu0 0
    %4758 = vmatpush1.bf16.msra.mxu0 %v4031
    %4759 = vmatprep.subr.bf16.mxu0 0
    %4760 = vmatpush1.bf16.msra.mxu0 %v4032
    %4761 = vmatprep.subr.bf16.mxu0 0
    %4762 = vmatpush1.bf16.msra.mxu0 %v4033
    %4763 = vmatprep.subr.bf16.mxu0 0
    %4764 = vmatpush1.bf16.msra.mxu0 %v4034
    %4765 = vmatprep.subr.bf16.mxu0 0
    %4766 = vmatpush1.bf16.msra.mxu0 %v4035
    %4767 = vmatprep.subr.bf16.mxu0 0
    %4768 = vmatpush1.bf16.msra.mxu0 %v4036
    %4769 = vmatprep.mubr.bf16.mxu0 %v2970
    %4770 = vmatmul.mubr.bf16.gmra.mrb[0].mxu0 %v2969
    %v4771 = vpop.f32.mrb[0].mxu0
    %v4772 = vadd.f32 %v4731, %v4771
    %v4773 = vpop.f32.mrb[0].mxu0
    %v4774 = vpop.f32.mrb[0].mxu0
    %v4775 = vadd.f32 %v4734, %v4774
    %v4776 = vpop.f32.mrb[0].mxu0
    %4777 = vdwg.mxu0
    %v4778 = vrot.slane %v4772, 4
    %v4779 = vmax.f32 %v4772, %v4778
    %v4780 = vrot.slane %v4779, 2
    %v4781 = vmax.f32 %v4779, %v4780
    %v4782 = vrot.slane %v4781, 1
    %v4783 = vmax.f32 %v4781, %v4782
    %v4784 = vrot.slane %v4775, 4
    %v4785 = vmax.f32 %v4775, %v4784
    %v4786 = vrot.slane %v4785, 2
    %v4787 = vmax.f32 %v4785, %v4786
    %v4788 = vrot.slane %v4787, 1
    %v4789 = vmax.f32 %v4787, %v4788
    %vm4792 = vcmask 1041409
    %v4793 = vsel %vm4792, %v783, %v777
    %v4797 = vsel %vm4792, %v2424, %v2418
    %v4801 = vsel %vm4792, %v4789, %v4783
    %v4803 = vld [vmem:[%s6] sm:$0x7]
    %v4805 = vlaneseq
    %v4806 = vshrl.u32 %v4805, 7
    %v4807 = vsub.s32 0, %v4806
    %v4808 = vrot.slane %v4803, %v4807
    %v4809 = vlaneseq
    %v4810 = vshrl.u32 %v4809, 7
    %v4811 = vsub.s32 1, %v4810
    %v4812 = vrot.slane %v4803, %v4811
    %v4813 = vlaneseq
    %v4814 = vshrl.u32 %v4813, 7
    %v4815 = vsub.s32 2, %v4814
    %v4816 = vrot.slane %v4803, %v4815
    %v4820 = vadd.f32 %v4793, %v4808
    %v4821 = vadd.f32 %v4797, %v4812
    %v4822 = vadd.f32 %v4801, %v4816
    %v4823 = vmax.f32 %v4820, 0.0
    %v4824 = vmax.f32 %v4821, 0.0
    %v4825 = vmax.f32 %v4822, 0.0
    %v4826 = vpack.c.bf16 %v4823, %v4823
    %v4827 = vpack.c.bf16 %v4824, %v4824
    %v4828 = vpack.c.bf16 %v4825, %v4825
    %v4829 = vld [vmem:[%s7] sm:$0xf]
    %v4830 = vld [vmem:[%s7 + $0x4] sm:$0xf]
    %v4831 = vld [vmem:[%s7 + $0x8] sm:$0xf]
    %v4832 = vld [vmem:[%s7 + $0xc] sm:$0xf]
    %v4833 = vld [vmem:[%s7 + $0x10] sm:$0xf]
    %v4834 = vld [vmem:[%s7 + $0x14] sm:$0xf]
    %v4835 = vld [vmem:[%s7 + $0x18] sm:$0xf]
    %v4836 = vld [vmem:[%s7 + $0x1c] sm:$0xf]
    %v4837 = vld [vmem:[%s7 + $0x20] sm:$0xf]
    %v4838 = vld [vmem:[%s7 + $0x24] sm:$0xf]
    %v4839 = vld [vmem:[%s7 + $0x28] sm:$0xf]
    %v4840 = vld [vmem:[%s7 + $0x2c] sm:$0xf]
    %v4841 = vld [vmem:[%s7 + $0x30] sm:$0xf]
    %v4842 = vld [vmem:[%s7 + $0x34] sm:$0xf]
    %v4843 = vld [vmem:[%s7 + $0x38] sm:$0xf]
    %v4844 = vld [vmem:[%s7 + $0x3c] sm:$0xf]
    %v4845 = vld [vmem:[%s7 + $0x40] sm:$0xf]
    %v4846 = vld [vmem:[%s7 + $0x44] sm:$0xf]
    %v4847 = vld [vmem:[%s7 + $0x48] sm:$0xf]
    %v4848 = vld [vmem:[%s7 + $0x4c] sm:$0xf]
    %v4849 = vld [vmem:[%s7 + $0x50] sm:$0xf]
    %v4850 = vld [vmem:[%s7 + $0x54] sm:$0xf]
    %v4851 = vld [vmem:[%s7 + $0x58] sm:$0xf]
    %v4852 = vld [vmem:[%s7 + $0x5c] sm:$0xf]
    %v4853 = vld [vmem:[%s7 + $0x60] sm:$0xf]
    %v4854 = vld [vmem:[%s7 + $0x64] sm:$0xf]
    %v4855 = vld [vmem:[%s7 + $0x68] sm:$0xf]
    %v4856 = vld [vmem:[%s7 + $0x6c] sm:$0xf]
    %v4857 = vld [vmem:[%s7 + $0x70] sm:$0xf]
    %v4858 = vld [vmem:[%s7 + $0x74] sm:$0xf]
    %v4859 = vld [vmem:[%s7 + $0x78] sm:$0xf]
    %v4860 = vld [vmem:[%s7 + $0x7c] sm:$0xf]
    %v4861 = vld [vmem:[%s7 + $0x80] sm:$0xf]
    %v4862 = vld [vmem:[%s7 + $0x84] sm:$0xf]
    %v4863 = vld [vmem:[%s7 + $0x88] sm:$0xf]
    %v4864 = vld [vmem:[%s7 + $0x8c] sm:$0xf]
    %v4865 = vld [vmem:[%s7 + $0x90] sm:$0xf]
    %v4866 = vld [vmem:[%s7 + $0x94] sm:$0xf]
    %v4867 = vld [vmem:[%s7 + $0x98] sm:$0xf]
    %v4868 = vld [vmem:[%s7 + $0x9c] sm:$0xf]
    %v4869 = vld [vmem:[%s7 + $0xa0] sm:$0xf]
    %v4870 = vld [vmem:[%s7 + $0xa4] sm:$0xf]
    %v4871 = vld [vmem:[%s7 + $0xa8] sm:$0xf]
    %v4872 = vld [vmem:[%s7 + $0xac] sm:$0xf]
    %v4873 = vld [vmem:[%s7 + $0xb0] sm:$0xf]
    %v4874 = vld [vmem:[%s7 + $0xb4] sm:$0xf]
    %v4875 = vld [vmem:[%s7 + $0xb8] sm:$0xf]
    %v4876 = vld [vmem:[%s7 + $0xbc] sm:$0xf]
    %v4877 = vld [vmem:[%s8] sm:$0x3]
    %v4926 = vunpack.c.l.b16 %v4829
    %v4927 = vunpack.c.l.b16 %v4830
    %v4928 = vunpack.c.l.b16 %v4831
    %v4929 = vunpack.c.l.b16 %v4832
    %v4930 = vunpack.c.l.b16 %v4833
    %v4931 = vunpack.c.l.b16 %v4834
    %v4932 = vunpack.c.l.b16 %v4835
    %v4933 = vunpack.c.l.b16 %v4836
    %v4934 = vunpack.c.l.b16 %v4837
    %v4935 = vunpack.c.l.b16 %v4838
    %v4936 = vunpack.c.l.b16 %v4839
    %v4937 = vunpack.c.l.b16 %v4840
    %v4938 = vunpack.c.l.b16 %v4841
    %v4939 = vunpack.c.l.b16 %v4842
    %v4940 = vunpack.c.l.b16 %v4843
    %v4941 = vunpack.c.l.b16 %v4844
    %v4942 = vunpack.c.l.b16 %v4845
    %v4943 = vunpack.c.l.b16 %v4846
    %v4944 = vunpack.c.l.b16 %v4847
    %v4945 = vunpack.c.l.b16 %v4848
    %v4946 = vunpack.c.l.b16 %v4849
    %v4947 = vunpack.c.l.b16 %v4850
    %v4948 = vunpack.c.l.b16 %v4851
    %v4949 = vunpack.c.l.b16 %v4852
    %v4950 = vunpack.c.l.b16 %v4853
    %v4951 = vunpack.c.l.b16 %v4854
    %v4952 = vunpack.c.l.b16 %v4855
    %v4953 = vunpack.c.l.b16 %v4856
    %v4954 = vunpack.c.l.b16 %v4857
    %v4955 = vunpack.c.l.b16 %v4858
    %v4956 = vunpack.c.l.b16 %v4859
    %v4957 = vunpack.c.l.b16 %v4860
    %v4958 = vunpack.c.l.b16 %v4861
    %v4959 = vunpack.c.l.b16 %v4862
    %v4960 = vunpack.c.l.b16 %v4863
    %v4961 = vunpack.c.l.b16 %v4864
    %v4962 = vunpack.c.l.b16 %v4865
    %v4963 = vunpack.c.l.b16 %v4866
    %v4964 = vunpack.c.l.b16 %v4867
    %v4965 = vunpack.c.l.b16 %v4868
    %v4966 = vunpack.c.l.b16 %v4869
    %v4967 = vunpack.c.l.b16 %v4870
    %v4968 = vunpack.c.l.b16 %v4871
    %v4969 = vunpack.c.l.b16 %v4872
    %v4970 = vunpack.c.l.b16 %v4873
    %v4971 = vunpack.c.l.b16 %v4874
    %v4972 = vunpack.c.l.b16 %v4875
    %v4973 = vunpack.c.l.b16 %v4876
    %v4974 = vpack.c.b16 %v4927, %v4926
    %v4975 = vpack.c.b16 %v4929, %v4928
    %v4976 = vpack.c.b16 %v4931, %v4930
    %v4977 = vpack.c.b16 %v4933, %v4932
    %v4978 = vpack.c.b16 %v4935, %v4934
    %v4979 = vpack.c.b16 %v4937, %v4936
    %v4980 = vpack.c.b16 %v4939, %v4938
    %v4981 = vpack.c.b16 %v4941, %v4940
    %v4982 = vpack.c.b16 %v4943, %v4942
    %v4983 = vpack.c.b16 %v4945, %v4944
    %v4984 = vpack.c.b16 %v4947, %v4946
    %v4985 = vpack.c.b16 %v4949, %v4948
    %v4986 = vpack.c.b16 %v4951, %v4950
    %v4987 = vpack.c.b16 %v4953, %v4952
    %v4988 = vpack.c.b16 %v4955, %v4954
    %v4989 = vpack.c.b16 %v4957, %v4956
    %v4990 = vpack.c.b16 %v4959, %v4958
    %v4991 = vpack.c.b16 %v4961, %v4960
    %v4992 = vpack.c.b16 %v4963, %v4962
    %v4993 = vpack.c.b16 %v4965, %v4964
    %v4994 = vpack.c.b16 %v4967, %v4966
    %v4995 = vpack.c.b16 %v4969, %v4968
    %v4996 = vpack.c.b16 %v4971, %v4970
    %v4997 = vpack.c.b16 %v4973, %v4972
    %5022 = vmatprep.subr.bf16.mxu0 0
    %5023 = vmatpush1.bf16.msra.mxu0 %v4974
    %5024 = vmatprep.subr.bf16.mxu0 0
    %5025 = vmatpush1.bf16.msra.mxu0 %v4975
    %5026 = vmatprep.subr.bf16.mxu0 0
    %5027 = vmatpush1.bf16.msra.mxu0 %v4976
    %5028 = vmatprep.subr.bf16.mxu0 0
    %5029 = vmatpush1.bf16.msra.mxu0 %v4977
    %5030 = vmatprep.subr.bf16.mxu0 0
    %5031 = vmatpush1.bf16.msra.mxu0 %v4978
    %5032 = vmatprep.subr.bf16.mxu0 0
    %5033 = vmatpush1.bf16.msra.mxu0 %v4979
    %5034 = vmatprep.subr.bf16.mxu0 0
    %5035 = vmatpush1.bf16.msra.mxu0 %v4980
    %5036 = vmatprep.subr.bf16.mxu0 0
    %5037 = vmatpush1.bf16.msra.mxu0 %v4981
    %5038 = vmatprep.subr.bf16.mxu0 0
    %5039 = vmatpush1.bf16.msra.mxu0 %v4982
    %5040 = vmatprep.subr.bf16.mxu0 0
    %5041 = vmatpush1.bf16.msra.mxu0 %v4983
    %5042 = vmatprep.subr.bf16.mxu0 0
    %5043 = vmatpush1.bf16.msra.mxu0 %v4984
    %5044 = vmatprep.subr.bf16.mxu0 0
    %5045 = vmatpush1.bf16.msra.mxu0 %v4985
    %5046 = vmatprep.subr.bf16.mxu0 0
    %5047 = vmatpush1.bf16.msra.mxu0 %v4986
    %5048 = vmatprep.subr.bf16.mxu0 0
    %5049 = vmatpush1.bf16.msra.mxu0 %v4987
    %5050 = vmatprep.subr.bf16.mxu0 0
    %5051 = vmatpush1.bf16.msra.mxu0 %v4988
    %5052 = vmatprep.subr.bf16.mxu0 0
    %5053 = vmatpush1.bf16.msra.mxu0 %v4989
    %5054 = vmatprep.mubr.bf16.mxu0 %v4827
    %5055 = vmatmul.mubr.bf16.gmra.mrb[0].mxu0 %v4826
    %v5056 = vpop.f32.mrb[0].mxu0
    %v5057 = vadd.f32 %v4877, %v5056
    %v5058 = vpop.f32.mrb[0].mxu0
    %v5059 = vpop.f32.mrb[0].mxu0
    %v5060 = vpop.f32.mrb[0].mxu0
    %5061 = vdwg.mxu0
    %5062 = vmatprep.subr.bf16.mxu0 0
    %5063 = vmatpush1.bf16.msra.mxu0 %v4990
    %5064 = vmatprep.subr.bf16.mxu0 0
    %5065 = vmatpush1.bf16.msra.mxu0 %v4991
    %5066 = vmatprep.subr.bf16.mxu0 0
    %5067 = vmatpush1.bf16.msra.mxu0 %v4992
    %5068 = vmatprep.subr.bf16.mxu0 0
    %5069 = vmatpush1.bf16.msra.mxu0 %v4993
    %5070 = vmatprep.subr.bf16.mxu0 0
    %5071 = vmatpush1.bf16.msra.mxu0 %v4994
    %5072 = vmatprep.subr.bf16.mxu0 0
    %5073 = vmatpush1.bf16.msra.mxu0 %v4995
    %5074 = vmatprep.subr.bf16.mxu0 0
    %5075 = vmatpush1.bf16.msra.mxu0 %v4996
    %5076 = vmatprep.subr.bf16.mxu0 0
    %5077 = vmatpush1.bf16.msra.mxu0 %v4997
    %5078 = vmatprep.subr.bf16.mxu0 0
    %5079 = vmatpush1.bf16.msra.mxu0 0
    %5080 = vmatprep.subr.bf16.mxu0 0
    %5081 = vmatpush1.bf16.msra.mxu0 0
    %5082 = vmatprep.subr.bf16.mxu0 0
    %5083 = vmatpush1.bf16.msra.mxu0 0
    %5084 = vmatprep.subr.bf16.mxu0 0
    %5085 = vmatpush1.bf16.msra.mxu0 0
    %5086 = vmatprep.subr.bf16.mxu0 0
    %5087 = vmatpush1.bf16.msra.mxu0 0
    %5088 = vmatprep.subr.bf16.mxu0 0
    %5089 = vmatpush1.bf16.msra.mxu0 0
    %5090 = vmatprep.subr.bf16.mxu0 0
    %5091 = vmatpush1.bf16.msra.mxu0 0
    %5092 = vmatprep.subr.bf16.mxu0 0
    %5093 = vmatpush1.bf16.msra.mxu0 0
    %5094 = vmatprep.mubr.bf16.mxu0 0
    %5095 = vmatmul.mubr.bf16.gmra.mrb[0].mxu0 %v4828
    %v5096 = vpop.f32.mrb[0].mxu0
    %v5097 = vadd.f32 %v5057, %v5096
    %v5098 = vpop.f32.mrb[0].mxu0
    %v5099 = vpop.f32.mrb[0].mxu0
    %v5100 = vpop.f32.mrb[0].mxu0
    %5101 = vdwg.mxu0
    %5102 = vst [vmem:[#allocation5] sm:$0x3] %v5097
    // Predicated region
    $region42: #{cnn_forward.1} parent=1 // pred_check
      _
    $region43: #{cnn_forward.1} parent=1 // pred_check_branch
      %5104 = sbr.rel (0) target = $region45
    $region44: #{cnn_forward.1} parent=1 // pred_region
      %s5106 = ssub.s32 32, 32
      %5107 = vsyncadd [#allocation4], %s5106
      %s5109 = sshll.u32 [#allocation5], 4
      %s5110 = int_to_ptr.vmem [resolvable:$true] %s5109
      %5112 = dma.vmem_to_hbm [thread:$0]  %s5110, 32, %s9, [#allocation4]
    $region45: #{cnn_forward.1} parent=1 // pred_fallthru
      _
    // Predicated region
    $region46: #{cnn_forward.1} parent=1 // pred_check
      _
    $region47: #{cnn_forward.1} parent=1 // pred_check_branch
      %5114 = sbr.rel (0) target = $region49
    $region48: #{cnn_forward.1} parent=1 // pred_region
      %5115 = dma.done [#allocation4], 32
    $region49: #{cnn_forward.1} parent=1 // pred_fallthru
      _
    %5116 = vsyncpa [#allocation3], 1
    %5117 = vsyncpa [#allocation4], 1

</llo_original>
